<compile_context>
chip_gen: v6e
topology: v6e:2x2x1
jax: 0.10.0
libtpu: 0.0.40
codegen_flags: <defaults>
</compile_context>

<pallas_src>
import math

import jax
import jax.numpy as jnp
from jax.experimental import pallas as pl
from jax.experimental.pallas import tpu as pltpu

# ----------------------- tiny ALBERT-like config -----------------------
VOCAB = 64        # vocab size (synthetic)
EMB = 16          # factorized embedding size (ALBERT-style)
HID = 32          # hidden size
NHEADS = 4
HDIM = HID // NHEADS
INTER = 64        # FFN intermediate size
NLAYERS = 2       # layers (weights shared across layers, ALBERT-style)
MAXSEQ = 8


# ------------------------- fused encoder kernel -------------------------
def _encoder_kernel(emb_ref, mrow_ref, mcol_ref,
                    emb_ln_g_ref, emb_ln_b_ref,
                    emb_proj_w_ref, emb_proj_b_ref,
                    qkv_w_ref, qkv_b_ref,
                    o_w_ref, o_b_ref,
                    attn_ln_g_ref, attn_ln_b_ref,
                    ffn_w1_ref, ffn_b1_ref, ffn_w2_ref, ffn_b2_ref,
                    ffn_ln_g_ref, ffn_ln_b_ref,
                    out_ref):
    """One grid step = one sequence of the batch; everything stays in VMEM."""
    f32 = jnp.float32

    def ln(x, g, b):
        mu = jnp.mean(x, axis=-1, keepdims=True)
        var = jnp.mean((x - mu) ** 2, axis=-1, keepdims=True)
        return (x - mu) * jax.lax.rsqrt(var + 1e-12) * g + b

    # Embedding layernorm + ALBERT factorized projection.
    x = emb_ref[0]                                                  # (L, EMB)
    x = ln(x, emb_ln_g_ref[...], emb_ln_b_ref[...])
    h = jnp.dot(x, emb_proj_w_ref[...],
                preferred_element_type=f32) + emb_proj_b_ref[...]   # (L, HID)

    # Additive attention mask built in-kernel from the (1, L) padding mask.
    addmask = (1.0 - mrow_ref[0]) * -1e9                            # (1, L)
    scale = 1.0 / math.sqrt(HDIM)

    # Shared weights loaded once, reused for every layer.
    qkv_w = qkv_w_ref[...]
    qkv_b = qkv_b_ref[...]
    o_b = o_b_ref[...]
    attn_g, attn_b = attn_ln_g_ref[...], attn_ln_b_ref[...]
    ffn_w1, ffn_b1 = ffn_w1_ref[...], ffn_b1_ref[...]
    ffn_w2, ffn_b2 = ffn_w2_ref[...], ffn_b2_ref[...]
    ffn_g, ffn_b = ffn_ln_g_ref[...], ffn_ln_b_ref[...]

    # ALBERT shares one weight set across layers; loop is fully unrolled.
    for _ in range(NLAYERS):
        qkv = jnp.dot(h, qkv_w, preferred_element_type=f32) + qkv_b  # (L, 3*HID)

        attn_out = o_b                                               # (1, HID)
        for hd in range(NHEADS):
            lo = hd * HDIM
            q_h = qkv[:, lo:lo + HDIM]                               # (L, HDIM)
            k_h = qkv[:, HID + lo:HID + lo + HDIM]
            v_h = qkv[:, 2 * HID + lo:2 * HID + lo + HDIM]
            s = jax.lax.dot_general(q_h, k_h, (((1,), (1,)), ((), ())),
                                    preferred_element_type=f32)      # (L, L)
            s = s * scale + addmask
            s = s - jnp.max(s, axis=-1, keepdims=True)
            p = jnp.exp(s)
            p = p * pl.reciprocal(jnp.sum(p, axis=-1, keepdims=True),
                                  approx=True)
            ctx_h = jnp.dot(p, v_h, preferred_element_type=f32)      # (L, HDIM)
            # Output projection decomposed per head: concat(ctx) @ o_w
            #   == sum_h ctx_h @ o_w[h*HDIM:(h+1)*HDIM, :]
            attn_out = attn_out + jnp.dot(
                ctx_h, o_w_ref[pl.ds(lo, HDIM), :],
                preferred_element_type=f32)
        h = ln(h + attn_out, attn_g, attn_b)

        ffn = jax.nn.gelu(jnp.dot(h, ffn_w1,
                                  preferred_element_type=f32) + ffn_b1)
        ffn = jnp.dot(ffn, ffn_w2, preferred_element_type=f32) + ffn_b2
        h = ln(h + ffn, ffn_g, ffn_b)

    # Masked mean pooling (exact mean_pooling() semantics, clamp min=1e-9).
    m = mcol_ref[0]                                                  # (L, 1)
    pooled = jnp.sum(h * m, axis=0, keepdims=True)                   # (1, HID)
    denom = jnp.maximum(jnp.sum(m, axis=0, keepdims=True), 1e-9)     # (1, 1)
    out_ref[0] = pooled * pl.reciprocal(denom, approx=True)


# ----------------------------- parameters -----------------------------
def init_params(key):
    def nrm(k, shape, scale=0.02):
        return scale * jax.random.normal(k, shape, dtype=jnp.float32)

    ks = jax.random.split(key, 8)
    return dict(
        word_emb=nrm(ks[0], (VOCAB, EMB)),
        pos_emb=nrm(ks[1], (MAXSEQ, EMB)),
        type_emb=nrm(ks[2], (2, EMB)),
        emb_ln_g=jnp.ones((EMB,), jnp.float32),
        emb_ln_b=jnp.zeros((EMB,), jnp.float32),
        emb_proj_w=nrm(ks[3], (EMB, HID)),
        emb_proj_b=jnp.zeros((HID,), jnp.float32),
        qkv_w=nrm(ks[4], (HID, 3 * HID)),            # fused Q/K/V projection
        qkv_b=jnp.zeros((3 * HID,), jnp.float32),
        o_w=nrm(ks[5], (HID, HID)), o_b=jnp.zeros((HID,), jnp.float32),
        attn_ln_g=jnp.ones((HID,), jnp.float32),
        attn_ln_b=jnp.zeros((HID,), jnp.float32),
        ffn_w1=nrm(ks[6], (HID, INTER)), ffn_b1=jnp.zeros((INTER,), jnp.float32),
        ffn_w2=nrm(ks[7], (INTER, HID)), ffn_b2=jnp.zeros((HID,), jnp.float32),
        ffn_ln_g=jnp.ones((HID,), jnp.float32),
        ffn_ln_b=jnp.zeros((HID,), jnp.float32),
    )


# ----------------------------- forward pass -----------------------------
@jax.jit
def net_forward(params, input_ids, attention_mask):
    """Equivalent of Net.forward on already-tokenized input:
    ALBERT-style encoder -> mean_pooling(last_hidden_state, attention_mask)."""
    B, L = input_ids.shape

    # Embedding gather (glue); everything downstream runs in one Pallas kernel.
    emb = (params["word_emb"][input_ids]
           + params["pos_emb"][None, :L, :]
           + params["type_emb"][0][None, None, :])                  # (B, L, EMB)

    am = attention_mask.astype(jnp.float32)
    mask_row = am.reshape(B, 1, L)     # for the additive attention mask
    mask_col = am.reshape(B, L, 1)     # for the masked mean pooling

    def r(v):                          # (N,) -> (1, N) VMEM-friendly row
        return v.reshape(1, -1)

    def w_spec(shape):                 # full-array weight block, loaded once
        return pl.BlockSpec(shape, lambda b, n=len(shape): (0,) * n)

    in_specs = [
        pl.BlockSpec((1, L, EMB), lambda b: (b, 0, 0)),   # emb
        pl.BlockSpec((1, 1, L), lambda b: (b, 0, 0)),     # mask_row
        pl.BlockSpec((1, L, 1), lambda b: (b, 0, 0)),     # mask_col
        w_spec((1, EMB)), w_spec((1, EMB)),               # emb LN gamma/beta
        w_spec((EMB, HID)), w_spec((1, HID)),             # emb projection
        w_spec((HID, 3 * HID)), w_spec((1, 3 * HID)),     # fused QKV
        w_spec((HID, HID)), w_spec((1, HID)),             # attn output proj
        w_spec((1, HID)), w_spec((1, HID)),               # attn LN
        w_spec((HID, INTER)), w_spec((1, INTER)),         # FFN up
        w_spec((INTER, HID)), w_spec((1, HID)),           # FFN down
        w_spec((1, HID)), w_spec((1, HID)),               # FFN LN
    ]

    out = pl.pallas_call(
        _encoder_kernel,
        out_shape=jax.ShapeDtypeStruct((B, 1, HID), jnp.float32),
        grid=(B,),
        in_specs=in_specs,
        out_specs=pl.BlockSpec((1, 1, HID), lambda b: (b, 0, 0)),
        compiler_params=pltpu.CompilerParams(
            dimension_semantics=("parallel",)),
    )(emb, mask_row, mask_col,
      r(params["emb_ln_g"]), r(params["emb_ln_b"]),
      params["emb_proj_w"], r(params["emb_proj_b"]),
      params["qkv_w"], r(params["qkv_b"]),
      params["o_w"], r(params["o_b"]),
      r(params["attn_ln_g"]), r(params["attn_ln_b"]),
      params["ffn_w1"], r(params["ffn_b1"]),
      params["ffn_w2"], r(params["ffn_b2"]),
      r(params["ffn_ln_g"]), r(params["ffn_ln_b"]))

    return out.reshape(B, HID)


# ----------------------------- main -----------------------------
if __name__ == "__main__":
    key = jax.random.PRNGKey(0)
    pkey, ikey = jax.random.split(key)
    params = init_params(pkey)

    B, L = 2, MAXSEQ
    # Synthetic "tokenized" batch with padding (sentence 1: 8 tokens, 2: 5 tokens).
    input_ids = jax.random.randint(ikey, (B, L), 1, VOCAB, dtype=jnp.int32)
    attention_mask = jnp.array(
        [[1, 1, 1, 1, 1, 1, 1, 1],
         [1, 1, 1, 1, 1, 0, 0, 0]], dtype=jnp.int32)
    input_ids = input_ids * attention_mask  # pad token id 0

    out = net_forward(params, input_ids, attention_mask)
    out = jax.block_until_ready(out)
    assert out.shape == (B, HID) and out.dtype == jnp.float32
    assert bool(jnp.all(jnp.isfinite(out)))
    print("KERNEL_OK")
</pallas_src>

<mosaic_0001>
module attributes {stable_mosaic.version = 11 : i64} {
  func.func @_encoder_kernel(%arg0: i32, %arg1: memref<1x8x16xf32, #tpu.memory_space<vmem>>, %arg2: memref<1x1x8xf32, #tpu.memory_space<vmem>>, %arg3: memref<1x8x1xf32, #tpu.memory_space<vmem>>, %arg4: memref<1x16xf32, #tpu.memory_space<vmem>>, %arg5: memref<1x16xf32, #tpu.memory_space<vmem>>, %arg6: memref<16x32xf32, #tpu.memory_space<vmem>>, %arg7: memref<1x32xf32, #tpu.memory_space<vmem>>, %arg8: memref<32x96xf32, #tpu.memory_space<vmem>>, %arg9: memref<1x96xf32, #tpu.memory_space<vmem>>, %arg10: memref<32x32xf32, #tpu.memory_space<vmem>>, %arg11: memref<1x32xf32, #tpu.memory_space<vmem>>, %arg12: memref<1x32xf32, #tpu.memory_space<vmem>>, %arg13: memref<1x32xf32, #tpu.memory_space<vmem>>, %arg14: memref<32x64xf32, #tpu.memory_space<vmem>>, %arg15: memref<1x64xf32, #tpu.memory_space<vmem>>, %arg16: memref<64x32xf32, #tpu.memory_space<vmem>>, %arg17: memref<1x32xf32, #tpu.memory_space<vmem>>, %arg18: memref<1x32xf32, #tpu.memory_space<vmem>>, %arg19: memref<1x32xf32, #tpu.memory_space<vmem>>, %arg20: memref<1x1x32xf32, #tpu.memory_space<vmem>>) attributes {dimension_semantics = [#tpu.dimension_semantics<parallel>], iteration_bounds = array<i64: 2>, scalar_prefetch = 0 : i64, scratch_operands = 0 : i64, tpu.core_type = #tpu.core_type<tc>, window_params = [{transform_indices = @transform_0, window_bounds = array<i64: 1, 8, 16>}, {transform_indices = @transform_1, window_bounds = array<i64: 1, 1, 8>}, {transform_indices = @transform_2, window_bounds = array<i64: 1, 8, 1>}, {pipeline_mode = #tpu.pipeline_mode<synchronous>, transform_indices = @transform_3, window_bounds = array<i64: 1, 16>}, {pipeline_mode = #tpu.pipeline_mode<synchronous>, transform_indices = @transform_4, window_bounds = array<i64: 1, 16>}, {pipeline_mode = #tpu.pipeline_mode<synchronous>, transform_indices = @transform_5, window_bounds = array<i64: 16, 32>}, {pipeline_mode = #tpu.pipeline_mode<synchronous>, transform_indices = @transform_6, window_bounds = array<i64: 1, 32>}, {pipeline_mode = #tpu.pipeline_mode<synchronous>, transform_indices = @transform_7, window_bounds = array<i64: 32, 96>}, {pipeline_mode = #tpu.pipeline_mode<synchronous>, transform_indices = @transform_8, window_bounds = array<i64: 1, 96>}, {pipeline_mode = #tpu.pipeline_mode<synchronous>, transform_indices = @transform_9, window_bounds = array<i64: 32, 32>}, {pipeline_mode = #tpu.pipeline_mode<synchronous>, transform_indices = @transform_10, window_bounds = array<i64: 1, 32>}, {pipeline_mode = #tpu.pipeline_mode<synchronous>, transform_indices = @transform_11, window_bounds = array<i64: 1, 32>}, {pipeline_mode = #tpu.pipeline_mode<synchronous>, transform_indices = @transform_12, window_bounds = array<i64: 1, 32>}, {pipeline_mode = #tpu.pipeline_mode<synchronous>, transform_indices = @transform_13, window_bounds = array<i64: 32, 64>}, {pipeline_mode = #tpu.pipeline_mode<synchronous>, transform_indices = @transform_14, window_bounds = array<i64: 1, 64>}, {pipeline_mode = #tpu.pipeline_mode<synchronous>, transform_indices = @transform_15, window_bounds = array<i64: 64, 32>}, {pipeline_mode = #tpu.pipeline_mode<synchronous>, transform_indices = @transform_16, window_bounds = array<i64: 1, 32>}, {pipeline_mode = #tpu.pipeline_mode<synchronous>, transform_indices = @transform_17, window_bounds = array<i64: 1, 32>}, {pipeline_mode = #tpu.pipeline_mode<synchronous>, transform_indices = @transform_18, window_bounds = array<i64: 1, 32>}, {transform_indices = @transform_19, window_bounds = array<i64: 1, 1, 32>}]} {
    %c0 = arith.constant 0 : index
    %c0_0 = arith.constant 0 : index
    %c0_1 = arith.constant 0 : index
    %0 = vector.load %arg1[%c0, %c0_0, %c0_1] : memref<1x8x16xf32, #tpu.memory_space<vmem>>, vector<1x8x16xf32>
    %1 = vector.shape_cast %0 : vector<1x8x16xf32> to vector<8x16xf32>
    %c0_2 = arith.constant 0 : index
    %c0_3 = arith.constant 0 : index
    %2 = vector.load %arg4[%c0_2, %c0_3] : memref<1x16xf32, #tpu.memory_space<vmem>>, vector<1x16xf32>
    %c0_4 = arith.constant 0 : index
    %c0_5 = arith.constant 0 : index
    %3 = vector.load %arg5[%c0_4, %c0_5] : memref<1x16xf32, #tpu.memory_space<vmem>>, vector<1x16xf32>
    %cst = arith.constant dense<0.000000e+00> : vector<8xf32>
    %4 = vector.multi_reduction <add>, %1, %cst [1] : vector<8x16xf32> to vector<8xf32>
    %5 = vector.shape_cast %4 : vector<8xf32> to vector<8x1xf32>
    %cst_6 = arith.constant 1.600000e+01 : f32
    %6 = vector.broadcast %cst_6 : f32 to vector<8x1xf32>
    %7 = arith.divf %5, %6 : vector<8x1xf32>
    %8 = vector.broadcast %7 : vector<8x1xf32> to vector<8x16xf32>
    %9 = arith.subf %1, %8 : vector<8x16xf32>
    %10 = arith.mulf %9, %9 : vector<8x16xf32>
    %cst_7 = arith.constant dense<0.000000e+00> : vector<8xf32>
    %11 = vector.multi_reduction <add>, %10, %cst_7 [1] : vector<8x16xf32> to vector<8xf32>
    %12 = vector.shape_cast %11 : vector<8xf32> to vector<8x1xf32>
    %cst_8 = arith.constant 1.600000e+01 : f32
    %13 = vector.broadcast %cst_8 : f32 to vector<8x1xf32>
    %14 = arith.divf %12, %13 : vector<8x1xf32>
    %15 = vector.broadcast %7 : vector<8x1xf32> to vector<8x16xf32>
    %16 = arith.subf %1, %15 : vector<8x16xf32>
    %cst_9 = arith.constant 9.99999996E-13 : f32
    %17 = vector.broadcast %cst_9 : f32 to vector<8x1xf32>
    %18 = arith.addf %14, %17 : vector<8x1xf32>
    %19 = math.rsqrt %18 : vector<8x1xf32>
    %20 = vector.broadcast %19 : vector<8x1xf32> to vector<8x16xf32>
    %21 = arith.mulf %16, %20 : vector<8x16xf32>
    %22 = vector.broadcast %2 : vector<1x16xf32> to vector<8x16xf32>
    %23 = arith.mulf %21, %22 : vector<8x16xf32>
    %24 = vector.broadcast %3 : vector<1x16xf32> to vector<8x16xf32>
    %25 = arith.addf %23, %24 : vector<8x16xf32>
    %c0_10 = arith.constant 0 : index
    %c0_11 = arith.constant 0 : index
    %26 = vector.load %arg6[%c0_10, %c0_11] : memref<16x32xf32, #tpu.memory_space<vmem>>, vector<16x32xf32>
    %cst_12 = arith.constant dense<0.000000e+00> : vector<8x32xf32>
    %27 = tpu.matmul %25, %26, %cst_12 {dimension_numbers = #tpu.dot_dimension_numbers<[1], [0], [0], [1], [0, 0, 1, 1], [], []>} : vector<8x16xf32>, vector<16x32xf32>, vector<8x32xf32> -> vector<8x32xf32>
    %c0_13 = arith.constant 0 : index
    %c0_14 = arith.constant 0 : index
    %28 = vector.load %arg7[%c0_13, %c0_14] : memref<1x32xf32, #tpu.memory_space<vmem>>, vector<1x32xf32>
    %29 = vector.broadcast %28 : vector<1x32xf32> to vector<8x32xf32>
    %30 = arith.addf %27, %29 : vector<8x32xf32>
    %c0_15 = arith.constant 0 : index
    %c0_16 = arith.constant 0 : index
    %c0_17 = arith.constant 0 : index
    %31 = vector.load %arg2[%c0_15, %c0_16, %c0_17] : memref<1x1x8xf32, #tpu.memory_space<vmem>>, vector<1x1x8xf32>
    %32 = vector.shape_cast %31 : vector<1x1x8xf32> to vector<1x8xf32>
    %cst_18 = arith.constant 1.000000e+00 : f32
    %33 = vector.broadcast %cst_18 : f32 to vector<1x8xf32>
    %34 = arith.subf %33, %32 : vector<1x8xf32>
    %cst_19 = arith.constant -1.000000e+09 : f32
    %35 = vector.broadcast %cst_19 : f32 to vector<1x8xf32>
    %36 = arith.mulf %34, %35 : vector<1x8xf32>
    %c0_20 = arith.constant 0 : index
    %c0_21 = arith.constant 0 : index
    %37 = vector.load %arg8[%c0_20, %c0_21] : memref<32x96xf32, #tpu.memory_space<vmem>>, vector<32x96xf32>
    %c0_22 = arith.constant 0 : index
    %c0_23 = arith.constant 0 : index
    %38 = vector.load %arg9[%c0_22, %c0_23] : memref<1x96xf32, #tpu.memory_space<vmem>>, vector<1x96xf32>
    %c0_24 = arith.constant 0 : index
    %c0_25 = arith.constant 0 : index
    %39 = vector.load %arg11[%c0_24, %c0_25] : memref<1x32xf32, #tpu.memory_space<vmem>>, vector<1x32xf32>
    %c0_26 = arith.constant 0 : index
    %c0_27 = arith.constant 0 : index
    %40 = vector.load %arg12[%c0_26, %c0_27] : memref<1x32xf32, #tpu.memory_space<vmem>>, vector<1x32xf32>
    %c0_28 = arith.constant 0 : index
    %c0_29 = arith.constant 0 : index
    %41 = vector.load %arg13[%c0_28, %c0_29] : memref<1x32xf32, #tpu.memory_space<vmem>>, vector<1x32xf32>
    %c0_30 = arith.constant 0 : index
    %c0_31 = arith.constant 0 : index
    %42 = vector.load %arg14[%c0_30, %c0_31] : memref<32x64xf32, #tpu.memory_space<vmem>>, vector<32x64xf32>
    %c0_32 = arith.constant 0 : index
    %c0_33 = arith.constant 0 : index
    %43 = vector.load %arg15[%c0_32, %c0_33] : memref<1x64xf32, #tpu.memory_space<vmem>>, vector<1x64xf32>
    %c0_34 = arith.constant 0 : index
    %c0_35 = arith.constant 0 : index
    %44 = vector.load %arg16[%c0_34, %c0_35] : memref<64x32xf32, #tpu.memory_space<vmem>>, vector<64x32xf32>
    %c0_36 = arith.constant 0 : index
    %c0_37 = arith.constant 0 : index
    %45 = vector.load %arg17[%c0_36, %c0_37] : memref<1x32xf32, #tpu.memory_space<vmem>>, vector<1x32xf32>
    %c0_38 = arith.constant 0 : index
    %c0_39 = arith.constant 0 : index
    %46 = vector.load %arg18[%c0_38, %c0_39] : memref<1x32xf32, #tpu.memory_space<vmem>>, vector<1x32xf32>
    %c0_40 = arith.constant 0 : index
    %c0_41 = arith.constant 0 : index
    %47 = vector.load %arg19[%c0_40, %c0_41] : memref<1x32xf32, #tpu.memory_space<vmem>>, vector<1x32xf32>
    %cst_42 = arith.constant dense<0.000000e+00> : vector<8x96xf32>
    %48 = tpu.matmul %30, %37, %cst_42 {dimension_numbers = #tpu.dot_dimension_numbers<[1], [0], [0], [1], [0, 0, 1, 1], [], []>} : vector<8x32xf32>, vector<32x96xf32>, vector<8x96xf32> -> vector<8x96xf32>
    %49 = vector.broadcast %38 : vector<1x96xf32> to vector<8x96xf32>
    %50 = arith.addf %48, %49 : vector<8x96xf32>
    %51 = vector.extract_strided_slice %50 {offsets = [0, 0], sizes = [8, 8], strides = [1, 1]} : vector<8x96xf32> to vector<8x8xf32>
    %52 = vector.extract_strided_slice %50 {offsets = [0, 32], sizes = [8, 8], strides = [1, 1]} : vector<8x96xf32> to vector<8x8xf32>
    %53 = vector.extract_strided_slice %50 {offsets = [0, 64], sizes = [8, 8], strides = [1, 1]} : vector<8x96xf32> to vector<8x8xf32>
    %cst_43 = arith.constant dense<0.000000e+00> : vector<8x8xf32>
    %54 = tpu.matmul %51, %52, %cst_43 {dimension_numbers = #tpu.dot_dimension_numbers<[1], [1], [0], [0], [0, 0, 1, 0], [], []>} : vector<8x8xf32>, vector<8x8xf32>, vector<8x8xf32> -> vector<8x8xf32>
    %cst_44 = arith.constant 0.353553385 : f32
    %55 = vector.broadcast %cst_44 : f32 to vector<8x8xf32>
    %56 = arith.mulf %54, %55 : vector<8x8xf32>
    %57 = vector.broadcast %36 : vector<1x8xf32> to vector<8x8xf32>
    %58 = arith.addf %56, %57 : vector<8x8xf32>
    %cst_45 = arith.constant dense<0xFF800000> : vector<8xf32>
    %59 = vector.multi_reduction <maximumf>, %58, %cst_45 [1] : vector<8x8xf32> to vector<8xf32>
    %60 = vector.shape_cast %59 : vector<8xf32> to vector<8x1xf32>
    %61 = vector.broadcast %60 : vector<8x1xf32> to vector<8x8xf32>
    %62 = arith.subf %58, %61 : vector<8x8xf32>
    %63 = math.exp %62 : vector<8x8xf32>
    %cst_46 = arith.constant dense<0.000000e+00> : vector<8xf32>
    %64 = vector.multi_reduction <add>, %63, %cst_46 [1] : vector<8x8xf32> to vector<8xf32>
    %65 = vector.shape_cast %64 : vector<8xf32> to vector<8x1xf32>
    %66 = tpu.reciprocal %65 {approx = true} : vector<8x1xf32> -> vector<8x1xf32>
    %67 = vector.broadcast %66 : vector<8x1xf32> to vector<8x8xf32>
    %68 = arith.mulf %63, %67 : vector<8x8xf32>
    %cst_47 = arith.constant dense<0.000000e+00> : vector<8x8xf32>
    %69 = tpu.matmul %68, %53, %cst_47 {dimension_numbers = #tpu.dot_dimension_numbers<[1], [0], [0], [1], [0, 0, 1, 1], [], []>} : vector<8x8xf32>, vector<8x8xf32>, vector<8x8xf32> -> vector<8x8xf32>
    %c0_48 = arith.constant 0 : index
    %c0_49 = arith.constant 0 : index
    %70 = vector.load %arg10[%c0_48, %c0_49] : memref<32x32xf32, #tpu.memory_space<vmem>>, vector<8x32xf32>
    %cst_50 = arith.constant dense<0.000000e+00> : vector<8x32xf32>
    %71 = tpu.matmul %69, %70, %cst_50 {dimension_numbers = #tpu.dot_dimension_numbers<[1], [0], [0], [1], [0, 0, 1, 1], [], []>} : vector<8x8xf32>, vector<8x32xf32>, vector<8x32xf32> -> vector<8x32xf32>
    %72 = vector.broadcast %39 : vector<1x32xf32> to vector<8x32xf32>
    %73 = arith.addf %72, %71 : vector<8x32xf32>
    %74 = vector.extract_strided_slice %50 {offsets = [0, 8], sizes = [8, 8], strides = [1, 1]} : vector<8x96xf32> to vector<8x8xf32>
    %75 = vector.extract_strided_slice %50 {offsets = [0, 40], sizes = [8, 8], strides = [1, 1]} : vector<8x96xf32> to vector<8x8xf32>
    %76 = vector.extract_strided_slice %50 {offsets = [0, 72], sizes = [8, 8], strides = [1, 1]} : vector<8x96xf32> to vector<8x8xf32>
    %cst_51 = arith.constant dense<0.000000e+00> : vector<8x8xf32>
    %77 = tpu.matmul %74, %75, %cst_51 {dimension_numbers = #tpu.dot_dimension_numbers<[1], [1], [0], [0], [0, 0, 1, 0], [], []>} : vector<8x8xf32>, vector<8x8xf32>, vector<8x8xf32> -> vector<8x8xf32>
    %cst_52 = arith.constant 0.353553385 : f32
    %78 = vector.broadcast %cst_52 : f32 to vector<8x8xf32>
    %79 = arith.mulf %77, %78 : vector<8x8xf32>
    %80 = vector.broadcast %36 : vector<1x8xf32> to vector<8x8xf32>
    %81 = arith.addf %79, %80 : vector<8x8xf32>
    %cst_53 = arith.constant dense<0xFF800000> : vector<8xf32>
    %82 = vector.multi_reduction <maximumf>, %81, %cst_53 [1] : vector<8x8xf32> to vector<8xf32>
    %83 = vector.shape_cast %82 : vector<8xf32> to vector<8x1xf32>
    %84 = vector.broadcast %83 : vector<8x1xf32> to vector<8x8xf32>
    %85 = arith.subf %81, %84 : vector<8x8xf32>
    %86 = math.exp %85 : vector<8x8xf32>
    %cst_54 = arith.constant dense<0.000000e+00> : vector<8xf32>
    %87 = vector.multi_reduction <add>, %86, %cst_54 [1] : vector<8x8xf32> to vector<8xf32>
    %88 = vector.shape_cast %87 : vector<8xf32> to vector<8x1xf32>
    %89 = tpu.reciprocal %88 {approx = true} : vector<8x1xf32> -> vector<8x1xf32>
    %90 = vector.broadcast %89 : vector<8x1xf32> to vector<8x8xf32>
    %91 = arith.mulf %86, %90 : vector<8x8xf32>
    %cst_55 = arith.constant dense<0.000000e+00> : vector<8x8xf32>
    %92 = tpu.matmul %91, %76, %cst_55 {dimension_numbers = #tpu.dot_dimension_numbers<[1], [0], [0], [1], [0, 0, 1, 1], [], []>} : vector<8x8xf32>, vector<8x8xf32>, vector<8x8xf32> -> vector<8x8xf32>
    %c8 = arith.constant 8 : index
    %c0_56 = arith.constant 0 : index
    %93 = vector.load %arg10[%c8, %c0_56] : memref<32x32xf32, #tpu.memory_space<vmem>>, vector<8x32xf32>
    %cst_57 = arith.constant dense<0.000000e+00> : vector<8x32xf32>
    %94 = tpu.matmul %92, %93, %cst_57 {dimension_numbers = #tpu.dot_dimension_numbers<[1], [0], [0], [1], [0, 0, 1, 1], [], []>} : vector<8x8xf32>, vector<8x32xf32>, vector<8x32xf32> -> vector<8x32xf32>
    %95 = arith.addf %73, %94 : vector<8x32xf32>
    %96 = vector.extract_strided_slice %50 {offsets = [0, 16], sizes = [8, 8], strides = [1, 1]} : vector<8x96xf32> to vector<8x8xf32>
    %97 = vector.extract_strided_slice %50 {offsets = [0, 48], sizes = [8, 8], strides = [1, 1]} : vector<8x96xf32> to vector<8x8xf32>
    %98 = vector.extract_strided_slice %50 {offsets = [0, 80], sizes = [8, 8], strides = [1, 1]} : vector<8x96xf32> to vector<8x8xf32>
    %cst_58 = arith.constant dense<0.000000e+00> : vector<8x8xf32>
    %99 = tpu.matmul %96, %97, %cst_58 {dimension_numbers = #tpu.dot_dimension_numbers<[1], [1], [0], [0], [0, 0, 1, 0], [], []>} : vector<8x8xf32>, vector<8x8xf32>, vector<8x8xf32> -> vector<8x8xf32>
    %cst_59 = arith.constant 0.353553385 : f32
    %100 = vector.broadcast %cst_59 : f32 to vector<8x8xf32>
    %101 = arith.mulf %99, %100 : vector<8x8xf32>
    %102 = vector.broadcast %36 : vector<1x8xf32> to vector<8x8xf32>
    %103 = arith.addf %101, %102 : vector<8x8xf32>
    %cst_60 = arith.constant dense<0xFF800000> : vector<8xf32>
    %104 = vector.multi_reduction <maximumf>, %103, %cst_60 [1] : vector<8x8xf32> to vector<8xf32>
    %105 = vector.shape_cast %104 : vector<8xf32> to vector<8x1xf32>
    %106 = vector.broadcast %105 : vector<8x1xf32> to vector<8x8xf32>
    %107 = arith.subf %103, %106 : vector<8x8xf32>
    %108 = math.exp %107 : vector<8x8xf32>
    %cst_61 = arith.constant dense<0.000000e+00> : vector<8xf32>
    %109 = vector.multi_reduction <add>, %108, %cst_61 [1] : vector<8x8xf32> to vector<8xf32>
    %110 = vector.shape_cast %109 : vector<8xf32> to vector<8x1xf32>
    %111 = tpu.reciprocal %110 {approx = true} : vector<8x1xf32> -> vector<8x1xf32>
    %112 = vector.broadcast %111 : vector<8x1xf32> to vector<8x8xf32>
    %113 = arith.mulf %108, %112 : vector<8x8xf32>
    %cst_62 = arith.constant dense<0.000000e+00> : vector<8x8xf32>
    %114 = tpu.matmul %113, %98, %cst_62 {dimension_numbers = #tpu.dot_dimension_numbers<[1], [0], [0], [1], [0, 0, 1, 1], [], []>} : vector<8x8xf32>, vector<8x8xf32>, vector<8x8xf32> -> vector<8x8xf32>
    %c16 = arith.constant 16 : index
    %c0_63 = arith.constant 0 : index
    %115 = vector.load %arg10[%c16, %c0_63] : memref<32x32xf32, #tpu.memory_space<vmem>>, vector<8x32xf32>
    %cst_64 = arith.constant dense<0.000000e+00> : vector<8x32xf32>
    %116 = tpu.matmul %114, %115, %cst_64 {dimension_numbers = #tpu.dot_dimension_numbers<[1], [0], [0], [1], [0, 0, 1, 1], [], []>} : vector<8x8xf32>, vector<8x32xf32>, vector<8x32xf32> -> vector<8x32xf32>
    %117 = arith.addf %95, %116 : vector<8x32xf32>
    %118 = vector.extract_strided_slice %50 {offsets = [0, 24], sizes = [8, 8], strides = [1, 1]} : vector<8x96xf32> to vector<8x8xf32>
    %119 = vector.extract_strided_slice %50 {offsets = [0, 56], sizes = [8, 8], strides = [1, 1]} : vector<8x96xf32> to vector<8x8xf32>
    %120 = vector.extract_strided_slice %50 {offsets = [0, 88], sizes = [8, 8], strides = [1, 1]} : vector<8x96xf32> to vector<8x8xf32>
    %cst_65 = arith.constant dense<0.000000e+00> : vector<8x8xf32>
    %121 = tpu.matmul %118, %119, %cst_65 {dimension_numbers = #tpu.dot_dimension_numbers<[1], [1], [0], [0], [0, 0, 1, 0], [], []>} : vector<8x8xf32>, vector<8x8xf32>, vector<8x8xf32> -> vector<8x8xf32>
    %cst_66 = arith.constant 0.353553385 : f32
    %122 = vector.broadcast %cst_66 : f32 to vector<8x8xf32>
    %123 = arith.mulf %121, %122 : vector<8x8xf32>
    %124 = vector.broadcast %36 : vector<1x8xf32> to vector<8x8xf32>
    %125 = arith.addf %123, %124 : vector<8x8xf32>
    %cst_67 = arith.constant dense<0xFF800000> : vector<8xf32>
    %126 = vector.multi_reduction <maximumf>, %125, %cst_67 [1] : vector<8x8xf32> to vector<8xf32>
    %127 = vector.shape_cast %126 : vector<8xf32> to vector<8x1xf32>
    %128 = vector.broadcast %127 : vector<8x1xf32> to vector<8x8xf32>
    %129 = arith.subf %125, %128 : vector<8x8xf32>
    %130 = math.exp %129 : vector<8x8xf32>
    %cst_68 = arith.constant dense<0.000000e+00> : vector<8xf32>
    %131 = vector.multi_reduction <add>, %130, %cst_68 [1] : vector<8x8xf32> to vector<8xf32>
    %132 = vector.shape_cast %131 : vector<8xf32> to vector<8x1xf32>
    %133 = tpu.reciprocal %132 {approx = true} : vector<8x1xf32> -> vector<8x1xf32>
    %134 = vector.broadcast %133 : vector<8x1xf32> to vector<8x8xf32>
    %135 = arith.mulf %130, %134 : vector<8x8xf32>
    %cst_69 = arith.constant dense<0.000000e+00> : vector<8x8xf32>
    %136 = tpu.matmul %135, %120, %cst_69 {dimension_numbers = #tpu.dot_dimension_numbers<[1], [0], [0], [1], [0, 0, 1, 1], [], []>} : vector<8x8xf32>, vector<8x8xf32>, vector<8x8xf32> -> vector<8x8xf32>
    %c24 = arith.constant 24 : index
    %c0_70 = arith.constant 0 : index
    %137 = vector.load %arg10[%c24, %c0_70] : memref<32x32xf32, #tpu.memory_space<vmem>>, vector<8x32xf32>
    %cst_71 = arith.constant dense<0.000000e+00> : vector<8x32xf32>
    %138 = tpu.matmul %136, %137, %cst_71 {dimension_numbers = #tpu.dot_dimension_numbers<[1], [0], [0], [1], [0, 0, 1, 1], [], []>} : vector<8x8xf32>, vector<8x32xf32>, vector<8x32xf32> -> vector<8x32xf32>
    %139 = arith.addf %117, %138 : vector<8x32xf32>
    %140 = arith.addf %30, %139 : vector<8x32xf32>
    %cst_72 = arith.constant dense<0.000000e+00> : vector<8xf32>
    %141 = vector.multi_reduction <add>, %140, %cst_72 [1] : vector<8x32xf32> to vector<8xf32>
    %142 = vector.shape_cast %141 : vector<8xf32> to vector<8x1xf32>
    %cst_73 = arith.constant 3.200000e+01 : f32
    %143 = vector.broadcast %cst_73 : f32 to vector<8x1xf32>
    %144 = arith.divf %142, %143 : vector<8x1xf32>
    %145 = vector.broadcast %144 : vector<8x1xf32> to vector<8x32xf32>
    %146 = arith.subf %140, %145 : vector<8x32xf32>
    %147 = arith.mulf %146, %146 : vector<8x32xf32>
    %cst_74 = arith.constant dense<0.000000e+00> : vector<8xf32>
    %148 = vector.multi_reduction <add>, %147, %cst_74 [1] : vector<8x32xf32> to vector<8xf32>
    %149 = vector.shape_cast %148 : vector<8xf32> to vector<8x1xf32>
    %cst_75 = arith.constant 3.200000e+01 : f32
    %150 = vector.broadcast %cst_75 : f32 to vector<8x1xf32>
    %151 = arith.divf %149, %150 : vector<8x1xf32>
    %152 = vector.broadcast %144 : vector<8x1xf32> to vector<8x32xf32>
    %153 = arith.subf %140, %152 : vector<8x32xf32>
    %cst_76 = arith.constant 9.99999996E-13 : f32
    %154 = vector.broadcast %cst_76 : f32 to vector<8x1xf32>
    %155 = arith.addf %151, %154 : vector<8x1xf32>
    %156 = math.rsqrt %155 : vector<8x1xf32>
    %157 = vector.broadcast %156 : vector<8x1xf32> to vector<8x32xf32>
    %158 = arith.mulf %153, %157 : vector<8x32xf32>
    %159 = vector.broadcast %40 : vector<1x32xf32> to vector<8x32xf32>
    %160 = arith.mulf %158, %159 : vector<8x32xf32>
    %161 = vector.broadcast %41 : vector<1x32xf32> to vector<8x32xf32>
    %162 = arith.addf %160, %161 : vector<8x32xf32>
    %cst_77 = arith.constant dense<0.000000e+00> : vector<8x64xf32>
    %163 = tpu.matmul %162, %42, %cst_77 {dimension_numbers = #tpu.dot_dimension_numbers<[1], [0], [0], [1], [0, 0, 1, 1], [], []>} : vector<8x32xf32>, vector<32x64xf32>, vector<8x64xf32> -> vector<8x64xf32>
    %164 = vector.broadcast %43 : vector<1x64xf32> to vector<8x64xf32>
    %165 = arith.addf %163, %164 : vector<8x64xf32>
    %166 = arith.mulf %165, %165 : vector<8x64xf32>
    %167 = arith.mulf %165, %166 : vector<8x64xf32>
    %cst_78 = arith.constant 4.471500e-02 : f32
    %168 = vector.broadcast %cst_78 : f32 to vector<8x64xf32>
    %169 = arith.mulf %168, %167 : vector<8x64xf32>
    %170 = arith.addf %165, %169 : vector<8x64xf32>
    %cst_79 = arith.constant 0.797884583 : f32
    %171 = vector.broadcast %cst_79 : f32 to vector<8x64xf32>
    %172 = arith.mulf %171, %170 : vector<8x64xf32>
    %173 = math.tanh %172 : vector<8x64xf32>
    %cst_80 = arith.constant 1.000000e+00 : f32
    %174 = vector.broadcast %cst_80 : f32 to vector<8x64xf32>
    %175 = arith.addf %174, %173 : vector<8x64xf32>
    %cst_81 = arith.constant 5.000000e-01 : f32
    %176 = vector.broadcast %cst_81 : f32 to vector<8x64xf32>
    %177 = arith.mulf %176, %175 : vector<8x64xf32>
    %178 = arith.mulf %165, %177 : vector<8x64xf32>
    %cst_82 = arith.constant dense<0.000000e+00> : vector<8x32xf32>
    %179 = tpu.matmul %178, %44, %cst_82 {dimension_numbers = #tpu.dot_dimension_numbers<[1], [0], [0], [1], [0, 0, 1, 1], [], []>} : vector<8x64xf32>, vector<64x32xf32>, vector<8x32xf32> -> vector<8x32xf32>
    %180 = vector.broadcast %45 : vector<1x32xf32> to vector<8x32xf32>
    %181 = arith.addf %179, %180 : vector<8x32xf32>
    %182 = arith.addf %162, %181 : vector<8x32xf32>
    %cst_83 = arith.constant dense<0.000000e+00> : vector<8xf32>
    %183 = vector.multi_reduction <add>, %182, %cst_83 [1] : vector<8x32xf32> to vector<8xf32>
    %184 = vector.shape_cast %183 : vector<8xf32> to vector<8x1xf32>
    %cst_84 = arith.constant 3.200000e+01 : f32
    %185 = vector.broadcast %cst_84 : f32 to vector<8x1xf32>
    %186 = arith.divf %184, %185 : vector<8x1xf32>
    %187 = vector.broadcast %186 : vector<8x1xf32> to vector<8x32xf32>
    %188 = arith.subf %182, %187 : vector<8x32xf32>
    %189 = arith.mulf %188, %188 : vector<8x32xf32>
    %cst_85 = arith.constant dense<0.000000e+00> : vector<8xf32>
    %190 = vector.multi_reduction <add>, %189, %cst_85 [1] : vector<8x32xf32> to vector<8xf32>
    %191 = vector.shape_cast %190 : vector<8xf32> to vector<8x1xf32>
    %cst_86 = arith.constant 3.200000e+01 : f32
    %192 = vector.broadcast %cst_86 : f32 to vector<8x1xf32>
    %193 = arith.divf %191, %192 : vector<8x1xf32>
    %194 = vector.broadcast %186 : vector<8x1xf32> to vector<8x32xf32>
    %195 = arith.subf %182, %194 : vector<8x32xf32>
    %cst_87 = arith.constant 9.99999996E-13 : f32
    %196 = vector.broadcast %cst_87 : f32 to vector<8x1xf32>
    %197 = arith.addf %193, %196 : vector<8x1xf32>
    %198 = math.rsqrt %197 : vector<8x1xf32>
    %199 = vector.broadcast %198 : vector<8x1xf32> to vector<8x32xf32>
    %200 = arith.mulf %195, %199 : vector<8x32xf32>
    %201 = vector.broadcast %46 : vector<1x32xf32> to vector<8x32xf32>
    %202 = arith.mulf %200, %201 : vector<8x32xf32>
    %203 = vector.broadcast %47 : vector<1x32xf32> to vector<8x32xf32>
    %204 = arith.addf %202, %203 : vector<8x32xf32>
    %cst_88 = arith.constant dense<0.000000e+00> : vector<8x96xf32>
    %205 = tpu.matmul %204, %37, %cst_88 {dimension_numbers = #tpu.dot_dimension_numbers<[1], [0], [0], [1], [0, 0, 1, 1], [], []>} : vector<8x32xf32>, vector<32x96xf32>, vector<8x96xf32> -> vector<8x96xf32>
    %206 = vector.broadcast %38 : vector<1x96xf32> to vector<8x96xf32>
    %207 = arith.addf %205, %206 : vector<8x96xf32>
    %208 = vector.extract_strided_slice %207 {offsets = [0, 0], sizes = [8, 8], strides = [1, 1]} : vector<8x96xf32> to vector<8x8xf32>
    %209 = vector.extract_strided_slice %207 {offsets = [0, 32], sizes = [8, 8], strides = [1, 1]} : vector<8x96xf32> to vector<8x8xf32>
    %210 = vector.extract_strided_slice %207 {offsets = [0, 64], sizes = [8, 8], strides = [1, 1]} : vector<8x96xf32> to vector<8x8xf32>
    %cst_89 = arith.constant dense<0.000000e+00> : vector<8x8xf32>
    %211 = tpu.matmul %208, %209, %cst_89 {dimension_numbers = #tpu.dot_dimension_numbers<[1], [1], [0], [0], [0, 0, 1, 0], [], []>} : vector<8x8xf32>, vector<8x8xf32>, vector<8x8xf32> -> vector<8x8xf32>
    %cst_90 = arith.constant 0.353553385 : f32
    %212 = vector.broadcast %cst_90 : f32 to vector<8x8xf32>
    %213 = arith.mulf %211, %212 : vector<8x8xf32>
    %214 = vector.broadcast %36 : vector<1x8xf32> to vector<8x8xf32>
    %215 = arith.addf %213, %214 : vector<8x8xf32>
    %cst_91 = arith.constant dense<0xFF800000> : vector<8xf32>
    %216 = vector.multi_reduction <maximumf>, %215, %cst_91 [1] : vector<8x8xf32> to vector<8xf32>
    %217 = vector.shape_cast %216 : vector<8xf32> to vector<8x1xf32>
    %218 = vector.broadcast %217 : vector<8x1xf32> to vector<8x8xf32>
    %219 = arith.subf %215, %218 : vector<8x8xf32>
    %220 = math.exp %219 : vector<8x8xf32>
    %cst_92 = arith.constant dense<0.000000e+00> : vector<8xf32>
    %221 = vector.multi_reduction <add>, %220, %cst_92 [1] : vector<8x8xf32> to vector<8xf32>
    %222 = vector.shape_cast %221 : vector<8xf32> to vector<8x1xf32>
    %223 = tpu.reciprocal %222 {approx = true} : vector<8x1xf32> -> vector<8x1xf32>
    %224 = vector.broadcast %223 : vector<8x1xf32> to vector<8x8xf32>
    %225 = arith.mulf %220, %224 : vector<8x8xf32>
    %cst_93 = arith.constant dense<0.000000e+00> : vector<8x8xf32>
    %226 = tpu.matmul %225, %210, %cst_93 {dimension_numbers = #tpu.dot_dimension_numbers<[1], [0], [0], [1], [0, 0, 1, 1], [], []>} : vector<8x8xf32>, vector<8x8xf32>, vector<8x8xf32> -> vector<8x8xf32>
    %c0_94 = arith.constant 0 : index
    %c0_95 = arith.constant 0 : index
    %227 = vector.load %arg10[%c0_94, %c0_95] : memref<32x32xf32, #tpu.memory_space<vmem>>, vector<8x32xf32>
    %cst_96 = arith.constant dense<0.000000e+00> : vector<8x32xf32>
    %228 = tpu.matmul %226, %227, %cst_96 {dimension_numbers = #tpu.dot_dimension_numbers<[1], [0], [0], [1], [0, 0, 1, 1], [], []>} : vector<8x8xf32>, vector<8x32xf32>, vector<8x32xf32> -> vector<8x32xf32>
    %229 = vector.broadcast %39 : vector<1x32xf32> to vector<8x32xf32>
    %230 = arith.addf %229, %228 : vector<8x32xf32>
    %231 = vector.extract_strided_slice %207 {offsets = [0, 8], sizes = [8, 8], strides = [1, 1]} : vector<8x96xf32> to vector<8x8xf32>
    %232 = vector.extract_strided_slice %207 {offsets = [0, 40], sizes = [8, 8], strides = [1, 1]} : vector<8x96xf32> to vector<8x8xf32>
    %233 = vector.extract_strided_slice %207 {offsets = [0, 72], sizes = [8, 8], strides = [1, 1]} : vector<8x96xf32> to vector<8x8xf32>
    %cst_97 = arith.constant dense<0.000000e+00> : vector<8x8xf32>
    %234 = tpu.matmul %231, %232, %cst_97 {dimension_numbers = #tpu.dot_dimension_numbers<[1], [1], [0], [0], [0, 0, 1, 0], [], []>} : vector<8x8xf32>, vector<8x8xf32>, vector<8x8xf32> -> vector<8x8xf32>
    %cst_98 = arith.constant 0.353553385 : f32
    %235 = vector.broadcast %cst_98 : f32 to vector<8x8xf32>
    %236 = arith.mulf %234, %235 : vector<8x8xf32>
    %237 = vector.broadcast %36 : vector<1x8xf32> to vector<8x8xf32>
    %238 = arith.addf %236, %237 : vector<8x8xf32>
    %cst_99 = arith.constant dense<0xFF800000> : vector<8xf32>
    %239 = vector.multi_reduction <maximumf>, %238, %cst_99 [1] : vector<8x8xf32> to vector<8xf32>
    %240 = vector.shape_cast %239 : vector<8xf32> to vector<8x1xf32>
    %241 = vector.broadcast %240 : vector<8x1xf32> to vector<8x8xf32>
    %242 = arith.subf %238, %241 : vector<8x8xf32>
    %243 = math.exp %242 : vector<8x8xf32>
    %cst_100 = arith.constant dense<0.000000e+00> : vector<8xf32>
    %244 = vector.multi_reduction <add>, %243, %cst_100 [1] : vector<8x8xf32> to vector<8xf32>
    %245 = vector.shape_cast %244 : vector<8xf32> to vector<8x1xf32>
    %246 = tpu.reciprocal %245 {approx = true} : vector<8x1xf32> -> vector<8x1xf32>
    %247 = vector.broadcast %246 : vector<8x1xf32> to vector<8x8xf32>
    %248 = arith.mulf %243, %247 : vector<8x8xf32>
    %cst_101 = arith.constant dense<0.000000e+00> : vector<8x8xf32>
    %249 = tpu.matmul %248, %233, %cst_101 {dimension_numbers = #tpu.dot_dimension_numbers<[1], [0], [0], [1], [0, 0, 1, 1], [], []>} : vector<8x8xf32>, vector<8x8xf32>, vector<8x8xf32> -> vector<8x8xf32>
    %c8_102 = arith.constant 8 : index
    %c0_103 = arith.constant 0 : index
    %250 = vector.load %arg10[%c8_102, %c0_103] : memref<32x32xf32, #tpu.memory_space<vmem>>, vector<8x32xf32>
    %cst_104 = arith.constant dense<0.000000e+00> : vector<8x32xf32>
    %251 = tpu.matmul %249, %250, %cst_104 {dimension_numbers = #tpu.dot_dimension_numbers<[1], [0], [0], [1], [0, 0, 1, 1], [], []>} : vector<8x8xf32>, vector<8x32xf32>, vector<8x32xf32> -> vector<8x32xf32>
    %252 = arith.addf %230, %251 : vector<8x32xf32>
    %253 = vector.extract_strided_slice %207 {offsets = [0, 16], sizes = [8, 8], strides = [1, 1]} : vector<8x96xf32> to vector<8x8xf32>
    %254 = vector.extract_strided_slice %207 {offsets = [0, 48], sizes = [8, 8], strides = [1, 1]} : vector<8x96xf32> to vector<8x8xf32>
    %255 = vector.extract_strided_slice %207 {offsets = [0, 80], sizes = [8, 8], strides = [1, 1]} : vector<8x96xf32> to vector<8x8xf32>
    %cst_105 = arith.constant dense<0.000000e+00> : vector<8x8xf32>
    %256 = tpu.matmul %253, %254, %cst_105 {dimension_numbers = #tpu.dot_dimension_numbers<[1], [1], [0], [0], [0, 0, 1, 0], [], []>} : vector<8x8xf32>, vector<8x8xf32>, vector<8x8xf32> -> vector<8x8xf32>
    %cst_106 = arith.constant 0.353553385 : f32
    %257 = vector.broadcast %cst_106 : f32 to vector<8x8xf32>
    %258 = arith.mulf %256, %257 : vector<8x8xf32>
    %259 = vector.broadcast %36 : vector<1x8xf32> to vector<8x8xf32>
    %260 = arith.addf %258, %259 : vector<8x8xf32>
    %cst_107 = arith.constant dense<0xFF800000> : vector<8xf32>
    %261 = vector.multi_reduction <maximumf>, %260, %cst_107 [1] : vector<8x8xf32> to vector<8xf32>
    %262 = vector.shape_cast %261 : vector<8xf32> to vector<8x1xf32>
    %263 = vector.broadcast %262 : vector<8x1xf32> to vector<8x8xf32>
    %264 = arith.subf %260, %263 : vector<8x8xf32>
    %265 = math.exp %264 : vector<8x8xf32>
    %cst_108 = arith.constant dense<0.000000e+00> : vector<8xf32>
    %266 = vector.multi_reduction <add>, %265, %cst_108 [1] : vector<8x8xf32> to vector<8xf32>
    %267 = vector.shape_cast %266 : vector<8xf32> to vector<8x1xf32>
    %268 = tpu.reciprocal %267 {approx = true} : vector<8x1xf32> -> vector<8x1xf32>
    %269 = vector.broadcast %268 : vector<8x1xf32> to vector<8x8xf32>
    %270 = arith.mulf %265, %269 : vector<8x8xf32>
    %cst_109 = arith.constant dense<0.000000e+00> : vector<8x8xf32>
    %271 = tpu.matmul %270, %255, %cst_109 {dimension_numbers = #tpu.dot_dimension_numbers<[1], [0], [0], [1], [0, 0, 1, 1], [], []>} : vector<8x8xf32>, vector<8x8xf32>, vector<8x8xf32> -> vector<8x8xf32>
    %c16_110 = arith.constant 16 : index
    %c0_111 = arith.constant 0 : index
    %272 = vector.load %arg10[%c16_110, %c0_111] : memref<32x32xf32, #tpu.memory_space<vmem>>, vector<8x32xf32>
    %cst_112 = arith.constant dense<0.000000e+00> : vector<8x32xf32>
    %273 = tpu.matmul %271, %272, %cst_112 {dimension_numbers = #tpu.dot_dimension_numbers<[1], [0], [0], [1], [0, 0, 1, 1], [], []>} : vector<8x8xf32>, vector<8x32xf32>, vector<8x32xf32> -> vector<8x32xf32>
    %274 = arith.addf %252, %273 : vector<8x32xf32>
    %275 = vector.extract_strided_slice %207 {offsets = [0, 24], sizes = [8, 8], strides = [1, 1]} : vector<8x96xf32> to vector<8x8xf32>
    %276 = vector.extract_strided_slice %207 {offsets = [0, 56], sizes = [8, 8], strides = [1, 1]} : vector<8x96xf32> to vector<8x8xf32>
    %277 = vector.extract_strided_slice %207 {offsets = [0, 88], sizes = [8, 8], strides = [1, 1]} : vector<8x96xf32> to vector<8x8xf32>
    %cst_113 = arith.constant dense<0.000000e+00> : vector<8x8xf32>
    %278 = tpu.matmul %275, %276, %cst_113 {dimension_numbers = #tpu.dot_dimension_numbers<[1], [1], [0], [0], [0, 0, 1, 0], [], []>} : vector<8x8xf32>, vector<8x8xf32>, vector<8x8xf32> -> vector<8x8xf32>
    %cst_114 = arith.constant 0.353553385 : f32
    %279 = vector.broadcast %cst_114 : f32 to vector<8x8xf32>
    %280 = arith.mulf %278, %279 : vector<8x8xf32>
    %281 = vector.broadcast %36 : vector<1x8xf32> to vector<8x8xf32>
    %282 = arith.addf %280, %281 : vector<8x8xf32>
    %cst_115 = arith.constant dense<0xFF800000> : vector<8xf32>
    %283 = vector.multi_reduction <maximumf>, %282, %cst_115 [1] : vector<8x8xf32> to vector<8xf32>
    %284 = vector.shape_cast %283 : vector<8xf32> to vector<8x1xf32>
    %285 = vector.broadcast %284 : vector<8x1xf32> to vector<8x8xf32>
    %286 = arith.subf %282, %285 : vector<8x8xf32>
    %287 = math.exp %286 : vector<8x8xf32>
    %cst_116 = arith.constant dense<0.000000e+00> : vector<8xf32>
    %288 = vector.multi_reduction <add>, %287, %cst_116 [1] : vector<8x8xf32> to vector<8xf32>
    %289 = vector.shape_cast %288 : vector<8xf32> to vector<8x1xf32>
    %290 = tpu.reciprocal %289 {approx = true} : vector<8x1xf32> -> vector<8x1xf32>
    %291 = vector.broadcast %290 : vector<8x1xf32> to vector<8x8xf32>
    %292 = arith.mulf %287, %291 : vector<8x8xf32>
    %cst_117 = arith.constant dense<0.000000e+00> : vector<8x8xf32>
    %293 = tpu.matmul %292, %277, %cst_117 {dimension_numbers = #tpu.dot_dimension_numbers<[1], [0], [0], [1], [0, 0, 1, 1], [], []>} : vector<8x8xf32>, vector<8x8xf32>, vector<8x8xf32> -> vector<8x8xf32>
    %c24_118 = arith.constant 24 : index
    %c0_119 = arith.constant 0 : index
    %294 = vector.load %arg10[%c24_118, %c0_119] : memref<32x32xf32, #tpu.memory_space<vmem>>, vector<8x32xf32>
    %cst_120 = arith.constant dense<0.000000e+00> : vector<8x32xf32>
    %295 = tpu.matmul %293, %294, %cst_120 {dimension_numbers = #tpu.dot_dimension_numbers<[1], [0], [0], [1], [0, 0, 1, 1], [], []>} : vector<8x8xf32>, vector<8x32xf32>, vector<8x32xf32> -> vector<8x32xf32>
    %296 = arith.addf %274, %295 : vector<8x32xf32>
    %297 = arith.addf %204, %296 : vector<8x32xf32>
    %cst_121 = arith.constant dense<0.000000e+00> : vector<8xf32>
    %298 = vector.multi_reduction <add>, %297, %cst_121 [1] : vector<8x32xf32> to vector<8xf32>
    %299 = vector.shape_cast %298 : vector<8xf32> to vector<8x1xf32>
    %cst_122 = arith.constant 3.200000e+01 : f32
    %300 = vector.broadcast %cst_122 : f32 to vector<8x1xf32>
    %301 = arith.divf %299, %300 : vector<8x1xf32>
    %302 = vector.broadcast %301 : vector<8x1xf32> to vector<8x32xf32>
    %303 = arith.subf %297, %302 : vector<8x32xf32>
    %304 = arith.mulf %303, %303 : vector<8x32xf32>
    %cst_123 = arith.constant dense<0.000000e+00> : vector<8xf32>
    %305 = vector.multi_reduction <add>, %304, %cst_123 [1] : vector<8x32xf32> to vector<8xf32>
    %306 = vector.shape_cast %305 : vector<8xf32> to vector<8x1xf32>
    %cst_124 = arith.constant 3.200000e+01 : f32
    %307 = vector.broadcast %cst_124 : f32 to vector<8x1xf32>
    %308 = arith.divf %306, %307 : vector<8x1xf32>
    %309 = vector.broadcast %301 : vector<8x1xf32> to vector<8x32xf32>
    %310 = arith.subf %297, %309 : vector<8x32xf32>
    %cst_125 = arith.constant 9.99999996E-13 : f32
    %311 = vector.broadcast %cst_125 : f32 to vector<8x1xf32>
    %312 = arith.addf %308, %311 : vector<8x1xf32>
    %313 = math.rsqrt %312 : vector<8x1xf32>
    %314 = vector.broadcast %313 : vector<8x1xf32> to vector<8x32xf32>
    %315 = arith.mulf %310, %314 : vector<8x32xf32>
    %316 = vector.broadcast %40 : vector<1x32xf32> to vector<8x32xf32>
    %317 = arith.mulf %315, %316 : vector<8x32xf32>
    %318 = vector.broadcast %41 : vector<1x32xf32> to vector<8x32xf32>
    %319 = arith.addf %317, %318 : vector<8x32xf32>
    %cst_126 = arith.constant dense<0.000000e+00> : vector<8x64xf32>
    %320 = tpu.matmul %319, %42, %cst_126 {dimension_numbers = #tpu.dot_dimension_numbers<[1], [0], [0], [1], [0, 0, 1, 1], [], []>} : vector<8x32xf32>, vector<32x64xf32>, vector<8x64xf32> -> vector<8x64xf32>
    %321 = vector.broadcast %43 : vector<1x64xf32> to vector<8x64xf32>
    %322 = arith.addf %320, %321 : vector<8x64xf32>
    %323 = arith.mulf %322, %322 : vector<8x64xf32>
    %324 = arith.mulf %322, %323 : vector<8x64xf32>
    %cst_127 = arith.constant 4.471500e-02 : f32
    %325 = vector.broadcast %cst_127 : f32 to vector<8x64xf32>
    %326 = arith.mulf %325, %324 : vector<8x64xf32>
    %327 = arith.addf %322, %326 : vector<8x64xf32>
    %cst_128 = arith.constant 0.797884583 : f32
    %328 = vector.broadcast %cst_128 : f32 to vector<8x64xf32>
    %329 = arith.mulf %328, %327 : vector<8x64xf32>
    %330 = math.tanh %329 : vector<8x64xf32>
    %cst_129 = arith.constant 1.000000e+00 : f32
    %331 = vector.broadcast %cst_129 : f32 to vector<8x64xf32>
    %332 = arith.addf %331, %330 : vector<8x64xf32>
    %cst_130 = arith.constant 5.000000e-01 : f32
    %333 = vector.broadcast %cst_130 : f32 to vector<8x64xf32>
    %334 = arith.mulf %333, %332 : vector<8x64xf32>
    %335 = arith.mulf %322, %334 : vector<8x64xf32>
    %cst_131 = arith.constant dense<0.000000e+00> : vector<8x32xf32>
    %336 = tpu.matmul %335, %44, %cst_131 {dimension_numbers = #tpu.dot_dimension_numbers<[1], [0], [0], [1], [0, 0, 1, 1], [], []>} : vector<8x64xf32>, vector<64x32xf32>, vector<8x32xf32> -> vector<8x32xf32>
    %337 = vector.broadcast %45 : vector<1x32xf32> to vector<8x32xf32>
    %338 = arith.addf %336, %337 : vector<8x32xf32>
    %339 = arith.addf %319, %338 : vector<8x32xf32>
    %cst_132 = arith.constant dense<0.000000e+00> : vector<8xf32>
    %340 = vector.multi_reduction <add>, %339, %cst_132 [1] : vector<8x32xf32> to vector<8xf32>
    %341 = vector.shape_cast %340 : vector<8xf32> to vector<8x1xf32>
    %cst_133 = arith.constant 3.200000e+01 : f32
    %342 = vector.broadcast %cst_133 : f32 to vector<8x1xf32>
    %343 = arith.divf %341, %342 : vector<8x1xf32>
    %344 = vector.broadcast %343 : vector<8x1xf32> to vector<8x32xf32>
    %345 = arith.subf %339, %344 : vector<8x32xf32>
    %346 = arith.mulf %345, %345 : vector<8x32xf32>
    %cst_134 = arith.constant dense<0.000000e+00> : vector<8xf32>
    %347 = vector.multi_reduction <add>, %346, %cst_134 [1] : vector<8x32xf32> to vector<8xf32>
    %348 = vector.shape_cast %347 : vector<8xf32> to vector<8x1xf32>
    %cst_135 = arith.constant 3.200000e+01 : f32
    %349 = vector.broadcast %cst_135 : f32 to vector<8x1xf32>
    %350 = arith.divf %348, %349 : vector<8x1xf32>
    %351 = vector.broadcast %343 : vector<8x1xf32> to vector<8x32xf32>
    %352 = arith.subf %339, %351 : vector<8x32xf32>
    %cst_136 = arith.constant 9.99999996E-13 : f32
    %353 = vector.broadcast %cst_136 : f32 to vector<8x1xf32>
    %354 = arith.addf %350, %353 : vector<8x1xf32>
    %355 = math.rsqrt %354 : vector<8x1xf32>
    %356 = vector.broadcast %355 : vector<8x1xf32> to vector<8x32xf32>
    %357 = arith.mulf %352, %356 : vector<8x32xf32>
    %358 = vector.broadcast %46 : vector<1x32xf32> to vector<8x32xf32>
    %359 = arith.mulf %357, %358 : vector<8x32xf32>
    %360 = vector.broadcast %47 : vector<1x32xf32> to vector<8x32xf32>
    %361 = arith.addf %359, %360 : vector<8x32xf32>
    %c0_137 = arith.constant 0 : index
    %c0_138 = arith.constant 0 : index
    %c0_139 = arith.constant 0 : index
    %362 = vector.load %arg3[%c0_137, %c0_138, %c0_139] : memref<1x8x1xf32, #tpu.memory_space<vmem>>, vector<1x8x1xf32>
    %363 = vector.shape_cast %362 : vector<1x8x1xf32> to vector<8x1xf32>
    %364 = vector.broadcast %363 : vector<8x1xf32> to vector<8x32xf32>
    %365 = arith.mulf %361, %364 : vector<8x32xf32>
    %cst_140 = arith.constant dense<0.000000e+00> : vector<32xf32>
    %366 = vector.multi_reduction <add>, %365, %cst_140 [0] : vector<8x32xf32> to vector<32xf32>
    %367 = vector.shape_cast %366 : vector<32xf32> to vector<1x32xf32>
    %cst_141 = arith.constant dense<0.000000e+00> : vector<1xf32>
    %368 = vector.multi_reduction <add>, %363, %cst_141 [0] : vector<8x1xf32> to vector<1xf32>
    %369 = vector.shape_cast %368 : vector<1xf32> to vector<1x1xf32>
    %cst_142 = arith.constant 9.99999971E-10 : f32
    %370 = vector.broadcast %cst_142 : f32 to vector<1x1xf32>
    %371 = arith.maximumf %369, %370 : vector<1x1xf32>
    %372 = tpu.reciprocal %371 {approx = true} : vector<1x1xf32> -> vector<1x1xf32>
    %373 = vector.broadcast %372 : vector<1x1xf32> to vector<1x32xf32>
    %374 = arith.mulf %367, %373 : vector<1x32xf32>
    %c0_143 = arith.constant 0 : index
    %c0_144 = arith.constant 0 : index
    %c0_145 = arith.constant 0 : index
    %375 = vector.load %arg20[%c0_143, %c0_144, %c0_145] : memref<1x1x32xf32, #tpu.memory_space<vmem>>, vector<1x1x32xf32>
    %376 = vector.shape_cast %375 : vector<1x1x32xf32> to vector<1x32xf32>
    %377 = vector.shape_cast %374 : vector<1x32xf32> to vector<1x1x32xf32>
    tpu.vector_store %arg20[%c0_143, %c0_144, %c0_145], %377 {strides = array<i32>} : memref<1x1x32xf32, #tpu.memory_space<vmem>>, vector<1x1x32xf32>,
    return
  }
  func.func @transform_0(%arg0: i32) -> (i32, i32, i32) {
    %c0_i32 = arith.constant 0 : i32
    %c0_i32_0 = arith.constant 0 : i32
    %c0_i32_1 = arith.constant 0 : i32
    return %arg0, %c0_i32, %c0_i32_0 : i32, i32, i32
  }
  func.func @transform_1(%arg0: i32) -> (i32, i32, i32) {
    %c0_i32 = arith.constant 0 : i32
    %c0_i32_0 = arith.constant 0 : i32
    %c0_i32_1 = arith.constant 0 : i32
    return %arg0, %c0_i32, %c0_i32_0 : i32, i32, i32
  }
  func.func @transform_2(%arg0: i32) -> (i32, i32, i32) {
    %c0_i32 = arith.constant 0 : i32
    %c0_i32_0 = arith.constant 0 : i32
    %c0_i32_1 = arith.constant 0 : i32
    return %arg0, %c0_i32, %c0_i32_0 : i32, i32, i32
  }
  func.func @transform_3(%arg0: i32) -> (i32, i32) {
    %c0_i32 = arith.constant 0 : i32
    %c0_i32_0 = arith.constant 0 : i32
    %c0_i32_1 = arith.constant 0 : i32
    return %c0_i32, %c0_i32_0 : i32, i32
  }
  func.func @transform_4(%arg0: i32) -> (i32, i32) {
    %c0_i32 = arith.constant 0 : i32
    %c0_i32_0 = arith.constant 0 : i32
    %c0_i32_1 = arith.constant 0 : i32
    return %c0_i32, %c0_i32_0 : i32, i32
  }
  func.func @transform_5(%arg0: i32) -> (i32, i32) {
    %c0_i32 = arith.constant 0 : i32
    %c0_i32_0 = arith.constant 0 : i32
    %c0_i32_1 = arith.constant 0 : i32
    return %c0_i32, %c0_i32_0 : i32, i32
  }
  func.func @transform_6(%arg0: i32) -> (i32, i32) {
    %c0_i32 = arith.constant 0 : i32
    %c0_i32_0 = arith.constant 0 : i32
    %c0_i32_1 = arith.constant 0 : i32
    return %c0_i32, %c0_i32_0 : i32, i32
  }
  func.func @transform_7(%arg0: i32) -> (i32, i32) {
    %c0_i32 = arith.constant 0 : i32
    %c0_i32_0 = arith.constant 0 : i32
    %c0_i32_1 = arith.constant 0 : i32
    return %c0_i32, %c0_i32_0 : i32, i32
  }
  func.func @transform_8(%arg0: i32) -> (i32, i32) {
    %c0_i32 = arith.constant 0 : i32
    %c0_i32_0 = arith.constant 0 : i32
    %c0_i32_1 = arith.constant 0 : i32
    return %c0_i32, %c0_i32_0 : i32, i32
  }
  func.func @transform_9(%arg0: i32) -> (i32, i32) {
    %c0_i32 = arith.constant 0 : i32
    %c0_i32_0 = arith.constant 0 : i32
    %c0_i32_1 = arith.constant 0 : i32
    return %c0_i32, %c0_i32_0 : i32, i32
  }
  func.func @transform_10(%arg0: i32) -> (i32, i32) {
    %c0_i32 = arith.constant 0 : i32
    %c0_i32_0 = arith.constant 0 : i32
    %c0_i32_1 = arith.constant 0 : i32
    return %c0_i32, %c0_i32_0 : i32, i32
  }
  func.func @transform_11(%arg0: i32) -> (i32, i32) {
    %c0_i32 = arith.constant 0 : i32
    %c0_i32_0 = arith.constant 0 : i32
    %c0_i32_1 = arith.constant 0 : i32
    return %c0_i32, %c0_i32_0 : i32, i32
  }
  func.func @transform_12(%arg0: i32) -> (i32, i32) {
    %c0_i32 = arith.constant 0 : i32
    %c0_i32_0 = arith.constant 0 : i32
    %c0_i32_1 = arith.constant 0 : i32
    return %c0_i32, %c0_i32_0 : i32, i32
  }
  func.func @transform_13(%arg0: i32) -> (i32, i32) {
    %c0_i32 = arith.constant 0 : i32
    %c0_i32_0 = arith.constant 0 : i32
    %c0_i32_1 = arith.constant 0 : i32
    return %c0_i32, %c0_i32_0 : i32, i32
  }
  func.func @transform_14(%arg0: i32) -> (i32, i32) {
    %c0_i32 = arith.constant 0 : i32
    %c0_i32_0 = arith.constant 0 : i32
    %c0_i32_1 = arith.constant 0 : i32
    return %c0_i32, %c0_i32_0 : i32, i32
  }
  func.func @transform_15(%arg0: i32) -> (i32, i32) {
    %c0_i32 = arith.constant 0 : i32
    %c0_i32_0 = arith.constant 0 : i32
    %c0_i32_1 = arith.constant 0 : i32
    return %c0_i32, %c0_i32_0 : i32, i32
  }
  func.func @transform_16(%arg0: i32) -> (i32, i32) {
    %c0_i32 = arith.constant 0 : i32
    %c0_i32_0 = arith.constant 0 : i32
    %c0_i32_1 = arith.constant 0 : i32
    return %c0_i32, %c0_i32_0 : i32, i32
  }
  func.func @transform_17(%arg0: i32) -> (i32, i32) {
    %c0_i32 = arith.constant 0 : i32
    %c0_i32_0 = arith.constant 0 : i32
    %c0_i32_1 = arith.constant 0 : i32
    return %c0_i32, %c0_i32_0 : i32, i32
  }
  func.func @transform_18(%arg0: i32) -> (i32, i32) {
    %c0_i32 = arith.constant 0 : i32
    %c0_i32_0 = arith.constant 0 : i32
    %c0_i32_1 = arith.constant 0 : i32
    return %c0_i32, %c0_i32_0 : i32, i32
  }
  func.func @transform_19(%arg0: i32) -> (i32, i32, i32) {
    %c0_i32 = arith.constant 0 : i32
    %c0_i32_0 = arith.constant 0 : i32
    %c0_i32_1 = arith.constant 0 : i32
    return %arg0, %c0_i32, %c0_i32_0 : i32, i32, i32
  }
}

</mosaic_0001>

<llo_original>
// kernel: net_forward.1
$region0: #{net_forward.1}
  #allocation0 [shape = 'u32[]', space=smem, size = 0x4, offset = 0x4, fixed_abs, tag = 'smem constant byte address 0x4 - core index']
  #allocation1 [shape = 'u32[144,128]{1,0:T(1,128)}', space=vmem, size = 0x12000, scoped, tag = 'internal scratch']
  %s0 = inlined_call_operand.vmem [shape: f32[2,8,16], index: 0, kind: input, shape index: {}]
  %s1 = inlined_call_operand.vmem [shape: f32[2,1,8], index: 1, kind: input, shape index: {}]
  %s2 = inlined_call_operand.vmem [shape: f32[2,8,1], index: 2, kind: input, shape index: {}]
  %s3 = inlined_call_operand.vmem [shape: f32[1,16], index: 3, kind: input, shape index: {}]
  %s4 = inlined_call_operand.vmem [shape: f32[1,16], index: 4, kind: input, shape index: {}]
  %s5 = inlined_call_operand.vmem [shape: f32[16,32], index: 5, kind: input, shape index: {}]
  %s6 = inlined_call_operand.vmem [shape: f32[1,32], index: 6, kind: input, shape index: {}]
  %s7 = inlined_call_operand.vmem [shape: f32[32,96], index: 7, kind: input, shape index: {}]
  %s8 = inlined_call_operand.vmem [shape: f32[1,96], index: 8, kind: input, shape index: {}]
  %s9 = inlined_call_operand.vmem [shape: f32[32,32], index: 9, kind: input, shape index: {}]
  %s10 = inlined_call_operand.vmem [shape: f32[1,32], index: 10, kind: input, shape index: {}]
  %s11 = inlined_call_operand.vmem [shape: f32[1,32], index: 11, kind: input, shape index: {}]
  %s12 = inlined_call_operand.vmem [shape: f32[1,32], index: 12, kind: input, shape index: {}]
  %s13 = inlined_call_operand.vmem [shape: f32[32,64], index: 13, kind: input, shape index: {}]
  %s14 = inlined_call_operand.vmem [shape: f32[1,64], index: 14, kind: input, shape index: {}]
  %s15 = inlined_call_operand.vmem [shape: f32[64,32], index: 15, kind: input, shape index: {}]
  %s16 = inlined_call_operand.vmem [shape: f32[1,32], index: 16, kind: input, shape index: {}]
  %s17 = inlined_call_operand.vmem [shape: f32[1,32], index: 17, kind: input, shape index: {}]
  %s18 = inlined_call_operand.vmem [shape: f32[1,32], index: 18, kind: input, shape index: {}]
  %s19 = inlined_call_operand.hbm [shape: f32[2,1,32], index: 19, kind: output, shape index: {}]
  %s20 = sld [smem:[#allocation0]]
  $region109: #{net_forward.1} parent=0
    _
  %s22 = ssub.s32 1, %s20
  %s23 = scalar_select 0, %s22, %s20
  $region1: #{net_forward.1} parent=0
    #allocation2 [shape = 'u8[1024]{0}', space=vmem, size = 0x400, scoped, tag = 'output window, operand 0']
    #allocation3 [shape = 's32[2]{0}', space=sflag, size = 0x8, scoped, tag = 'scoped memory for net_forward.1']
    %24 = vsyncpa [#allocation3], 0
    %s25 = scalar_lea.sflag [#allocation3], 1
    %26 = vsyncpa %s25, 0
    loop: start=0, step=1, limit=4
    $region2: #{net_forward.1} parent=1 // loop_pre_header
      _
    $region3: #{net_forward.1} parent=1 // loop_header
      %s28 = sphi 0, %s32
      %p29 = scmp.ge.s32.totalorder %s28, 4
      %s38 = sphi 0, %s40
      %s41 = sphi 0, %s38
      %s42 = sphi 0, %s41
      %s58 = sphi 0, %s42
      %s64 = sphi 0, %s66
      %s67 = sphi 0, %s64
      %s68 = sphi 0, %s67
      %s84 = sphi 0, %s68
      %s90 = sphi 0, %s92
      %s93 = sphi 0, %s90
      %s94 = sphi 0, %s93
      %s110 = sphi 0, %s94
      %s114 = sphi 0, %s114
      %s116 = sphi 0, %s114
      %s117 = sphi 0, %s116
      %s131 = sphi 0, %s117
      %s135 = sphi 0, %s135
      %s137 = sphi 0, %s135
      %s138 = sphi 0, %s137
      %s152 = sphi 0, %s138
      %s156 = sphi 0, %s156
      %s158 = sphi 0, %s156
      %s159 = sphi 0, %s158
      %s173 = sphi 0, %s159
      %s177 = sphi 0, %s177
      %s179 = sphi 0, %s177
      %s180 = sphi 0, %s179
      %s194 = sphi 0, %s180
      %s198 = sphi 0, %s198
      %s200 = sphi 0, %s198
      %s201 = sphi 0, %s200
      %s215 = sphi 0, %s201
      %s219 = sphi 0, %s219
      %s221 = sphi 0, %s219
      %s222 = sphi 0, %s221
      %s236 = sphi 0, %s222
      %s240 = sphi 0, %s240
      %s242 = sphi 0, %s240
      %s243 = sphi 0, %s242
      %s257 = sphi 0, %s243
      %s261 = sphi 0, %s261
      %s263 = sphi 0, %s261
      %s264 = sphi 0, %s263
      %s278 = sphi 0, %s264
      %s282 = sphi 0, %s282
      %s284 = sphi 0, %s282
      %s285 = sphi 0, %s284
      %s299 = sphi 0, %s285
      %s303 = sphi 0, %s303
      %s305 = sphi 0, %s303
      %s306 = sphi 0, %s305
      %s320 = sphi 0, %s306
      %s324 = sphi 0, %s324
      %s326 = sphi 0, %s324
      %s327 = sphi 0, %s326
      %s341 = sphi 0, %s327
      %s345 = sphi 0, %s345
      %s347 = sphi 0, %s345
      %s348 = sphi 0, %s347
      %s362 = sphi 0, %s348
      %s366 = sphi 0, %s366
      %s368 = sphi 0, %s366
      %s369 = sphi 0, %s368
      %s383 = sphi 0, %s369
      %s387 = sphi 0, %s387
      %s389 = sphi 0, %s387
      %s390 = sphi 0, %s389
      %s404 = sphi 0, %s390
      %s408 = sphi 0, %s408
      %s410 = sphi 0, %s408
      %s411 = sphi 0, %s410
      %s425 = sphi 0, %s411
      %s429 = sphi 0, %s429
      %s431 = sphi 0, %s429
      %s432 = sphi 0, %s431
      %s446 = sphi 0, %s432
      %s452 = sphi 0, %s454
      %s455 = sphi 0, %s452
      %s456 = sphi 0, %s455
      %s472 = sphi 0, %s456
    $region4: #{net_forward.1} parent=1 // loop_header_branch
      %31 = sbr.rel (%p29) target = $region8
    $region5: #{net_forward.1} parent=1 // loop_body
      %s33 = ssub.s32 %s28, 1
      %s34 = ssub.s32 %s28, 2
      %s35 = sadd.s32 %s28, 1
      %s36 = ssub.s32 %s28, %s35
      %p37 = scmp.eq.s32.totalorder %s36, 0
      %s39 = sadd.s32 %s38, 1
      %s40 = scalar_select %p37, %s38, %s39
      %p43 = pneg %p37
      %p44 = scmp.eq.s32.totalorder %s28, 1
      %p45 = por %p43, %p44
      %p46 = scmp.ne.s32.totalorder %s38, %s41
      %p47 = scmp.eq.s32.totalorder %s28, 0
      %p48 = por %p46, %p47
      %p49 = scmp.ne.s32.totalorder %s38, %s41
      %p50 = scmp.eq.s32.totalorder %s33, 1
      %p51 = por %p49, %p50
      %p52 = scmp.ne.s32.totalorder %s41, %s42
      %p53 = scmp.eq.s32.totalorder %s33, 0
      %p54 = por %p52, %p53
      %p55 = scmp.ne.s32.totalorder %s41, %s42
      %p56 = scmp.eq.s32.totalorder %s34, 1
      %p57 = por %p55, %p56
      %p59 = scmp.ne.s32.totalorder %s42, %s58
      %p60 = scmp.eq.s32.totalorder %s34, 0
      %p61 = por %p59, %p60
      %s62 = ssub.s32 %s28, %s35
      %p63 = scmp.eq.s32.totalorder %s62, 0
      %s65 = sadd.s32 %s64, 1
      %s66 = scalar_select %p63, %s64, %s65
      %p69 = pneg %p63
      %p70 = scmp.eq.s32.totalorder %s28, 1
      %p71 = por %p69, %p70
      %p72 = scmp.ne.s32.totalorder %s64, %s67
      %p73 = scmp.eq.s32.totalorder %s28, 0
      %p74 = por %p72, %p73
      %p75 = scmp.ne.s32.totalorder %s64, %s67
      %p76 = scmp.eq.s32.totalorder %s33, 1
      %p77 = por %p75, %p76
      %p78 = scmp.ne.s32.totalorder %s67, %s68
      %p79 = scmp.eq.s32.totalorder %s33, 0
      %p80 = por %p78, %p79
      %p81 = scmp.ne.s32.totalorder %s67, %s68
      %p82 = scmp.eq.s32.totalorder %s34, 1
      %p83 = por %p81, %p82
      %p85 = scmp.ne.s32.totalorder %s68, %s84
      %p86 = scmp.eq.s32.totalorder %s34, 0
      %p87 = por %p85, %p86
      %s88 = ssub.s32 %s28, %s35
      %p89 = scmp.eq.s32.totalorder %s88, 0
      %s91 = sadd.s32 %s90, 1
      %s92 = scalar_select %p89, %s90, %s91
      %p95 = pneg %p89
      %p96 = scmp.eq.s32.totalorder %s28, 1
      %p97 = por %p95, %p96
      %p98 = scmp.ne.s32.totalorder %s90, %s93
      %p99 = scmp.eq.s32.totalorder %s28, 0
      %p100 = por %p98, %p99
      %p101 = scmp.ne.s32.totalorder %s90, %s93
      %p102 = scmp.eq.s32.totalorder %s33, 1
      %p103 = por %p101, %p102
      %p104 = scmp.ne.s32.totalorder %s93, %s94
      %p105 = scmp.eq.s32.totalorder %s33, 0
      %p106 = por %p104, %p105
      %p107 = scmp.ne.s32.totalorder %s93, %s94
      %p108 = scmp.eq.s32.totalorder %s34, 1
      %p109 = por %p107, %p108
      %p111 = scmp.ne.s32.totalorder %s94, %s110
      %p112 = scmp.eq.s32.totalorder %s34, 0
      %p113 = por %p111, %p112
      %s115 = sadd.s32 %s114, 1
      %p118 = scmp.eq.s32.totalorder %s28, 1
      %p119 = scmp.ne.s32.totalorder %s114, %s116
      %p120 = scmp.eq.s32.totalorder %s28, 0
      %p121 = por %p119, %p120
      %p122 = scmp.ne.s32.totalorder %s114, %s116
      %p123 = scmp.eq.s32.totalorder %s33, 1
      %p124 = por %p122, %p123
      %p125 = scmp.ne.s32.totalorder %s116, %s117
      %p126 = scmp.eq.s32.totalorder %s33, 0
      %p127 = por %p125, %p126
      %p128 = scmp.ne.s32.totalorder %s116, %s117
      %p129 = scmp.eq.s32.totalorder %s34, 1
      %p130 = por %p128, %p129
      %p132 = scmp.ne.s32.totalorder %s117, %s131
      %p133 = scmp.eq.s32.totalorder %s34, 0
      %p134 = por %p132, %p133
      %s136 = sadd.s32 %s135, 1
      %p139 = scmp.eq.s32.totalorder %s28, 1
      %p140 = scmp.ne.s32.totalorder %s135, %s137
      %p141 = scmp.eq.s32.totalorder %s28, 0
      %p142 = por %p140, %p141
      %p143 = scmp.ne.s32.totalorder %s135, %s137
      %p144 = scmp.eq.s32.totalorder %s33, 1
      %p145 = por %p143, %p144
      %p146 = scmp.ne.s32.totalorder %s137, %s138
      %p147 = scmp.eq.s32.totalorder %s33, 0
      %p148 = por %p146, %p147
      %p149 = scmp.ne.s32.totalorder %s137, %s138
      %p150 = scmp.eq.s32.totalorder %s34, 1
      %p151 = por %p149, %p150
      %p153 = scmp.ne.s32.totalorder %s138, %s152
      %p154 = scmp.eq.s32.totalorder %s34, 0
      %p155 = por %p153, %p154
      %s157 = sadd.s32 %s156, 1
      %p160 = scmp.eq.s32.totalorder %s28, 1
      %p161 = scmp.ne.s32.totalorder %s156, %s158
      %p162 = scmp.eq.s32.totalorder %s28, 0
      %p163 = por %p161, %p162
      %p164 = scmp.ne.s32.totalorder %s156, %s158
      %p165 = scmp.eq.s32.totalorder %s33, 1
      %p166 = por %p164, %p165
      %p167 = scmp.ne.s32.totalorder %s158, %s159
      %p168 = scmp.eq.s32.totalorder %s33, 0
      %p169 = por %p167, %p168
      %p170 = scmp.ne.s32.totalorder %s158, %s159
      %p171 = scmp.eq.s32.totalorder %s34, 1
      %p172 = por %p170, %p171
      %p174 = scmp.ne.s32.totalorder %s159, %s173
      %p175 = scmp.eq.s32.totalorder %s34, 0
      %p176 = por %p174, %p175
      %s178 = sadd.s32 %s177, 1
      %p181 = scmp.eq.s32.totalorder %s28, 1
      %p182 = scmp.ne.s32.totalorder %s177, %s179
      %p183 = scmp.eq.s32.totalorder %s28, 0
      %p184 = por %p182, %p183
      %p185 = scmp.ne.s32.totalorder %s177, %s179
      %p186 = scmp.eq.s32.totalorder %s33, 1
      %p187 = por %p185, %p186
      %p188 = scmp.ne.s32.totalorder %s179, %s180
      %p189 = scmp.eq.s32.totalorder %s33, 0
      %p190 = por %p188, %p189
      %p191 = scmp.ne.s32.totalorder %s179, %s180
      %p192 = scmp.eq.s32.totalorder %s34, 1
      %p193 = por %p191, %p192
      %p195 = scmp.ne.s32.totalorder %s180, %s194
      %p196 = scmp.eq.s32.totalorder %s34, 0
      %p197 = por %p195, %p196
      %s199 = sadd.s32 %s198, 1
      %p202 = scmp.eq.s32.totalorder %s28, 1
      %p203 = scmp.ne.s32.totalorder %s198, %s200
      %p204 = scmp.eq.s32.totalorder %s28, 0
      %p205 = por %p203, %p204
      %p206 = scmp.ne.s32.totalorder %s198, %s200
      %p207 = scmp.eq.s32.totalorder %s33, 1
      %p208 = por %p206, %p207
      %p209 = scmp.ne.s32.totalorder %s200, %s201
      %p210 = scmp.eq.s32.totalorder %s33, 0
      %p211 = por %p209, %p210
      %p212 = scmp.ne.s32.totalorder %s200, %s201
      %p213 = scmp.eq.s32.totalorder %s34, 1
      %p214 = por %p212, %p213
      %p216 = scmp.ne.s32.totalorder %s201, %s215
      %p217 = scmp.eq.s32.totalorder %s34, 0
      %p218 = por %p216, %p217
      %s220 = sadd.s32 %s219, 1
      %p223 = scmp.eq.s32.totalorder %s28, 1
      %p224 = scmp.ne.s32.totalorder %s219, %s221
      %p225 = scmp.eq.s32.totalorder %s28, 0
      %p226 = por %p224, %p225
      %p227 = scmp.ne.s32.totalorder %s219, %s221
      %p228 = scmp.eq.s32.totalorder %s33, 1
      %p229 = por %p227, %p228
      %p230 = scmp.ne.s32.totalorder %s221, %s222
      %p231 = scmp.eq.s32.totalorder %s33, 0
      %p232 = por %p230, %p231
      %p233 = scmp.ne.s32.totalorder %s221, %s222
      %p234 = scmp.eq.s32.totalorder %s34, 1
      %p235 = por %p233, %p234
      %p237 = scmp.ne.s32.totalorder %s222, %s236
      %p238 = scmp.eq.s32.totalorder %s34, 0
      %p239 = por %p237, %p238
      %s241 = sadd.s32 %s240, 1
      %p244 = scmp.eq.s32.totalorder %s28, 1
      %p245 = scmp.ne.s32.totalorder %s240, %s242
      %p246 = scmp.eq.s32.totalorder %s28, 0
      %p247 = por %p245, %p246
      %p248 = scmp.ne.s32.totalorder %s240, %s242
      %p249 = scmp.eq.s32.totalorder %s33, 1
      %p250 = por %p248, %p249
      %p251 = scmp.ne.s32.totalorder %s242, %s243
      %p252 = scmp.eq.s32.totalorder %s33, 0
      %p253 = por %p251, %p252
      %p254 = scmp.ne.s32.totalorder %s242, %s243
      %p255 = scmp.eq.s32.totalorder %s34, 1
      %p256 = por %p254, %p255
      %p258 = scmp.ne.s32.totalorder %s243, %s257
      %p259 = scmp.eq.s32.totalorder %s34, 0
      %p260 = por %p258, %p259
      %s262 = sadd.s32 %s261, 1
      %p265 = scmp.eq.s32.totalorder %s28, 1
      %p266 = scmp.ne.s32.totalorder %s261, %s263
      %p267 = scmp.eq.s32.totalorder %s28, 0
      %p268 = por %p266, %p267
      %p269 = scmp.ne.s32.totalorder %s261, %s263
      %p270 = scmp.eq.s32.totalorder %s33, 1
      %p271 = por %p269, %p270
      %p272 = scmp.ne.s32.totalorder %s263, %s264
      %p273 = scmp.eq.s32.totalorder %s33, 0
      %p274 = por %p272, %p273
      %p275 = scmp.ne.s32.totalorder %s263, %s264
      %p276 = scmp.eq.s32.totalorder %s34, 1
      %p277 = por %p275, %p276
      %p279 = scmp.ne.s32.totalorder %s264, %s278
      %p280 = scmp.eq.s32.totalorder %s34, 0
      %p281 = por %p279, %p280
      %s283 = sadd.s32 %s282, 1
      %p286 = scmp.eq.s32.totalorder %s28, 1
      %p287 = scmp.ne.s32.totalorder %s282, %s284
      %p288 = scmp.eq.s32.totalorder %s28, 0
      %p289 = por %p287, %p288
      %p290 = scmp.ne.s32.totalorder %s282, %s284
      %p291 = scmp.eq.s32.totalorder %s33, 1
      %p292 = por %p290, %p291
      %p293 = scmp.ne.s32.totalorder %s284, %s285
      %p294 = scmp.eq.s32.totalorder %s33, 0
      %p295 = por %p293, %p294
      %p296 = scmp.ne.s32.totalorder %s284, %s285
      %p297 = scmp.eq.s32.totalorder %s34, 1
      %p298 = por %p296, %p297
      %p300 = scmp.ne.s32.totalorder %s285, %s299
      %p301 = scmp.eq.s32.totalorder %s34, 0
      %p302 = por %p300, %p301
      %s304 = sadd.s32 %s303, 1
      %p307 = scmp.eq.s32.totalorder %s28, 1
      %p308 = scmp.ne.s32.totalorder %s303, %s305
      %p309 = scmp.eq.s32.totalorder %s28, 0
      %p310 = por %p308, %p309
      %p311 = scmp.ne.s32.totalorder %s303, %s305
      %p312 = scmp.eq.s32.totalorder %s33, 1
      %p313 = por %p311, %p312
      %p314 = scmp.ne.s32.totalorder %s305, %s306
      %p315 = scmp.eq.s32.totalorder %s33, 0
      %p316 = por %p314, %p315
      %p317 = scmp.ne.s32.totalorder %s305, %s306
      %p318 = scmp.eq.s32.totalorder %s34, 1
      %p319 = por %p317, %p318
      %p321 = scmp.ne.s32.totalorder %s306, %s320
      %p322 = scmp.eq.s32.totalorder %s34, 0
      %p323 = por %p321, %p322
      %s325 = sadd.s32 %s324, 1
      %p328 = scmp.eq.s32.totalorder %s28, 1
      %p329 = scmp.ne.s32.totalorder %s324, %s326
      %p330 = scmp.eq.s32.totalorder %s28, 0
      %p331 = por %p329, %p330
      %p332 = scmp.ne.s32.totalorder %s324, %s326
      %p333 = scmp.eq.s32.totalorder %s33, 1
      %p334 = por %p332, %p333
      %p335 = scmp.ne.s32.totalorder %s326, %s327
      %p336 = scmp.eq.s32.totalorder %s33, 0
      %p337 = por %p335, %p336
      %p338 = scmp.ne.s32.totalorder %s326, %s327
      %p339 = scmp.eq.s32.totalorder %s34, 1
      %p340 = por %p338, %p339
      %p342 = scmp.ne.s32.totalorder %s327, %s341
      %p343 = scmp.eq.s32.totalorder %s34, 0
      %p344 = por %p342, %p343
      %s346 = sadd.s32 %s345, 1
      %p349 = scmp.eq.s32.totalorder %s28, 1
      %p350 = scmp.ne.s32.totalorder %s345, %s347
      %p351 = scmp.eq.s32.totalorder %s28, 0
      %p352 = por %p350, %p351
      %p353 = scmp.ne.s32.totalorder %s345, %s347
      %p354 = scmp.eq.s32.totalorder %s33, 1
      %p355 = por %p353, %p354
      %p356 = scmp.ne.s32.totalorder %s347, %s348
      %p357 = scmp.eq.s32.totalorder %s33, 0
      %p358 = por %p356, %p357
      %p359 = scmp.ne.s32.totalorder %s347, %s348
      %p360 = scmp.eq.s32.totalorder %s34, 1
      %p361 = por %p359, %p360
      %p363 = scmp.ne.s32.totalorder %s348, %s362
      %p364 = scmp.eq.s32.totalorder %s34, 0
      %p365 = por %p363, %p364
      %s367 = sadd.s32 %s366, 1
      %p370 = scmp.eq.s32.totalorder %s28, 1
      %p371 = scmp.ne.s32.totalorder %s366, %s368
      %p372 = scmp.eq.s32.totalorder %s28, 0
      %p373 = por %p371, %p372
      %p374 = scmp.ne.s32.totalorder %s366, %s368
      %p375 = scmp.eq.s32.totalorder %s33, 1
      %p376 = por %p374, %p375
      %p377 = scmp.ne.s32.totalorder %s368, %s369
      %p378 = scmp.eq.s32.totalorder %s33, 0
      %p379 = por %p377, %p378
      %p380 = scmp.ne.s32.totalorder %s368, %s369
      %p381 = scmp.eq.s32.totalorder %s34, 1
      %p382 = por %p380, %p381
      %p384 = scmp.ne.s32.totalorder %s369, %s383
      %p385 = scmp.eq.s32.totalorder %s34, 0
      %p386 = por %p384, %p385
      %s388 = sadd.s32 %s387, 1
      %p391 = scmp.eq.s32.totalorder %s28, 1
      %p392 = scmp.ne.s32.totalorder %s387, %s389
      %p393 = scmp.eq.s32.totalorder %s28, 0
      %p394 = por %p392, %p393
      %p395 = scmp.ne.s32.totalorder %s387, %s389
      %p396 = scmp.eq.s32.totalorder %s33, 1
      %p397 = por %p395, %p396
      %p398 = scmp.ne.s32.totalorder %s389, %s390
      %p399 = scmp.eq.s32.totalorder %s33, 0
      %p400 = por %p398, %p399
      %p401 = scmp.ne.s32.totalorder %s389, %s390
      %p402 = scmp.eq.s32.totalorder %s34, 1
      %p403 = por %p401, %p402
      %p405 = scmp.ne.s32.totalorder %s390, %s404
      %p406 = scmp.eq.s32.totalorder %s34, 0
      %p407 = por %p405, %p406
      %s409 = sadd.s32 %s408, 1
      %p412 = scmp.eq.s32.totalorder %s28, 1
      %p413 = scmp.ne.s32.totalorder %s408, %s410
      %p414 = scmp.eq.s32.totalorder %s28, 0
      %p415 = por %p413, %p414
      %p416 = scmp.ne.s32.totalorder %s408, %s410
      %p417 = scmp.eq.s32.totalorder %s33, 1
      %p418 = por %p416, %p417
      %p419 = scmp.ne.s32.totalorder %s410, %s411
      %p420 = scmp.eq.s32.totalorder %s33, 0
      %p421 = por %p419, %p420
      %p422 = scmp.ne.s32.totalorder %s410, %s411
      %p423 = scmp.eq.s32.totalorder %s34, 1
      %p424 = por %p422, %p423
      %p426 = scmp.ne.s32.totalorder %s411, %s425
      %p427 = scmp.eq.s32.totalorder %s34, 0
      %p428 = por %p426, %p427
      %s430 = sadd.s32 %s429, 1
      %p433 = scmp.eq.s32.totalorder %s28, 1
      %p434 = scmp.ne.s32.totalorder %s429, %s431
      %p435 = scmp.eq.s32.totalorder %s28, 0
      %p436 = por %p434, %p435
      %p437 = scmp.ne.s32.totalorder %s429, %s431
      %p438 = scmp.eq.s32.totalorder %s33, 1
      %p439 = por %p437, %p438
      %p440 = scmp.ne.s32.totalorder %s431, %s432
      %p441 = scmp.eq.s32.totalorder %s33, 0
      %p442 = por %p440, %p441
      %p443 = scmp.ne.s32.totalorder %s431, %s432
      %p444 = scmp.eq.s32.totalorder %s34, 1
      %p445 = por %p443, %p444
      %p447 = scmp.ne.s32.totalorder %s432, %s446
      %p448 = scmp.eq.s32.totalorder %s34, 0
      %p449 = por %p447, %p448
      %s450 = ssub.s32 %s28, %s35
      %p451 = scmp.eq.s32.totalorder %s450, 0
      %s453 = sadd.s32 %s452, 1
      %s454 = scalar_select %p451, %s452, %s453
      %p457 = pneg %p451
      %p458 = scmp.eq.s32.totalorder %s28, 1
      %p459 = por %p457, %p458
      %p460 = scmp.ne.s32.totalorder %s452, %s455
      %p461 = scmp.eq.s32.totalorder %s28, 0
      %p462 = por %p460, %p461
      %p463 = scmp.ne.s32.totalorder %s452, %s455
      %p464 = scmp.eq.s32.totalorder %s33, 1
      %p465 = por %p463, %p464
      %p466 = scmp.ne.s32.totalorder %s455, %s456
      %p467 = scmp.eq.s32.totalorder %s33, 0
      %p468 = por %p466, %p467
      %p469 = scmp.ne.s32.totalorder %s455, %s456
      %p470 = scmp.eq.s32.totalorder %s34, 1
      %p471 = por %p469, %p470
      %p473 = scmp.ne.s32.totalorder %s456, %s472
      %p474 = scmp.eq.s32.totalorder %s34, 0
      %p475 = por %p473, %p474
      %p476 = scmp.le.s32.totalorder 1, %s28
      %p477 = scmp.lt.s32.totalorder %s28, 3
      %p478 = pnand %p476, %p477
      %p479 = pneg %p478
      // Predicated region
      $region9: #{net_forward.1} parent=5 // pred_check
        _
      $region10: #{net_forward.1} parent=5 // pred_check_branch
        %481 = sbr.rel (%p478) target = $region12
      $region11: #{net_forward.1} parent=5 // pred_region
        %s482 = ssub.s32 %s28, 1
        // Predicated region
        $region13: #{net_forward.1} parent=11 // pred_check
          %p483 = pneg %p127
        $region14: #{net_forward.1} parent=11 // pred_check_branch
          %485 = sbr.rel (%p483) target = $region16
        $region15: #{net_forward.1} parent=11 // pred_region
          _
        $region16: #{net_forward.1} parent=11 // pred_fallthru
          _
        // Predicated region
        $region17: #{net_forward.1} parent=11 // pred_check
          %p486 = pneg %p148
        $region18: #{net_forward.1} parent=11 // pred_check_branch
          %488 = sbr.rel (%p486) target = $region20
        $region19: #{net_forward.1} parent=11 // pred_region
          _
        $region20: #{net_forward.1} parent=11 // pred_fallthru
          _
        // Predicated region
        $region21: #{net_forward.1} parent=11 // pred_check
          %p489 = pneg %p169
        $region22: #{net_forward.1} parent=11 // pred_check_branch
          %491 = sbr.rel (%p489) target = $region24
        $region23: #{net_forward.1} parent=11 // pred_region
          _
        $region24: #{net_forward.1} parent=11 // pred_fallthru
          _
        // Predicated region
        $region25: #{net_forward.1} parent=11 // pred_check
          %p492 = pneg %p190
        $region26: #{net_forward.1} parent=11 // pred_check_branch
          %494 = sbr.rel (%p492) target = $region28
        $region27: #{net_forward.1} parent=11 // pred_region
          _
        $region28: #{net_forward.1} parent=11 // pred_fallthru
          _
        // Predicated region
        $region29: #{net_forward.1} parent=11 // pred_check
          %p495 = pneg %p211
        $region30: #{net_forward.1} parent=11 // pred_check_branch
          %497 = sbr.rel (%p495) target = $region32
        $region31: #{net_forward.1} parent=11 // pred_region
          _
        $region32: #{net_forward.1} parent=11 // pred_fallthru
          _
        // Predicated region
        $region33: #{net_forward.1} parent=11 // pred_check
          %p498 = pneg %p232
        $region34: #{net_forward.1} parent=11 // pred_check_branch
          %500 = sbr.rel (%p498) target = $region36
        $region35: #{net_forward.1} parent=11 // pred_region
          _
        $region36: #{net_forward.1} parent=11 // pred_fallthru
          _
        // Predicated region
        $region37: #{net_forward.1} parent=11 // pred_check
          %p501 = pneg %p253
        $region38: #{net_forward.1} parent=11 // pred_check_branch
          %503 = sbr.rel (%p501) target = $region40
        $region39: #{net_forward.1} parent=11 // pred_region
          _
        $region40: #{net_forward.1} parent=11 // pred_fallthru
          _
        // Predicated region
        $region41: #{net_forward.1} parent=11 // pred_check
          %p504 = pneg %p274
        $region42: #{net_forward.1} parent=11 // pred_check_branch
          %506 = sbr.rel (%p504) target = $region44
        $region43: #{net_forward.1} parent=11 // pred_region
          _
        $region44: #{net_forward.1} parent=11 // pred_fallthru
          _
        // Predicated region
        $region45: #{net_forward.1} parent=11 // pred_check
          %p507 = pneg %p295
        $region46: #{net_forward.1} parent=11 // pred_check_branch
          %509 = sbr.rel (%p507) target = $region48
        $region47: #{net_forward.1} parent=11 // pred_region
          _
        $region48: #{net_forward.1} parent=11 // pred_fallthru
          _
        // Predicated region
        $region49: #{net_forward.1} parent=11 // pred_check
          %p510 = pneg %p316
        $region50: #{net_forward.1} parent=11 // pred_check_branch
          %512 = sbr.rel (%p510) target = $region52
        $region51: #{net_forward.1} parent=11 // pred_region
          _
        $region52: #{net_forward.1} parent=11 // pred_fallthru
          _
        // Predicated region
        $region53: #{net_forward.1} parent=11 // pred_check
          %p513 = pneg %p337
        $region54: #{net_forward.1} parent=11 // pred_check_branch
          %515 = sbr.rel (%p513) target = $region56
        $region55: #{net_forward.1} parent=11 // pred_region
          _
        $region56: #{net_forward.1} parent=11 // pred_fallthru
          _
        // Predicated region
        $region57: #{net_forward.1} parent=11 // pred_check
          %p516 = pneg %p358
        $region58: #{net_forward.1} parent=11 // pred_check_branch
          %518 = sbr.rel (%p516) target = $region60
        $region59: #{net_forward.1} parent=11 // pred_region
          _
        $region60: #{net_forward.1} parent=11 // pred_fallthru
          _
        // Predicated region
        $region61: #{net_forward.1} parent=11 // pred_check
          %p519 = pneg %p379
        $region62: #{net_forward.1} parent=11 // pred_check_branch
          %521 = sbr.rel (%p519) target = $region64
        $region63: #{net_forward.1} parent=11 // pred_region
          _
        $region64: #{net_forward.1} parent=11 // pred_fallthru
          _
        // Predicated region
        $region65: #{net_forward.1} parent=11 // pred_check
          %p522 = pneg %p400
        $region66: #{net_forward.1} parent=11 // pred_check_branch
          %524 = sbr.rel (%p522) target = $region68
        $region67: #{net_forward.1} parent=11 // pred_region
          _
        $region68: #{net_forward.1} parent=11 // pred_fallthru
          _
        // Predicated region
        $region69: #{net_forward.1} parent=11 // pred_check
          %p525 = pneg %p421
        $region70: #{net_forward.1} parent=11 // pred_check_branch
          %527 = sbr.rel (%p525) target = $region72
        $region71: #{net_forward.1} parent=11 // pred_region
          _
        $region72: #{net_forward.1} parent=11 // pred_fallthru
          _
        // Predicated region
        $region73: #{net_forward.1} parent=11 // pred_check
          %p528 = pneg %p442
        $region74: #{net_forward.1} parent=11 // pred_check_branch
          %530 = sbr.rel (%p528) target = $region76
        $region75: #{net_forward.1} parent=11 // pred_region
          _
        $region76: #{net_forward.1} parent=11 // pred_fallthru
          _
      $region12: #{net_forward.1} parent=5 // pred_fallthru
        _
      %p531 = scmp.lt.s32.totalorder %s28, 2
      // Predicated region
      $region77: #{net_forward.1} parent=5 // pred_check
        %p532 = pneg %p531
      $region78: #{net_forward.1} parent=5 // pred_check_branch
        %534 = sbr.rel (%p532) target = $region80
      $region79: #{net_forward.1} parent=5 // pred_region
        // Predicated region
        $region81: #{net_forward.1} parent=79 // pred_check
          %p535 = pneg %p48
        $region82: #{net_forward.1} parent=79 // pred_check_branch
          %537 = sbr.rel (%p535) target = $region84
        $region83: #{net_forward.1} parent=79 // pred_region
          %p538 = scmp.lt.s32.totalorder %s28, 1
          %s539 = scalar_select %p538, %s28, 1
          %s540 = smul.addr %s539, 8
          %s541 = scalar_lea.vmem %s0, %s540
        $region84: #{net_forward.1} parent=79 // pred_fallthru
          _
        // Predicated region
        $region85: #{net_forward.1} parent=79 // pred_check
          %p542 = pneg %p74
        $region86: #{net_forward.1} parent=79 // pred_check_branch
          %544 = sbr.rel (%p542) target = $region88
        $region87: #{net_forward.1} parent=79 // pred_region
          %p545 = scmp.lt.s32.totalorder %s28, 1
          %s546 = scalar_select %p545, %s28, 1
          %s547 = scalar_lea.vmem %s1, %s546
        $region88: #{net_forward.1} parent=79 // pred_fallthru
          _
        // Predicated region
        $region89: #{net_forward.1} parent=79 // pred_check
          %p548 = pneg %p100
        $region90: #{net_forward.1} parent=79 // pred_check_branch
          %550 = sbr.rel (%p548) target = $region92
        $region91: #{net_forward.1} parent=79 // pred_region
          %p551 = scmp.lt.s32.totalorder %s28, 1
          %s552 = scalar_select %p551, %s28, 1
          %s553 = smul.addr %s552, 8
          %s554 = scalar_lea.vmem %s2, %s553
        $region92: #{net_forward.1} parent=79 // pred_fallthru
          _
      $region80: #{net_forward.1} parent=5 // pred_fallthru
        _
      %p555 = scmp.le.s32.totalorder 1, %s28
      %p556 = scmp.lt.s32.totalorder %s28, 3
      %p557 = pnand %p555, %p556
      %p558 = pneg %p557
      // Predicated region
      $region93: #{net_forward.1} parent=5 // pred_check
        _
      $region94: #{net_forward.1} parent=5 // pred_check_branch
        %560 = sbr.rel (%p557) target = $region96
      $region95: #{net_forward.1} parent=5 // pred_region
        %s561 = ssub.s32 %s28, 1
        %p562 = scmp.lt.s32.totalorder %s33, 1
        %s563 = scalar_select %p562, %s33, 1
        %s564 = smul.addr %s563, 8
        %s565 = scalar_lea.vmem %s0, %s564
        %p566 = pneg %p54
        %p567 = pneg %p51
        %p568 = scmp.lt.s32.totalorder %s33, 1
        %s569 = scalar_select %p568, %s33, 1
        %s570 = scalar_lea.vmem %s1, %s569
        %p571 = pneg %p80
        %p572 = pneg %p77
        %p573 = scmp.lt.s32.totalorder %s33, 1
        %s574 = scalar_select %p573, %s33, 1
        %s575 = smul.addr %s574, 8
        %s576 = scalar_lea.vmem %s2, %s575
        %p577 = pneg %p106
        %p578 = pneg %p103
        %p579 = pneg %p127
        %p580 = pneg %p124
        %p581 = pneg %p148
        %p582 = pneg %p145
        %p583 = pneg %p169
        %p584 = pneg %p166
        %p585 = pneg %p190
        %p586 = pneg %p187
        %p587 = pneg %p211
        %p588 = pneg %p208
        %p589 = pneg %p232
        %p590 = pneg %p229
        %p591 = pneg %p253
        %p592 = pneg %p250
        %p593 = pneg %p274
        %p594 = pneg %p271
        %p595 = pneg %p295
        %p596 = pneg %p292
        %p597 = pneg %p316
        %p598 = pneg %p313
        %p599 = pneg %p337
        %p600 = pneg %p334
        %p601 = pneg %p358
        %p602 = pneg %p355
        %p603 = pneg %p379
        %p604 = pneg %p376
        %p605 = pneg %p400
        %p606 = pneg %p397
        %p607 = pneg %p421
        %p608 = pneg %p418
        %p609 = pneg %p442
        %p610 = pneg %p439
        %p611 = pneg %p468
        %p612 = pneg %p465
        %s613 = sand.u32 %s455, 1
        %s614 = scalar_lea.sflag [#allocation3], %s613
        %s615 = sand.u32 %s455, 1
        %s616 = scalar_lea.vmem [#allocation2], %s615
        %p617 = scmp.lt.s32.totalorder %s33, 1
        %s618 = scalar_select %p617, %s33, 1
        %s619 = smul.addr %s618, 8
        %s620 = scalar_lea.vmem %s0, %s619
        %p621 = scmp.lt.s32.totalorder %s33, 1
        %s622 = scalar_select %p621, %s33, 1
        %s623 = scalar_lea.vmem %s1, %s622
        %p624 = scmp.lt.s32.totalorder %s33, 1
        %s625 = scalar_select %p624, %s33, 1
        %s626 = smul.addr %s625, 8
        %s627 = scalar_lea.vmem %s2, %s626
        %v628 = vld [vmem:[%s620] sm:$0xff]
        %v629 = vld [vmem:[%s3] sm:$0x1]
        %v630 = vld [vmem:[%s4] sm:$0x1]
        %vm631 = vcmask 130048
        %v632 = vsel %vm631, %v628, 0.0
        %633 = vadd.xlane.f32.xlu0 %v632
        %v634 = vpop.xlane.xlu0 %633
        %v635 = vrcp.pop 16.0
        %v636 = vmul.f32 %v634, %v635
        %v637 = vsub.f32 %v628, %v636
        %v638 = vmul.f32 %v637, %v637
        %v639 = vsel %vm631, %v638, 0.0
        %640 = vadd.xlane.f32.xlu0 %v639
        %v641 = vpop.xlane.xlu0 %640
        %v642 = vmul.f32 %v641, %v635
        %v643 = vadd.f32 %v642, 1e-12
        %v644 = vrsqrt.pop %v643
        %v645 = vmul.f32 %v637, %v644
        %v647 = vlaneseq
        %v648 = vshrl.u32 %v647, 7
        %v649 = vsub.s32 0, %v648
        %v650 = vrot.slane %v629, %v649
        %v652 = vmul.f32 %v645, %v650
        %v654 = vlaneseq
        %v655 = vshrl.u32 %v654, 7
        %v656 = vsub.s32 0, %v655
        %v657 = vrot.slane %v630, %v656
        %v659 = vadd.f32 %v652, %v657
        %v660 = vld [vmem:[%s5] sm:$0xff]
        %v661 = vld [vmem:[%s5 + $0x8] sm:$0xff]
        %v662 = vld [vmem:[%s6] sm:$0x1]
        %v664 = vlaneseq
        %v665 = vshrl.u32 %v664, 7
        %v666 = vsub.s32 0, %v665
        %v667 = vrot.slane %v662, %v666
        %v670 = vsel %vm631, %v659, 0
        %672 = vmatprep.subr.mxu0 0.0
        %673 = vmatpush1.msra.mxu0 0.0
        %674 = vmatprep.subr.mxu0 0.0
        %675 = vmatpush1.msra.mxu0 0.0
        %676 = vmatprep.subr.mxu0 0.0
        %677 = vmatpush1.msra.mxu0 0.0
        %678 = vmatprep.subr.mxu0 0.0
        %679 = vmatpush1.msra.mxu0 0.0
        %680 = vmatprep.subr.mxu0 0.0
        %681 = vmatpush1.msra.mxu0 0.0
        %682 = vmatprep.subr.mxu0 0.0
        %683 = vmatpush1.msra.mxu0 0.0
        %684 = vmatprep.subr.mxu0 0.0
        %685 = vmatpush1.msra.mxu0 0.0
        %686 = vmatprep.subr.mxu0 0.0
        %687 = vmatpush1.msra.mxu0 0.0
        %688 = vmatprep.subr.mxu0 0.0
        %689 = vmatpush1.msra.mxu0 0.0
        %690 = vmatprep.subr.mxu0 0.0
        %691 = vmatpush1.msra.mxu0 0.0
        %692 = vmatprep.subr.mxu0 0.0
        %693 = vmatpush1.msra.mxu0 0.0
        %694 = vmatprep.subr.mxu0 0.0
        %695 = vmatpush1.msra.mxu0 0.0
        %696 = vmatprep.subr.mxu0 0.0
        %697 = vmatpush1.msra.mxu0 0.0
        %698 = vmatprep.subr.mxu0 0.0
        %699 = vmatpush1.msra.mxu0 0.0
        %700 = vmatprep.subr.mxu0 0.0
        %701 = vmatpush1.msra.mxu0 %v661
        %702 = vmatprep.subr.mxu0 0.0
        %703 = vmatpush1.msra.mxu0 %v660
        %704 = vmatprep.subr.mxu0 0.0
        %705 = vmatpush2.msra.mxu0 0.0
        %706 = vmatprep.subr.mxu0 0.0
        %707 = vmatpush2.msra.mxu0 0.0
        %708 = vmatprep.subr.mxu0 0.0
        %709 = vmatpush2.msra.mxu0 0.0
        %710 = vmatprep.subr.mxu0 0.0
        %711 = vmatpush2.msra.mxu0 0.0
        %712 = vmatprep.subr.mxu0 0.0
        %713 = vmatpush2.msra.mxu0 0.0
        %714 = vmatprep.subr.mxu0 0.0
        %715 = vmatpush2.msra.mxu0 0.0
        %716 = vmatprep.subr.mxu0 0.0
        %717 = vmatpush2.msra.mxu0 0.0
        %718 = vmatprep.subr.mxu0 0.0
        %719 = vmatpush2.msra.mxu0 0.0
        %720 = vmatprep.subr.mxu0 0.0
        %721 = vmatpush2.msra.mxu0 0.0
        %722 = vmatprep.subr.mxu0 0.0
        %723 = vmatpush2.msra.mxu0 0.0
        %724 = vmatprep.subr.mxu0 0.0
        %725 = vmatpush2.msra.mxu0 0.0
        %726 = vmatprep.subr.mxu0 0.0
        %727 = vmatpush2.msra.mxu0 0.0
        %728 = vmatprep.subr.mxu0 0.0
        %729 = vmatpush2.msra.mxu0 0.0
        %730 = vmatprep.subr.mxu0 0.0
        %731 = vmatpush2.msra.mxu0 0.0
        %732 = vmatprep.subr.mxu0 0.0
        %733 = vmatpush2.msra.mxu0 0.0
        %734 = vmatprep.subr.mxu0 0.0
        %735 = vmatpush2.msra.mxu0 0.0
        %736 = vmatprep.mubr.f32.mxu0 0.0
        %737 = vmatmul.mubr.f32.gmra.mxu0 %v670
        %v738 = vpop.f32.mrf.mxu0
        %v739 = vadd.f32 %v667, %v738
        %v740 = vpop.f32.mrf.mxu0
        %741 = vdwg.mxu0
        %v742 = vld [vmem:[%s623] sm:$0x1]
        %v743 = vsub.f32 1.0, %v742
        %v744 = vmul.f32 %v743, -1e+09
        %v745 = vld [vmem:[%s7] sm:$0xff]
        %v746 = vld [vmem:[%s7 + $0x8] sm:$0xff]
        %v747 = vld [vmem:[%s7 + $0x10] sm:$0xff]
        %v748 = vld [vmem:[%s7 + $0x18] sm:$0xff]
        %v749 = vld [vmem:[%s8] sm:$0x1]
        %v750 = vld [vmem:[%s10] sm:$0x1]
        %v751 = vld [vmem:[%s11] sm:$0x1]
        %v752 = vld [vmem:[%s12] sm:$0x1]
        %v753 = vld [vmem:[%s13] sm:$0xff]
        %v754 = vld [vmem:[%s13 + $0x8] sm:$0xff]
        %v755 = vld [vmem:[%s13 + $0x10] sm:$0xff]
        %v756 = vld [vmem:[%s13 + $0x18] sm:$0xff]
        %v757 = vld [vmem:[%s14] sm:$0x1]
        %v758 = vld [vmem:[%s15] sm:$0xff]
        %v759 = vld [vmem:[%s15 + $0x8] sm:$0xff]
        %v760 = vld [vmem:[%s15 + $0x10] sm:$0xff]
        %v761 = vld [vmem:[%s15 + $0x18] sm:$0xff]
        %v762 = vld [vmem:[%s15 + $0x20] sm:$0xff]
        %v763 = vld [vmem:[%s15 + $0x28] sm:$0xff]
        %v764 = vld [vmem:[%s15 + $0x30] sm:$0xff]
        %v765 = vld [vmem:[%s15 + $0x38] sm:$0xff]
        %v766 = vld [vmem:[%s16] sm:$0x1]
        %v767 = vld [vmem:[%s17] sm:$0x1]
        %v768 = vld [vmem:[%s18] sm:$0x1]
        %v770 = vlaneseq
        %v771 = vshrl.u32 %v770, 7
        %v772 = vsub.s32 0, %v771
        %v773 = vrot.slane %v749, %v772
        %vm775 = vcmask 261120
        %v777 = vsel %vm775, %v739, 0
        %779 = vmatprep.subr.mxu0 0.0
        %780 = vmatpush1.msra.mxu0 0.0
        %781 = vmatprep.subr.mxu0 0.0
        %782 = vmatpush1.msra.mxu0 0.0
        %783 = vmatprep.subr.mxu0 0.0
        %784 = vmatpush1.msra.mxu0 0.0
        %785 = vmatprep.subr.mxu0 0.0
        %786 = vmatpush1.msra.mxu0 0.0
        %787 = vmatprep.subr.mxu0 0.0
        %788 = vmatpush1.msra.mxu0 0.0
        %789 = vmatprep.subr.mxu0 0.0
        %790 = vmatpush1.msra.mxu0 0.0
        %791 = vmatprep.subr.mxu0 0.0
        %792 = vmatpush1.msra.mxu0 0.0
        %793 = vmatprep.subr.mxu0 0.0
        %794 = vmatpush1.msra.mxu0 0.0
        %795 = vmatprep.subr.mxu0 0.0
        %796 = vmatpush1.msra.mxu0 0.0
        %797 = vmatprep.subr.mxu0 0.0
        %798 = vmatpush1.msra.mxu0 0.0
        %799 = vmatprep.subr.mxu0 0.0
        %800 = vmatpush1.msra.mxu0 0.0
        %801 = vmatprep.subr.mxu0 0.0
        %802 = vmatpush1.msra.mxu0 0.0
        %803 = vmatprep.subr.mxu0 0.0
        %804 = vmatpush1.msra.mxu0 %v748
        %805 = vmatprep.subr.mxu0 0.0
        %806 = vmatpush1.msra.mxu0 %v747
        %807 = vmatprep.subr.mxu0 0.0
        %808 = vmatpush1.msra.mxu0 %v746
        %809 = vmatprep.subr.mxu0 0.0
        %810 = vmatpush1.msra.mxu0 %v745
        %811 = vmatprep.subr.mxu0 0.0
        %812 = vmatpush2.msra.mxu0 0.0
        %813 = vmatprep.subr.mxu0 0.0
        %814 = vmatpush2.msra.mxu0 0.0
        %815 = vmatprep.subr.mxu0 0.0
        %816 = vmatpush2.msra.mxu0 0.0
        %817 = vmatprep.subr.mxu0 0.0
        %818 = vmatpush2.msra.mxu0 0.0
        %819 = vmatprep.subr.mxu0 0.0
        %820 = vmatpush2.msra.mxu0 0.0
        %821 = vmatprep.subr.mxu0 0.0
        %822 = vmatpush2.msra.mxu0 0.0
        %823 = vmatprep.subr.mxu0 0.0
        %824 = vmatpush2.msra.mxu0 0.0
        %825 = vmatprep.subr.mxu0 0.0
        %826 = vmatpush2.msra.mxu0 0.0
        %827 = vmatprep.subr.mxu0 0.0
        %828 = vmatpush2.msra.mxu0 0.0
        %829 = vmatprep.subr.mxu0 0.0
        %830 = vmatpush2.msra.mxu0 0.0
        %831 = vmatprep.subr.mxu0 0.0
        %832 = vmatpush2.msra.mxu0 0.0
        %833 = vmatprep.subr.mxu0 0.0
        %834 = vmatpush2.msra.mxu0 0.0
        %835 = vmatprep.subr.mxu0 0.0
        %836 = vmatpush2.msra.mxu0 0.0
        %837 = vmatprep.subr.mxu0 0.0
        %838 = vmatpush2.msra.mxu0 0.0
        %839 = vmatprep.subr.mxu0 0.0
        %840 = vmatpush2.msra.mxu0 0.0
        %841 = vmatprep.subr.mxu0 0.0
        %842 = vmatpush2.msra.mxu0 0.0
        %843 = vmatprep.mubr.f32.mxu0 0.0
        %844 = vmatmul.mubr.f32.gmra.mxu0 %v777
        %v845 = vpop.f32.mrf.mxu0
        %v846 = vadd.f32 %v773, %v845
        %v847 = vpop.f32.mrf.mxu0
        %848 = vdwg.mxu0
        %850 = vrot.lane.b32.xlu0 %v846, 96
        %v851 = vpop.permute.xlu0 %850
        %vm852 = vcmask 64512
        %v853 = vsel %vm852, %v846, 0
        %v855 = vsel %vm852, %v851, 0
        %857 = vmatprep.subr.mxu0 0.0
        %858 = vmatpush1.xpose.msra.mxu0 0.0
        %859 = vmatprep.subr.mxu0 0.0
        %860 = vmatpush1.xpose.msra.mxu0 0.0
        %861 = vmatprep.subr.mxu0 0.0
        %862 = vmatpush1.xpose.msra.mxu0 0.0
        %863 = vmatprep.subr.mxu0 0.0
        %864 = vmatpush1.xpose.msra.mxu0 0.0
        %865 = vmatprep.subr.mxu0 0.0
        %866 = vmatpush1.xpose.msra.mxu0 0.0
        %867 = vmatprep.subr.mxu0 0.0
        %868 = vmatpush1.xpose.msra.mxu0 0.0
        %869 = vmatprep.subr.mxu0 0.0
        %870 = vmatpush1.xpose.msra.mxu0 0.0
        %871 = vmatprep.subr.mxu0 0.0
        %872 = vmatpush1.xpose.msra.mxu0 0.0
        %873 = vmatprep.subr.mxu0 0.0
        %874 = vmatpush1.xpose.msra.mxu0 0.0
        %875 = vmatprep.subr.mxu0 0.0
        %876 = vmatpush1.xpose.msra.mxu0 0.0
        %877 = vmatprep.subr.mxu0 0.0
        %878 = vmatpush1.xpose.msra.mxu0 0.0
        %879 = vmatprep.subr.mxu0 0.0
        %880 = vmatpush1.xpose.msra.mxu0 0.0
        %881 = vmatprep.subr.mxu0 0.0
        %882 = vmatpush1.xpose.msra.mxu0 0.0
        %883 = vmatprep.subr.mxu0 0.0
        %884 = vmatpush1.xpose.msra.mxu0 0.0
        %885 = vmatprep.subr.mxu0 0.0
        %886 = vmatpush1.xpose.msra.mxu0 0.0
        %887 = vmatprep.subr.mxu0 0.0
        %888 = vmatpush1.xpose.msra.mxu0 %v855
        %889 = vmatprep.subr.mxu0 0.0
        %890 = vmatpush2.xpose.msra.mxu0 0.0
        %891 = vmatprep.subr.mxu0 0.0
        %892 = vmatpush2.xpose.msra.mxu0 0.0
        %893 = vmatprep.subr.mxu0 0.0
        %894 = vmatpush2.xpose.msra.mxu0 0.0
        %895 = vmatprep.subr.mxu0 0.0
        %896 = vmatpush2.xpose.msra.mxu0 0.0
        %897 = vmatprep.subr.mxu0 0.0
        %898 = vmatpush2.xpose.msra.mxu0 0.0
        %899 = vmatprep.subr.mxu0 0.0
        %900 = vmatpush2.xpose.msra.mxu0 0.0
        %901 = vmatprep.subr.mxu0 0.0
        %902 = vmatpush2.xpose.msra.mxu0 0.0
        %903 = vmatprep.subr.mxu0 0.0
        %904 = vmatpush2.xpose.msra.mxu0 0.0
        %905 = vmatprep.subr.mxu0 0.0
        %906 = vmatpush2.xpose.msra.mxu0 0.0
        %907 = vmatprep.subr.mxu0 0.0
        %908 = vmatpush2.xpose.msra.mxu0 0.0
        %909 = vmatprep.subr.mxu0 0.0
        %910 = vmatpush2.xpose.msra.mxu0 0.0
        %911 = vmatprep.subr.mxu0 0.0
        %912 = vmatpush2.xpose.msra.mxu0 0.0
        %913 = vmatprep.subr.mxu0 0.0
        %914 = vmatpush2.xpose.msra.mxu0 0.0
        %915 = vmatprep.subr.mxu0 0.0
        %916 = vmatpush2.xpose.msra.mxu0 0.0
        %917 = vmatprep.subr.mxu0 0.0
        %918 = vmatpush2.xpose.msra.mxu0 0.0
        %919 = vmatprep.subr.mxu0 0.0
        %920 = vmatpush2.xpose.msra.mxu0 0.0
        %921 = vmatprep.mubr.f32.mxu0 0.0
        %922 = vmatmul.mubr.f32.gmra.mxu0 %v853
        %v923 = vpop.f32.mrf.mxu0
        %v924 = vadd.f32 0.0, %v923
        %v925 = vpop.f32.mrf.mxu0
        %926 = vdwg.mxu0
        %v927 = vmul.f32 %v924, 0.35355338
        %v929 = vlaneseq
        %v930 = vshrl.u32 %v929, 7
        %v931 = vsub.s32 0, %v930
        %v932 = vrot.slane %v744, %v931
        %v934 = vadd.f32 %v927, %v932
        %v935 = vsel %vm852, %v934, -inf
        %936 = vmax.xlane.f32.xlu0 %v935
        %v937 = vpop.xlane.xlu0 %936
        %v938 = vsub.f32 %v934, %v937
        %v939 = vmul.f32 %v938, 1.442695
        %v940 = vpow.pop %v939
        %v941 = vsel %vm852, %v940, 0.0
        %942 = vadd.xlane.f32.xlu0 %v941
        %v943 = vpop.xlane.xlu0 %942
        %v944 = vrcp.pop %v943
        %v945 = vmul.f32 %v940, %v944
        %946 = vrot.lane.b32.xlu0 %v846, 64
        %v947 = vpop.permute.xlu0 %946
        %v950 = vsel %vm852, %v945, 0
        %952 = vmatprep.subr.mxu0 0.0
        %953 = vmatpush1.msra.mxu0 0.0
        %954 = vmatprep.subr.mxu0 0.0
        %955 = vmatpush1.msra.mxu0 0.0
        %956 = vmatprep.subr.mxu0 0.0
        %957 = vmatpush1.msra.mxu0 0.0
        %958 = vmatprep.subr.mxu0 0.0
        %959 = vmatpush1.msra.mxu0 0.0
        %960 = vmatprep.subr.mxu0 0.0
        %961 = vmatpush1.msra.mxu0 0.0
        %962 = vmatprep.subr.mxu0 0.0
        %963 = vmatpush1.msra.mxu0 0.0
        %964 = vmatprep.subr.mxu0 0.0
        %965 = vmatpush1.msra.mxu0 0.0
        %966 = vmatprep.subr.mxu0 0.0
        %967 = vmatpush1.msra.mxu0 0.0
        %968 = vmatprep.subr.mxu0 0.0
        %969 = vmatpush1.msra.mxu0 0.0
        %970 = vmatprep.subr.mxu0 0.0
        %971 = vmatpush1.msra.mxu0 0.0
        %972 = vmatprep.subr.mxu0 0.0
        %973 = vmatpush1.msra.mxu0 0.0
        %974 = vmatprep.subr.mxu0 0.0
        %975 = vmatpush1.msra.mxu0 0.0
        %976 = vmatprep.subr.mxu0 0.0
        %977 = vmatpush1.msra.mxu0 0.0
        %978 = vmatprep.subr.mxu0 0.0
        %979 = vmatpush1.msra.mxu0 0.0
        %980 = vmatprep.subr.mxu0 0.0
        %981 = vmatpush1.msra.mxu0 0.0
        %982 = vmatprep.subr.mxu0 0.0
        %983 = vmatpush1.msra.mxu0 %v947
        %984 = vmatprep.subr.mxu0 0.0
        %985 = vmatpush2.msra.mxu0 0.0
        %986 = vmatprep.subr.mxu0 0.0
        %987 = vmatpush2.msra.mxu0 0.0
        %988 = vmatprep.subr.mxu0 0.0
        %989 = vmatpush2.msra.mxu0 0.0
        %990 = vmatprep.subr.mxu0 0.0
        %991 = vmatpush2.msra.mxu0 0.0
        %992 = vmatprep.subr.mxu0 0.0
        %993 = vmatpush2.msra.mxu0 0.0
        %994 = vmatprep.subr.mxu0 0.0
        %995 = vmatpush2.msra.mxu0 0.0
        %996 = vmatprep.subr.mxu0 0.0
        %997 = vmatpush2.msra.mxu0 0.0
        %998 = vmatprep.subr.mxu0 0.0
        %999 = vmatpush2.msra.mxu0 0.0
        %1000 = vmatprep.subr.mxu0 0.0
        %1001 = vmatpush2.msra.mxu0 0.0
        %1002 = vmatprep.subr.mxu0 0.0
        %1003 = vmatpush2.msra.mxu0 0.0
        %1004 = vmatprep.subr.mxu0 0.0
        %1005 = vmatpush2.msra.mxu0 0.0
        %1006 = vmatprep.subr.mxu0 0.0
        %1007 = vmatpush2.msra.mxu0 0.0
        %1008 = vmatprep.subr.mxu0 0.0
        %1009 = vmatpush2.msra.mxu0 0.0
        %1010 = vmatprep.subr.mxu0 0.0
        %1011 = vmatpush2.msra.mxu0 0.0
        %1012 = vmatprep.subr.mxu0 0.0
        %1013 = vmatpush2.msra.mxu0 0.0
        %1014 = vmatprep.subr.mxu0 0.0
        %1015 = vmatpush2.msra.mxu0 0.0
        %1016 = vmatprep.mubr.f32.mxu0 0.0
        %1017 = vmatmul.mubr.f32.gmra.mxu0 %v950
        %v1018 = vpop.f32.mrf.mxu0
        %v1019 = vadd.f32 0.0, %v1018
        %v1020 = vpop.f32.mrf.mxu0
        %1021 = vdwg.mxu0
        %v1022 = vld [vmem:[%s9] sm:$0xff]
        %v1024 = vsel %vm852, %v1019, 0
        %1026 = vmatprep.subr.mxu0 0.0
        %1027 = vmatpush1.msra.mxu0 0.0
        %1028 = vmatprep.subr.mxu0 0.0
        %1029 = vmatpush1.msra.mxu0 0.0
        %1030 = vmatprep.subr.mxu0 0.0
        %1031 = vmatpush1.msra.mxu0 0.0
        %1032 = vmatprep.subr.mxu0 0.0
        %1033 = vmatpush1.msra.mxu0 0.0
        %1034 = vmatprep.subr.mxu0 0.0
        %1035 = vmatpush1.msra.mxu0 0.0
        %1036 = vmatprep.subr.mxu0 0.0
        %1037 = vmatpush1.msra.mxu0 0.0
        %1038 = vmatprep.subr.mxu0 0.0
        %1039 = vmatpush1.msra.mxu0 0.0
        %1040 = vmatprep.subr.mxu0 0.0
        %1041 = vmatpush1.msra.mxu0 0.0
        %1042 = vmatprep.subr.mxu0 0.0
        %1043 = vmatpush1.msra.mxu0 0.0
        %1044 = vmatprep.subr.mxu0 0.0
        %1045 = vmatpush1.msra.mxu0 0.0
        %1046 = vmatprep.subr.mxu0 0.0
        %1047 = vmatpush1.msra.mxu0 0.0
        %1048 = vmatprep.subr.mxu0 0.0
        %1049 = vmatpush1.msra.mxu0 0.0
        %1050 = vmatprep.subr.mxu0 0.0
        %1051 = vmatpush1.msra.mxu0 0.0
        %1052 = vmatprep.subr.mxu0 0.0
        %1053 = vmatpush1.msra.mxu0 0.0
        %1054 = vmatprep.subr.mxu0 0.0
        %1055 = vmatpush1.msra.mxu0 0.0
        %1056 = vmatprep.subr.mxu0 0.0
        %1057 = vmatpush1.msra.mxu0 %v1022
        %1058 = vmatprep.subr.mxu0 0.0
        %1059 = vmatpush2.msra.mxu0 0.0
        %1060 = vmatprep.subr.mxu0 0.0
        %1061 = vmatpush2.msra.mxu0 0.0
        %1062 = vmatprep.subr.mxu0 0.0
        %1063 = vmatpush2.msra.mxu0 0.0
        %1064 = vmatprep.subr.mxu0 0.0
        %1065 = vmatpush2.msra.mxu0 0.0
        %1066 = vmatprep.subr.mxu0 0.0
        %1067 = vmatpush2.msra.mxu0 0.0
        %1068 = vmatprep.subr.mxu0 0.0
        %1069 = vmatpush2.msra.mxu0 0.0
        %1070 = vmatprep.subr.mxu0 0.0
        %1071 = vmatpush2.msra.mxu0 0.0
        %1072 = vmatprep.subr.mxu0 0.0
        %1073 = vmatpush2.msra.mxu0 0.0
        %1074 = vmatprep.subr.mxu0 0.0
        %1075 = vmatpush2.msra.mxu0 0.0
        %1076 = vmatprep.subr.mxu0 0.0
        %1077 = vmatpush2.msra.mxu0 0.0
        %1078 = vmatprep.subr.mxu0 0.0
        %1079 = vmatpush2.msra.mxu0 0.0
        %1080 = vmatprep.subr.mxu0 0.0
        %1081 = vmatpush2.msra.mxu0 0.0
        %1082 = vmatprep.subr.mxu0 0.0
        %1083 = vmatpush2.msra.mxu0 0.0
        %1084 = vmatprep.subr.mxu0 0.0
        %1085 = vmatpush2.msra.mxu0 0.0
        %1086 = vmatprep.subr.mxu0 0.0
        %1087 = vmatpush2.msra.mxu0 0.0
        %1088 = vmatprep.subr.mxu0 0.0
        %1089 = vmatpush2.msra.mxu0 0.0
        %1090 = vmatprep.mubr.f32.mxu0 0.0
        %1091 = vmatmul.mubr.f32.gmra.mxu0 %v1024
        %v1092 = vpop.f32.mrf.mxu0
        %v1093 = vadd.f32 0.0, %v1092
        %v1094 = vpop.f32.mrf.mxu0
        %1095 = vdwg.mxu0
        %v1097 = vlaneseq
        %v1098 = vshrl.u32 %v1097, 7
        %v1099 = vsub.s32 0, %v1098
        %v1100 = vrot.slane %v750, %v1099
        %v1102 = vadd.f32 %v1100, %v1093
        %1103 = vrot.lane.b32.xlu0 %v846, 120
        %v1104 = vpop.permute.xlu0 %1103
        %1105 = vrot.lane.b32.xlu0 %v846, 88
        %v1106 = vpop.permute.xlu0 %1105
        %v1107 = vsel %vm852, %v1104, 0
        %v1109 = vsel %vm852, %v1106, 0
        %1111 = vmatprep.subr.mxu0 0.0
        %1112 = vmatpush1.xpose.msra.mxu0 0.0
        %1113 = vmatprep.subr.mxu0 0.0
        %1114 = vmatpush1.xpose.msra.mxu0 0.0
        %1115 = vmatprep.subr.mxu0 0.0
        %1116 = vmatpush1.xpose.msra.mxu0 0.0
        %1117 = vmatprep.subr.mxu0 0.0
        %1118 = vmatpush1.xpose.msra.mxu0 0.0
        %1119 = vmatprep.subr.mxu0 0.0
        %1120 = vmatpush1.xpose.msra.mxu0 0.0
        %1121 = vmatprep.subr.mxu0 0.0
        %1122 = vmatpush1.xpose.msra.mxu0 0.0
        %1123 = vmatprep.subr.mxu0 0.0
        %1124 = vmatpush1.xpose.msra.mxu0 0.0
        %1125 = vmatprep.subr.mxu0 0.0
        %1126 = vmatpush1.xpose.msra.mxu0 0.0
        %1127 = vmatprep.subr.mxu0 0.0
        %1128 = vmatpush1.xpose.msra.mxu0 0.0
        %1129 = vmatprep.subr.mxu0 0.0
        %1130 = vmatpush1.xpose.msra.mxu0 0.0
        %1131 = vmatprep.subr.mxu0 0.0
        %1132 = vmatpush1.xpose.msra.mxu0 0.0
        %1133 = vmatprep.subr.mxu0 0.0
        %1134 = vmatpush1.xpose.msra.mxu0 0.0
        %1135 = vmatprep.subr.mxu0 0.0
        %1136 = vmatpush1.xpose.msra.mxu0 0.0
        %1137 = vmatprep.subr.mxu0 0.0
        %1138 = vmatpush1.xpose.msra.mxu0 0.0
        %1139 = vmatprep.subr.mxu0 0.0
        %1140 = vmatpush1.xpose.msra.mxu0 0.0
        %1141 = vmatprep.subr.mxu0 0.0
        %1142 = vmatpush1.xpose.msra.mxu0 %v1109
        %1143 = vmatprep.subr.mxu0 0.0
        %1144 = vmatpush2.xpose.msra.mxu0 0.0
        %1145 = vmatprep.subr.mxu0 0.0
        %1146 = vmatpush2.xpose.msra.mxu0 0.0
        %1147 = vmatprep.subr.mxu0 0.0
        %1148 = vmatpush2.xpose.msra.mxu0 0.0
        %1149 = vmatprep.subr.mxu0 0.0
        %1150 = vmatpush2.xpose.msra.mxu0 0.0
        %1151 = vmatprep.subr.mxu0 0.0
        %1152 = vmatpush2.xpose.msra.mxu0 0.0
        %1153 = vmatprep.subr.mxu0 0.0
        %1154 = vmatpush2.xpose.msra.mxu0 0.0
        %1155 = vmatprep.subr.mxu0 0.0
        %1156 = vmatpush2.xpose.msra.mxu0 0.0
        %1157 = vmatprep.subr.mxu0 0.0
        %1158 = vmatpush2.xpose.msra.mxu0 0.0
        %1159 = vmatprep.subr.mxu0 0.0
        %1160 = vmatpush2.xpose.msra.mxu0 0.0
        %1161 = vmatprep.subr.mxu0 0.0
        %1162 = vmatpush2.xpose.msra.mxu0 0.0
        %1163 = vmatprep.subr.mxu0 0.0
        %1164 = vmatpush2.xpose.msra.mxu0 0.0
        %1165 = vmatprep.subr.mxu0 0.0
        %1166 = vmatpush2.xpose.msra.mxu0 0.0
        %1167 = vmatprep.subr.mxu0 0.0
        %1168 = vmatpush2.xpose.msra.mxu0 0.0
        %1169 = vmatprep.subr.mxu0 0.0
        %1170 = vmatpush2.xpose.msra.mxu0 0.0
        %1171 = vmatprep.subr.mxu0 0.0
        %1172 = vmatpush2.xpose.msra.mxu0 0.0
        %1173 = vmatprep.subr.mxu0 0.0
        %1174 = vmatpush2.xpose.msra.mxu0 0.0
        %1175 = vmatprep.mubr.f32.mxu0 0.0
        %1176 = vmatmul.mubr.f32.gmra.mxu0 %v1107
        %v1177 = vpop.f32.mrf.mxu0
        %v1178 = vadd.f32 0.0, %v1177
        %v1179 = vpop.f32.mrf.mxu0
        %1180 = vdwg.mxu0
        %v1181 = vmul.f32 %v1178, 0.35355338
        %v1182 = vadd.f32 %v1181, %v932
        %v1183 = vsel %vm852, %v1182, -inf
        %1184 = vmax.xlane.f32.xlu0 %v1183
        %v1185 = vpop.xlane.xlu0 %1184
        %v1186 = vsub.f32 %v1182, %v1185
        %v1187 = vmul.f32 %v1186, 1.442695
        %v1188 = vpow.pop %v1187
        %v1189 = vsel %vm852, %v1188, 0.0
        %1190 = vadd.xlane.f32.xlu0 %v1189
        %v1191 = vpop.xlane.xlu0 %1190
        %v1192 = vrcp.pop %v1191
        %v1193 = vmul.f32 %v1188, %v1192
        %1194 = vrot.lane.b32.xlu0 %v846, 56
        %v1195 = vpop.permute.xlu0 %1194
        %v1198 = vsel %vm852, %v1193, 0
        %1200 = vmatprep.subr.mxu0 0.0
        %1201 = vmatpush1.msra.mxu0 0.0
        %1202 = vmatprep.subr.mxu0 0.0
        %1203 = vmatpush1.msra.mxu0 0.0
        %1204 = vmatprep.subr.mxu0 0.0
        %1205 = vmatpush1.msra.mxu0 0.0
        %1206 = vmatprep.subr.mxu0 0.0
        %1207 = vmatpush1.msra.mxu0 0.0
        %1208 = vmatprep.subr.mxu0 0.0
        %1209 = vmatpush1.msra.mxu0 0.0
        %1210 = vmatprep.subr.mxu0 0.0
        %1211 = vmatpush1.msra.mxu0 0.0
        %1212 = vmatprep.subr.mxu0 0.0
        %1213 = vmatpush1.msra.mxu0 0.0
        %1214 = vmatprep.subr.mxu0 0.0
        %1215 = vmatpush1.msra.mxu0 0.0
        %1216 = vmatprep.subr.mxu0 0.0
        %1217 = vmatpush1.msra.mxu0 0.0
        %1218 = vmatprep.subr.mxu0 0.0
        %1219 = vmatpush1.msra.mxu0 0.0
        %1220 = vmatprep.subr.mxu0 0.0
        %1221 = vmatpush1.msra.mxu0 0.0
        %1222 = vmatprep.subr.mxu0 0.0
        %1223 = vmatpush1.msra.mxu0 0.0
        %1224 = vmatprep.subr.mxu0 0.0
        %1225 = vmatpush1.msra.mxu0 0.0
        %1226 = vmatprep.subr.mxu0 0.0
        %1227 = vmatpush1.msra.mxu0 0.0
        %1228 = vmatprep.subr.mxu0 0.0
        %1229 = vmatpush1.msra.mxu0 0.0
        %1230 = vmatprep.subr.mxu0 0.0
        %1231 = vmatpush1.msra.mxu0 %v1195
        %1232 = vmatprep.subr.mxu0 0.0
        %1233 = vmatpush2.msra.mxu0 0.0
        %1234 = vmatprep.subr.mxu0 0.0
        %1235 = vmatpush2.msra.mxu0 0.0
        %1236 = vmatprep.subr.mxu0 0.0
        %1237 = vmatpush2.msra.mxu0 0.0
        %1238 = vmatprep.subr.mxu0 0.0
        %1239 = vmatpush2.msra.mxu0 0.0
        %1240 = vmatprep.subr.mxu0 0.0
        %1241 = vmatpush2.msra.mxu0 0.0
        %1242 = vmatprep.subr.mxu0 0.0
        %1243 = vmatpush2.msra.mxu0 0.0
        %1244 = vmatprep.subr.mxu0 0.0
        %1245 = vmatpush2.msra.mxu0 0.0
        %1246 = vmatprep.subr.mxu0 0.0
        %1247 = vmatpush2.msra.mxu0 0.0
        %1248 = vmatprep.subr.mxu0 0.0
        %1249 = vmatpush2.msra.mxu0 0.0
        %1250 = vmatprep.subr.mxu0 0.0
        %1251 = vmatpush2.msra.mxu0 0.0
        %1252 = vmatprep.subr.mxu0 0.0
        %1253 = vmatpush2.msra.mxu0 0.0
        %1254 = vmatprep.subr.mxu0 0.0
        %1255 = vmatpush2.msra.mxu0 0.0
        %1256 = vmatprep.subr.mxu0 0.0
        %1257 = vmatpush2.msra.mxu0 0.0
        %1258 = vmatprep.subr.mxu0 0.0
        %1259 = vmatpush2.msra.mxu0 0.0
        %1260 = vmatprep.subr.mxu0 0.0
        %1261 = vmatpush2.msra.mxu0 0.0
        %1262 = vmatprep.subr.mxu0 0.0
        %1263 = vmatpush2.msra.mxu0 0.0
        %1264 = vmatprep.mubr.f32.mxu0 0.0
        %1265 = vmatmul.mubr.f32.gmra.mxu0 %v1198
        %v1266 = vpop.f32.mrf.mxu0
        %v1267 = vadd.f32 0.0, %v1266
        %v1268 = vpop.f32.mrf.mxu0
        %1269 = vdwg.mxu0
        %v1270 = vld [vmem:[%s9 + $0x8] sm:$0xff]
        %v1272 = vsel %vm852, %v1267, 0
        %1274 = vmatprep.subr.mxu0 0.0
        %1275 = vmatpush1.msra.mxu0 0.0
        %1276 = vmatprep.subr.mxu0 0.0
        %1277 = vmatpush1.msra.mxu0 0.0
        %1278 = vmatprep.subr.mxu0 0.0
        %1279 = vmatpush1.msra.mxu0 0.0
        %1280 = vmatprep.subr.mxu0 0.0
        %1281 = vmatpush1.msra.mxu0 0.0
        %1282 = vmatprep.subr.mxu0 0.0
        %1283 = vmatpush1.msra.mxu0 0.0
        %1284 = vmatprep.subr.mxu0 0.0
        %1285 = vmatpush1.msra.mxu0 0.0
        %1286 = vmatprep.subr.mxu0 0.0
        %1287 = vmatpush1.msra.mxu0 0.0
        %1288 = vmatprep.subr.mxu0 0.0
        %1289 = vmatpush1.msra.mxu0 0.0
        %1290 = vmatprep.subr.mxu0 0.0
        %1291 = vmatpush1.msra.mxu0 0.0
        %1292 = vmatprep.subr.mxu0 0.0
        %1293 = vmatpush1.msra.mxu0 0.0
        %1294 = vmatprep.subr.mxu0 0.0
        %1295 = vmatpush1.msra.mxu0 0.0
        %1296 = vmatprep.subr.mxu0 0.0
        %1297 = vmatpush1.msra.mxu0 0.0
        %1298 = vmatprep.subr.mxu0 0.0
        %1299 = vmatpush1.msra.mxu0 0.0
        %1300 = vmatprep.subr.mxu0 0.0
        %1301 = vmatpush1.msra.mxu0 0.0
        %1302 = vmatprep.subr.mxu0 0.0
        %1303 = vmatpush1.msra.mxu0 0.0
        %1304 = vmatprep.subr.mxu0 0.0
        %1305 = vmatpush1.msra.mxu0 %v1270
        %1306 = vmatprep.subr.mxu0 0.0
        %1307 = vmatpush2.msra.mxu0 0.0
        %1308 = vmatprep.subr.mxu0 0.0
        %1309 = vmatpush2.msra.mxu0 0.0
        %1310 = vmatprep.subr.mxu0 0.0
        %1311 = vmatpush2.msra.mxu0 0.0
        %1312 = vmatprep.subr.mxu0 0.0
        %1313 = vmatpush2.msra.mxu0 0.0
        %1314 = vmatprep.subr.mxu0 0.0
        %1315 = vmatpush2.msra.mxu0 0.0
        %1316 = vmatprep.subr.mxu0 0.0
        %1317 = vmatpush2.msra.mxu0 0.0
        %1318 = vmatprep.subr.mxu0 0.0
        %1319 = vmatpush2.msra.mxu0 0.0
        %1320 = vmatprep.subr.mxu0 0.0
        %1321 = vmatpush2.msra.mxu0 0.0
        %1322 = vmatprep.subr.mxu0 0.0
        %1323 = vmatpush2.msra.mxu0 0.0
        %1324 = vmatprep.subr.mxu0 0.0
        %1325 = vmatpush2.msra.mxu0 0.0
        %1326 = vmatprep.subr.mxu0 0.0
        %1327 = vmatpush2.msra.mxu0 0.0
        %1328 = vmatprep.subr.mxu0 0.0
        %1329 = vmatpush2.msra.mxu0 0.0
        %1330 = vmatprep.subr.mxu0 0.0
        %1331 = vmatpush2.msra.mxu0 0.0
        %1332 = vmatprep.subr.mxu0 0.0
        %1333 = vmatpush2.msra.mxu0 0.0
        %1334 = vmatprep.subr.mxu0 0.0
        %1335 = vmatpush2.msra.mxu0 0.0
        %1336 = vmatprep.subr.mxu0 0.0
        %1337 = vmatpush2.msra.mxu0 0.0
        %1338 = vmatprep.mubr.f32.mxu0 0.0
        %1339 = vmatmul.mubr.f32.gmra.mxu0 %v1272
        %v1340 = vpop.f32.mrf.mxu0
        %v1341 = vadd.f32 0.0, %v1340
        %v1342 = vpop.f32.mrf.mxu0
        %1343 = vdwg.mxu0
        %v1344 = vadd.f32 %v1102, %v1341
        %1345 = vrot.lane.b32.xlu0 %v846, 112
        %v1346 = vpop.permute.xlu0 %1345
        %1347 = vrot.lane.b32.xlu0 %v846, 80
        %v1348 = vpop.permute.xlu0 %1347
        %v1349 = vsel %vm852, %v1346, 0
        %v1351 = vsel %vm852, %v1348, 0
        %1353 = vmatprep.subr.mxu0 0.0
        %1354 = vmatpush1.xpose.msra.mxu0 0.0
        %1355 = vmatprep.subr.mxu0 0.0
        %1356 = vmatpush1.xpose.msra.mxu0 0.0
        %1357 = vmatprep.subr.mxu0 0.0
        %1358 = vmatpush1.xpose.msra.mxu0 0.0
        %1359 = vmatprep.subr.mxu0 0.0
        %1360 = vmatpush1.xpose.msra.mxu0 0.0
        %1361 = vmatprep.subr.mxu0 0.0
        %1362 = vmatpush1.xpose.msra.mxu0 0.0
        %1363 = vmatprep.subr.mxu0 0.0
        %1364 = vmatpush1.xpose.msra.mxu0 0.0
        %1365 = vmatprep.subr.mxu0 0.0
        %1366 = vmatpush1.xpose.msra.mxu0 0.0
        %1367 = vmatprep.subr.mxu0 0.0
        %1368 = vmatpush1.xpose.msra.mxu0 0.0
        %1369 = vmatprep.subr.mxu0 0.0
        %1370 = vmatpush1.xpose.msra.mxu0 0.0
        %1371 = vmatprep.subr.mxu0 0.0
        %1372 = vmatpush1.xpose.msra.mxu0 0.0
        %1373 = vmatprep.subr.mxu0 0.0
        %1374 = vmatpush1.xpose.msra.mxu0 0.0
        %1375 = vmatprep.subr.mxu0 0.0
        %1376 = vmatpush1.xpose.msra.mxu0 0.0
        %1377 = vmatprep.subr.mxu0 0.0
        %1378 = vmatpush1.xpose.msra.mxu0 0.0
        %1379 = vmatprep.subr.mxu0 0.0
        %1380 = vmatpush1.xpose.msra.mxu0 0.0
        %1381 = vmatprep.subr.mxu0 0.0
        %1382 = vmatpush1.xpose.msra.mxu0 0.0
        %1383 = vmatprep.subr.mxu0 0.0
        %1384 = vmatpush1.xpose.msra.mxu0 %v1351
        %1385 = vmatprep.subr.mxu0 0.0
        %1386 = vmatpush2.xpose.msra.mxu0 0.0
        %1387 = vmatprep.subr.mxu0 0.0
        %1388 = vmatpush2.xpose.msra.mxu0 0.0
        %1389 = vmatprep.subr.mxu0 0.0
        %1390 = vmatpush2.xpose.msra.mxu0 0.0
        %1391 = vmatprep.subr.mxu0 0.0
        %1392 = vmatpush2.xpose.msra.mxu0 0.0
        %1393 = vmatprep.subr.mxu0 0.0
        %1394 = vmatpush2.xpose.msra.mxu0 0.0
        %1395 = vmatprep.subr.mxu0 0.0
        %1396 = vmatpush2.xpose.msra.mxu0 0.0
        %1397 = vmatprep.subr.mxu0 0.0
        %1398 = vmatpush2.xpose.msra.mxu0 0.0
        %1399 = vmatprep.subr.mxu0 0.0
        %1400 = vmatpush2.xpose.msra.mxu0 0.0
        %1401 = vmatprep.subr.mxu0 0.0
        %1402 = vmatpush2.xpose.msra.mxu0 0.0
        %1403 = vmatprep.subr.mxu0 0.0
        %1404 = vmatpush2.xpose.msra.mxu0 0.0
        %1405 = vmatprep.subr.mxu0 0.0
        %1406 = vmatpush2.xpose.msra.mxu0 0.0
        %1407 = vmatprep.subr.mxu0 0.0
        %1408 = vmatpush2.xpose.msra.mxu0 0.0
        %1409 = vmatprep.subr.mxu0 0.0
        %1410 = vmatpush2.xpose.msra.mxu0 0.0
        %1411 = vmatprep.subr.mxu0 0.0
        %1412 = vmatpush2.xpose.msra.mxu0 0.0
        %1413 = vmatprep.subr.mxu0 0.0
        %1414 = vmatpush2.xpose.msra.mxu0 0.0
        %1415 = vmatprep.subr.mxu0 0.0
        %1416 = vmatpush2.xpose.msra.mxu0 0.0
        %1417 = vmatprep.mubr.f32.mxu0 0.0
        %1418 = vmatmul.mubr.f32.gmra.mxu0 %v1349
        %v1419 = vpop.f32.mrf.mxu0
        %v1420 = vadd.f32 0.0, %v1419
        %v1421 = vpop.f32.mrf.mxu0
        %1422 = vdwg.mxu0
        %v1423 = vmul.f32 %v1420, 0.35355338
        %v1424 = vadd.f32 %v1423, %v932
        %v1425 = vsel %vm852, %v1424, -inf
        %1426 = vmax.xlane.f32.xlu0 %v1425
        %v1427 = vpop.xlane.xlu0 %1426
        %v1428 = vsub.f32 %v1424, %v1427
        %v1429 = vmul.f32 %v1428, 1.442695
        %v1430 = vpow.pop %v1429
        %v1431 = vsel %vm852, %v1430, 0.0
        %1432 = vadd.xlane.f32.xlu0 %v1431
        %v1433 = vpop.xlane.xlu0 %1432
        %v1434 = vrcp.pop %v1433
        %v1435 = vmul.f32 %v1430, %v1434
        %1436 = vrot.lane.b32.xlu0 %v846, 48
        %v1437 = vpop.permute.xlu0 %1436
        %v1440 = vsel %vm852, %v1435, 0
        %1442 = vmatprep.subr.mxu0 0.0
        %1443 = vmatpush1.msra.mxu0 0.0
        %1444 = vmatprep.subr.mxu0 0.0
        %1445 = vmatpush1.msra.mxu0 0.0
        %1446 = vmatprep.subr.mxu0 0.0
        %1447 = vmatpush1.msra.mxu0 0.0
        %1448 = vmatprep.subr.mxu0 0.0
        %1449 = vmatpush1.msra.mxu0 0.0
        %1450 = vmatprep.subr.mxu0 0.0
        %1451 = vmatpush1.msra.mxu0 0.0
        %1452 = vmatprep.subr.mxu0 0.0
        %1453 = vmatpush1.msra.mxu0 0.0
        %1454 = vmatprep.subr.mxu0 0.0
        %1455 = vmatpush1.msra.mxu0 0.0
        %1456 = vmatprep.subr.mxu0 0.0
        %1457 = vmatpush1.msra.mxu0 0.0
        %1458 = vmatprep.subr.mxu0 0.0
        %1459 = vmatpush1.msra.mxu0 0.0
        %1460 = vmatprep.subr.mxu0 0.0
        %1461 = vmatpush1.msra.mxu0 0.0
        %1462 = vmatprep.subr.mxu0 0.0
        %1463 = vmatpush1.msra.mxu0 0.0
        %1464 = vmatprep.subr.mxu0 0.0
        %1465 = vmatpush1.msra.mxu0 0.0
        %1466 = vmatprep.subr.mxu0 0.0
        %1467 = vmatpush1.msra.mxu0 0.0
        %1468 = vmatprep.subr.mxu0 0.0
        %1469 = vmatpush1.msra.mxu0 0.0
        %1470 = vmatprep.subr.mxu0 0.0
        %1471 = vmatpush1.msra.mxu0 0.0
        %1472 = vmatprep.subr.mxu0 0.0
        %1473 = vmatpush1.msra.mxu0 %v1437
        %1474 = vmatprep.subr.mxu0 0.0
        %1475 = vmatpush2.msra.mxu0 0.0
        %1476 = vmatprep.subr.mxu0 0.0
        %1477 = vmatpush2.msra.mxu0 0.0
        %1478 = vmatprep.subr.mxu0 0.0
        %1479 = vmatpush2.msra.mxu0 0.0
        %1480 = vmatprep.subr.mxu0 0.0
        %1481 = vmatpush2.msra.mxu0 0.0
        %1482 = vmatprep.subr.mxu0 0.0
        %1483 = vmatpush2.msra.mxu0 0.0
        %1484 = vmatprep.subr.mxu0 0.0
        %1485 = vmatpush2.msra.mxu0 0.0
        %1486 = vmatprep.subr.mxu0 0.0
        %1487 = vmatpush2.msra.mxu0 0.0
        %1488 = vmatprep.subr.mxu0 0.0
        %1489 = vmatpush2.msra.mxu0 0.0
        %1490 = vmatprep.subr.mxu0 0.0
        %1491 = vmatpush2.msra.mxu0 0.0
        %1492 = vmatprep.subr.mxu0 0.0
        %1493 = vmatpush2.msra.mxu0 0.0
        %1494 = vmatprep.subr.mxu0 0.0
        %1495 = vmatpush2.msra.mxu0 0.0
        %1496 = vmatprep.subr.mxu0 0.0
        %1497 = vmatpush2.msra.mxu0 0.0
        %1498 = vmatprep.subr.mxu0 0.0
        %1499 = vmatpush2.msra.mxu0 0.0
        %1500 = vmatprep.subr.mxu0 0.0
        %1501 = vmatpush2.msra.mxu0 0.0
        %1502 = vmatprep.subr.mxu0 0.0
        %1503 = vmatpush2.msra.mxu0 0.0
        %1504 = vmatprep.subr.mxu0 0.0
        %1505 = vmatpush2.msra.mxu0 0.0
        %1506 = vmatprep.mubr.f32.mxu0 0.0
        %1507 = vmatmul.mubr.f32.gmra.mxu0 %v1440
        %v1508 = vpop.f32.mrf.mxu0
        %v1509 = vadd.f32 0.0, %v1508
        %v1510 = vpop.f32.mrf.mxu0
        %1511 = vdwg.mxu0
        %v1512 = vld [vmem:[%s9 + $0x10] sm:$0xff]
        %v1514 = vsel %vm852, %v1509, 0
        %1516 = vmatprep.subr.mxu0 0.0
        %1517 = vmatpush1.msra.mxu0 0.0
        %1518 = vmatprep.subr.mxu0 0.0
        %1519 = vmatpush1.msra.mxu0 0.0
        %1520 = vmatprep.subr.mxu0 0.0
        %1521 = vmatpush1.msra.mxu0 0.0
        %1522 = vmatprep.subr.mxu0 0.0
        %1523 = vmatpush1.msra.mxu0 0.0
        %1524 = vmatprep.subr.mxu0 0.0
        %1525 = vmatpush1.msra.mxu0 0.0
        %1526 = vmatprep.subr.mxu0 0.0
        %1527 = vmatpush1.msra.mxu0 0.0
        %1528 = vmatprep.subr.mxu0 0.0
        %1529 = vmatpush1.msra.mxu0 0.0
        %1530 = vmatprep.subr.mxu0 0.0
        %1531 = vmatpush1.msra.mxu0 0.0
        %1532 = vmatprep.subr.mxu0 0.0
        %1533 = vmatpush1.msra.mxu0 0.0
        %1534 = vmatprep.subr.mxu0 0.0
        %1535 = vmatpush1.msra.mxu0 0.0
        %1536 = vmatprep.subr.mxu0 0.0
        %1537 = vmatpush1.msra.mxu0 0.0
        %1538 = vmatprep.subr.mxu0 0.0
        %1539 = vmatpush1.msra.mxu0 0.0
        %1540 = vmatprep.subr.mxu0 0.0
        %1541 = vmatpush1.msra.mxu0 0.0
        %1542 = vmatprep.subr.mxu0 0.0
        %1543 = vmatpush1.msra.mxu0 0.0
        %1544 = vmatprep.subr.mxu0 0.0
        %1545 = vmatpush1.msra.mxu0 0.0
        %1546 = vmatprep.subr.mxu0 0.0
        %1547 = vmatpush1.msra.mxu0 %v1512
        %1548 = vmatprep.subr.mxu0 0.0
        %1549 = vmatpush2.msra.mxu0 0.0
        %1550 = vmatprep.subr.mxu0 0.0
        %1551 = vmatpush2.msra.mxu0 0.0
        %1552 = vmatprep.subr.mxu0 0.0
        %1553 = vmatpush2.msra.mxu0 0.0
        %1554 = vmatprep.subr.mxu0 0.0
        %1555 = vmatpush2.msra.mxu0 0.0
        %1556 = vmatprep.subr.mxu0 0.0
        %1557 = vmatpush2.msra.mxu0 0.0
        %1558 = vmatprep.subr.mxu0 0.0
        %1559 = vmatpush2.msra.mxu0 0.0
        %1560 = vmatprep.subr.mxu0 0.0
        %1561 = vmatpush2.msra.mxu0 0.0
        %1562 = vmatprep.subr.mxu0 0.0
        %1563 = vmatpush2.msra.mxu0 0.0
        %1564 = vmatprep.subr.mxu0 0.0
        %1565 = vmatpush2.msra.mxu0 0.0
        %1566 = vmatprep.subr.mxu0 0.0
        %1567 = vmatpush2.msra.mxu0 0.0
        %1568 = vmatprep.subr.mxu0 0.0
        %1569 = vmatpush2.msra.mxu0 0.0
        %1570 = vmatprep.subr.mxu0 0.0
        %1571 = vmatpush2.msra.mxu0 0.0
        %1572 = vmatprep.subr.mxu0 0.0
        %1573 = vmatpush2.msra.mxu0 0.0
        %1574 = vmatprep.subr.mxu0 0.0
        %1575 = vmatpush2.msra.mxu0 0.0
        %1576 = vmatprep.subr.mxu0 0.0
        %1577 = vmatpush2.msra.mxu0 0.0
        %1578 = vmatprep.subr.mxu0 0.0
        %1579 = vmatpush2.msra.mxu0 0.0
        %1580 = vmatprep.mubr.f32.mxu0 0.0
        %1581 = vmatmul.mubr.f32.gmra.mxu0 %v1514
        %v1582 = vpop.f32.mrf.mxu0
        %v1583 = vadd.f32 0.0, %v1582
        %v1584 = vpop.f32.mrf.mxu0
        %1585 = vdwg.mxu0
        %v1586 = vadd.f32 %v1344, %v1583
        %1587 = vrot.lane.b32.xlu0 %v846, 104
        %v1588 = vpop.permute.xlu0 %1587
        %1589 = vrot.lane.b32.xlu0 %v846, 72
        %v1590 = vpop.permute.xlu0 %1589
        %v1591 = vsel %vm852, %v1588, 0
        %v1593 = vsel %vm852, %v1590, 0
        %1595 = vmatprep.subr.mxu0 0.0
        %1596 = vmatpush1.xpose.msra.mxu0 0.0
        %1597 = vmatprep.subr.mxu0 0.0
        %1598 = vmatpush1.xpose.msra.mxu0 0.0
        %1599 = vmatprep.subr.mxu0 0.0
        %1600 = vmatpush1.xpose.msra.mxu0 0.0
        %1601 = vmatprep.subr.mxu0 0.0
        %1602 = vmatpush1.xpose.msra.mxu0 0.0
        %1603 = vmatprep.subr.mxu0 0.0
        %1604 = vmatpush1.xpose.msra.mxu0 0.0
        %1605 = vmatprep.subr.mxu0 0.0
        %1606 = vmatpush1.xpose.msra.mxu0 0.0
        %1607 = vmatprep.subr.mxu0 0.0
        %1608 = vmatpush1.xpose.msra.mxu0 0.0
        %1609 = vmatprep.subr.mxu0 0.0
        %1610 = vmatpush1.xpose.msra.mxu0 0.0
        %1611 = vmatprep.subr.mxu0 0.0
        %1612 = vmatpush1.xpose.msra.mxu0 0.0
        %1613 = vmatprep.subr.mxu0 0.0
        %1614 = vmatpush1.xpose.msra.mxu0 0.0
        %1615 = vmatprep.subr.mxu0 0.0
        %1616 = vmatpush1.xpose.msra.mxu0 0.0
        %1617 = vmatprep.subr.mxu0 0.0
        %1618 = vmatpush1.xpose.msra.mxu0 0.0
        %1619 = vmatprep.subr.mxu0 0.0
        %1620 = vmatpush1.xpose.msra.mxu0 0.0
        %1621 = vmatprep.subr.mxu0 0.0
        %1622 = vmatpush1.xpose.msra.mxu0 0.0
        %1623 = vmatprep.subr.mxu0 0.0
        %1624 = vmatpush1.xpose.msra.mxu0 0.0
        %1625 = vmatprep.subr.mxu0 0.0
        %1626 = vmatpush1.xpose.msra.mxu0 %v1593
        %1627 = vmatprep.subr.mxu0 0.0
        %1628 = vmatpush2.xpose.msra.mxu0 0.0
        %1629 = vmatprep.subr.mxu0 0.0
        %1630 = vmatpush2.xpose.msra.mxu0 0.0
        %1631 = vmatprep.subr.mxu0 0.0
        %1632 = vmatpush2.xpose.msra.mxu0 0.0
        %1633 = vmatprep.subr.mxu0 0.0
        %1634 = vmatpush2.xpose.msra.mxu0 0.0
        %1635 = vmatprep.subr.mxu0 0.0
        %1636 = vmatpush2.xpose.msra.mxu0 0.0
        %1637 = vmatprep.subr.mxu0 0.0
        %1638 = vmatpush2.xpose.msra.mxu0 0.0
        %1639 = vmatprep.subr.mxu0 0.0
        %1640 = vmatpush2.xpose.msra.mxu0 0.0
        %1641 = vmatprep.subr.mxu0 0.0
        %1642 = vmatpush2.xpose.msra.mxu0 0.0
        %1643 = vmatprep.subr.mxu0 0.0
        %1644 = vmatpush2.xpose.msra.mxu0 0.0
        %1645 = vmatprep.subr.mxu0 0.0
        %1646 = vmatpush2.xpose.msra.mxu0 0.0
        %1647 = vmatprep.subr.mxu0 0.0
        %1648 = vmatpush2.xpose.msra.mxu0 0.0
        %1649 = vmatprep.subr.mxu0 0.0
        %1650 = vmatpush2.xpose.msra.mxu0 0.0
        %1651 = vmatprep.subr.mxu0 0.0
        %1652 = vmatpush2.xpose.msra.mxu0 0.0
        %1653 = vmatprep.subr.mxu0 0.0
        %1654 = vmatpush2.xpose.msra.mxu0 0.0
        %1655 = vmatprep.subr.mxu0 0.0
        %1656 = vmatpush2.xpose.msra.mxu0 0.0
        %1657 = vmatprep.subr.mxu0 0.0
        %1658 = vmatpush2.xpose.msra.mxu0 0.0
        %1659 = vmatprep.mubr.f32.mxu0 0.0
        %1660 = vmatmul.mubr.f32.gmra.mxu0 %v1591
        %v1661 = vpop.f32.mrf.mxu0
        %v1662 = vadd.f32 0.0, %v1661
        %v1663 = vpop.f32.mrf.mxu0
        %1664 = vdwg.mxu0
        %v1665 = vmul.f32 %v1662, 0.35355338
        %v1666 = vadd.f32 %v1665, %v932
        %v1667 = vsel %vm852, %v1666, -inf
        %1668 = vmax.xlane.f32.xlu0 %v1667
        %v1669 = vpop.xlane.xlu0 %1668
        %v1670 = vsub.f32 %v1666, %v1669
        %v1671 = vmul.f32 %v1670, 1.442695
        %v1672 = vpow.pop %v1671
        %v1673 = vsel %vm852, %v1672, 0.0
        %1674 = vadd.xlane.f32.xlu0 %v1673
        %v1675 = vpop.xlane.xlu0 %1674
        %v1676 = vrcp.pop %v1675
        %v1677 = vmul.f32 %v1672, %v1676
        %1678 = vrot.lane.b32.xlu0 %v846, 40
        %v1679 = vpop.permute.xlu0 %1678
        %v1682 = vsel %vm852, %v1677, 0
        %1684 = vmatprep.subr.mxu0 0.0
        %1685 = vmatpush1.msra.mxu0 0.0
        %1686 = vmatprep.subr.mxu0 0.0
        %1687 = vmatpush1.msra.mxu0 0.0
        %1688 = vmatprep.subr.mxu0 0.0
        %1689 = vmatpush1.msra.mxu0 0.0
        %1690 = vmatprep.subr.mxu0 0.0
        %1691 = vmatpush1.msra.mxu0 0.0
        %1692 = vmatprep.subr.mxu0 0.0
        %1693 = vmatpush1.msra.mxu0 0.0
        %1694 = vmatprep.subr.mxu0 0.0
        %1695 = vmatpush1.msra.mxu0 0.0
        %1696 = vmatprep.subr.mxu0 0.0
        %1697 = vmatpush1.msra.mxu0 0.0
        %1698 = vmatprep.subr.mxu0 0.0
        %1699 = vmatpush1.msra.mxu0 0.0
        %1700 = vmatprep.subr.mxu0 0.0
        %1701 = vmatpush1.msra.mxu0 0.0
        %1702 = vmatprep.subr.mxu0 0.0
        %1703 = vmatpush1.msra.mxu0 0.0
        %1704 = vmatprep.subr.mxu0 0.0
        %1705 = vmatpush1.msra.mxu0 0.0
        %1706 = vmatprep.subr.mxu0 0.0
        %1707 = vmatpush1.msra.mxu0 0.0
        %1708 = vmatprep.subr.mxu0 0.0
        %1709 = vmatpush1.msra.mxu0 0.0
        %1710 = vmatprep.subr.mxu0 0.0
        %1711 = vmatpush1.msra.mxu0 0.0
        %1712 = vmatprep.subr.mxu0 0.0
        %1713 = vmatpush1.msra.mxu0 0.0
        %1714 = vmatprep.subr.mxu0 0.0
        %1715 = vmatpush1.msra.mxu0 %v1679
        %1716 = vmatprep.subr.mxu0 0.0
        %1717 = vmatpush2.msra.mxu0 0.0
        %1718 = vmatprep.subr.mxu0 0.0
        %1719 = vmatpush2.msra.mxu0 0.0
        %1720 = vmatprep.subr.mxu0 0.0
        %1721 = vmatpush2.msra.mxu0 0.0
        %1722 = vmatprep.subr.mxu0 0.0
        %1723 = vmatpush2.msra.mxu0 0.0
        %1724 = vmatprep.subr.mxu0 0.0
        %1725 = vmatpush2.msra.mxu0 0.0
        %1726 = vmatprep.subr.mxu0 0.0
        %1727 = vmatpush2.msra.mxu0 0.0
        %1728 = vmatprep.subr.mxu0 0.0
        %1729 = vmatpush2.msra.mxu0 0.0
        %1730 = vmatprep.subr.mxu0 0.0
        %1731 = vmatpush2.msra.mxu0 0.0
        %1732 = vmatprep.subr.mxu0 0.0
        %1733 = vmatpush2.msra.mxu0 0.0
        %1734 = vmatprep.subr.mxu0 0.0
        %1735 = vmatpush2.msra.mxu0 0.0
        %1736 = vmatprep.subr.mxu0 0.0
        %1737 = vmatpush2.msra.mxu0 0.0
        %1738 = vmatprep.subr.mxu0 0.0
        %1739 = vmatpush2.msra.mxu0 0.0
        %1740 = vmatprep.subr.mxu0 0.0
        %1741 = vmatpush2.msra.mxu0 0.0
        %1742 = vmatprep.subr.mxu0 0.0
        %1743 = vmatpush2.msra.mxu0 0.0
        %1744 = vmatprep.subr.mxu0 0.0
        %1745 = vmatpush2.msra.mxu0 0.0
        %1746 = vmatprep.subr.mxu0 0.0
        %1747 = vmatpush2.msra.mxu0 0.0
        %1748 = vmatprep.mubr.f32.mxu0 0.0
        %1749 = vmatmul.mubr.f32.gmra.mxu0 %v1682
        %v1750 = vpop.f32.mrf.mxu0
        %v1751 = vadd.f32 0.0, %v1750
        %v1752 = vpop.f32.mrf.mxu0
        %1753 = vdwg.mxu0
        %v1754 = vld [vmem:[%s9 + $0x18] sm:$0xff]
        %v1756 = vsel %vm852, %v1751, 0
        %1758 = vmatprep.subr.mxu0 0.0
        %1759 = vmatpush1.msra.mxu0 0.0
        %1760 = vmatprep.subr.mxu0 0.0
        %1761 = vmatpush1.msra.mxu0 0.0
        %1762 = vmatprep.subr.mxu0 0.0
        %1763 = vmatpush1.msra.mxu0 0.0
        %1764 = vmatprep.subr.mxu0 0.0
        %1765 = vmatpush1.msra.mxu0 0.0
        %1766 = vmatprep.subr.mxu0 0.0
        %1767 = vmatpush1.msra.mxu0 0.0
        %1768 = vmatprep.subr.mxu0 0.0
        %1769 = vmatpush1.msra.mxu0 0.0
        %1770 = vmatprep.subr.mxu0 0.0
        %1771 = vmatpush1.msra.mxu0 0.0
        %1772 = vmatprep.subr.mxu0 0.0
        %1773 = vmatpush1.msra.mxu0 0.0
        %1774 = vmatprep.subr.mxu0 0.0
        %1775 = vmatpush1.msra.mxu0 0.0
        %1776 = vmatprep.subr.mxu0 0.0
        %1777 = vmatpush1.msra.mxu0 0.0
        %1778 = vmatprep.subr.mxu0 0.0
        %1779 = vmatpush1.msra.mxu0 0.0
        %1780 = vmatprep.subr.mxu0 0.0
        %1781 = vmatpush1.msra.mxu0 0.0
        %1782 = vmatprep.subr.mxu0 0.0
        %1783 = vmatpush1.msra.mxu0 0.0
        %1784 = vmatprep.subr.mxu0 0.0
        %1785 = vmatpush1.msra.mxu0 0.0
        %1786 = vmatprep.subr.mxu0 0.0
        %1787 = vmatpush1.msra.mxu0 0.0
        %1788 = vmatprep.subr.mxu0 0.0
        %1789 = vmatpush1.msra.mxu0 %v1754
        %1790 = vmatprep.subr.mxu0 0.0
        %1791 = vmatpush2.msra.mxu0 0.0
        %1792 = vmatprep.subr.mxu0 0.0
        %1793 = vmatpush2.msra.mxu0 0.0
        %1794 = vmatprep.subr.mxu0 0.0
        %1795 = vmatpush2.msra.mxu0 0.0
        %1796 = vmatprep.subr.mxu0 0.0
        %1797 = vmatpush2.msra.mxu0 0.0
        %1798 = vmatprep.subr.mxu0 0.0
        %1799 = vmatpush2.msra.mxu0 0.0
        %1800 = vmatprep.subr.mxu0 0.0
        %1801 = vmatpush2.msra.mxu0 0.0
        %1802 = vmatprep.subr.mxu0 0.0
        %1803 = vmatpush2.msra.mxu0 0.0
        %1804 = vmatprep.subr.mxu0 0.0
        %1805 = vmatpush2.msra.mxu0 0.0
        %1806 = vmatprep.subr.mxu0 0.0
        %1807 = vmatpush2.msra.mxu0 0.0
        %1808 = vmatprep.subr.mxu0 0.0
        %1809 = vmatpush2.msra.mxu0 0.0
        %1810 = vmatprep.subr.mxu0 0.0
        %1811 = vmatpush2.msra.mxu0 0.0
        %1812 = vmatprep.subr.mxu0 0.0
        %1813 = vmatpush2.msra.mxu0 0.0
        %1814 = vmatprep.subr.mxu0 0.0
        %1815 = vmatpush2.msra.mxu0 0.0
        %1816 = vmatprep.subr.mxu0 0.0
        %1817 = vmatpush2.msra.mxu0 0.0
        %1818 = vmatprep.subr.mxu0 0.0
        %1819 = vmatpush2.msra.mxu0 0.0
        %1820 = vmatprep.subr.mxu0 0.0
        %1821 = vmatpush2.msra.mxu0 0.0
        %1822 = vmatprep.mubr.f32.mxu0 0.0
        %1823 = vmatmul.mubr.f32.gmra.mxu0 %v1756
        %v1824 = vpop.f32.mrf.mxu0
        %v1825 = vadd.f32 0.0, %v1824
        %v1826 = vpop.f32.mrf.mxu0
        %1827 = vdwg.mxu0
        %v1828 = vadd.f32 %v1586, %v1825
        %v1829 = vadd.f32 %v739, %v1828
        %v1830 = vsel %vm775, %v1829, 0.0
        %1831 = vadd.xlane.f32.xlu0 %v1830
        %v1832 = vpop.xlane.xlu0 %1831
        %v1833 = vrcp.pop 32.0
        %v1834 = vmul.f32 %v1832, %v1833
        %v1835 = vsub.f32 %v1829, %v1834
        %v1836 = vmul.f32 %v1835, %v1835
        %v1837 = vsel %vm775, %v1836, 0.0
        %1838 = vadd.xlane.f32.xlu0 %v1837
        %v1839 = vpop.xlane.xlu0 %1838
        %v1840 = vmul.f32 %v1839, %v1833
        %v1841 = vadd.f32 %v1840, 1e-12
        %v1842 = vrsqrt.pop %v1841
        %v1843 = vmul.f32 %v1835, %v1842
        %v1845 = vlaneseq
        %v1846 = vshrl.u32 %v1845, 7
        %v1847 = vsub.s32 0, %v1846
        %v1848 = vrot.slane %v751, %v1847
        %v1850 = vmul.f32 %v1843, %v1848
        %v1852 = vlaneseq
        %v1853 = vshrl.u32 %v1852, 7
        %v1854 = vsub.s32 0, %v1853
        %v1855 = vrot.slane %v752, %v1854
        %v1857 = vadd.f32 %v1850, %v1855
        %v1859 = vlaneseq
        %v1860 = vshrl.u32 %v1859, 7
        %v1861 = vsub.s32 0, %v1860
        %v1862 = vrot.slane %v757, %v1861
        %v1865 = vsel %vm775, %v1857, 0
        %1867 = vmatprep.subr.mxu0 0.0
        %1868 = vmatpush1.msra.mxu0 0.0
        %1869 = vmatprep.subr.mxu0 0.0
        %1870 = vmatpush1.msra.mxu0 0.0
        %1871 = vmatprep.subr.mxu0 0.0
        %1872 = vmatpush1.msra.mxu0 0.0
        %1873 = vmatprep.subr.mxu0 0.0
        %1874 = vmatpush1.msra.mxu0 0.0
        %1875 = vmatprep.subr.mxu0 0.0
        %1876 = vmatpush1.msra.mxu0 0.0
        %1877 = vmatprep.subr.mxu0 0.0
        %1878 = vmatpush1.msra.mxu0 0.0
        %1879 = vmatprep.subr.mxu0 0.0
        %1880 = vmatpush1.msra.mxu0 0.0
        %1881 = vmatprep.subr.mxu0 0.0
        %1882 = vmatpush1.msra.mxu0 0.0
        %1883 = vmatprep.subr.mxu0 0.0
        %1884 = vmatpush1.msra.mxu0 0.0
        %1885 = vmatprep.subr.mxu0 0.0
        %1886 = vmatpush1.msra.mxu0 0.0
        %1887 = vmatprep.subr.mxu0 0.0
        %1888 = vmatpush1.msra.mxu0 0.0
        %1889 = vmatprep.subr.mxu0 0.0
        %1890 = vmatpush1.msra.mxu0 0.0
        %1891 = vmatprep.subr.mxu0 0.0
        %1892 = vmatpush1.msra.mxu0 %v756
        %1893 = vmatprep.subr.mxu0 0.0
        %1894 = vmatpush1.msra.mxu0 %v755
        %1895 = vmatprep.subr.mxu0 0.0
        %1896 = vmatpush1.msra.mxu0 %v754
        %1897 = vmatprep.subr.mxu0 0.0
        %1898 = vmatpush1.msra.mxu0 %v753
        %1899 = vmatprep.subr.mxu0 0.0
        %1900 = vmatpush2.msra.mxu0 0.0
        %1901 = vmatprep.subr.mxu0 0.0
        %1902 = vmatpush2.msra.mxu0 0.0
        %1903 = vmatprep.subr.mxu0 0.0
        %1904 = vmatpush2.msra.mxu0 0.0
        %1905 = vmatprep.subr.mxu0 0.0
        %1906 = vmatpush2.msra.mxu0 0.0
        %1907 = vmatprep.subr.mxu0 0.0
        %1908 = vmatpush2.msra.mxu0 0.0
        %1909 = vmatprep.subr.mxu0 0.0
        %1910 = vmatpush2.msra.mxu0 0.0
        %1911 = vmatprep.subr.mxu0 0.0
        %1912 = vmatpush2.msra.mxu0 0.0
        %1913 = vmatprep.subr.mxu0 0.0
        %1914 = vmatpush2.msra.mxu0 0.0
        %1915 = vmatprep.subr.mxu0 0.0
        %1916 = vmatpush2.msra.mxu0 0.0
        %1917 = vmatprep.subr.mxu0 0.0
        %1918 = vmatpush2.msra.mxu0 0.0
        %1919 = vmatprep.subr.mxu0 0.0
        %1920 = vmatpush2.msra.mxu0 0.0
        %1921 = vmatprep.subr.mxu0 0.0
        %1922 = vmatpush2.msra.mxu0 0.0
        %1923 = vmatprep.subr.mxu0 0.0
        %1924 = vmatpush2.msra.mxu0 0.0
        %1925 = vmatprep.subr.mxu0 0.0
        %1926 = vmatpush2.msra.mxu0 0.0
        %1927 = vmatprep.subr.mxu0 0.0
        %1928 = vmatpush2.msra.mxu0 0.0
        %1929 = vmatprep.subr.mxu0 0.0
        %1930 = vmatpush2.msra.mxu0 0.0
        %1931 = vmatprep.mubr.f32.mxu0 0.0
        %1932 = vmatmul.mubr.f32.gmra.mxu0 %v1865
        %v1933 = vpop.f32.mrf.mxu0
        %v1934 = vadd.f32 %v1862, %v1933
        %v1935 = vpop.f32.mrf.mxu0
        %1936 = vdwg.mxu0
        %v1937 = vmul.f32 %v1934, %v1934
        %v1938 = vmul.f32 %v1934, %v1937
        %v1939 = vmul.f32 %v1938, 0.044715
        %v1940 = vadd.f32 %v1934, %v1939
        %v1941 = vmul.f32 %v1940, 0.7978846
        %v1942 = vtanh.pop %v1941
        %v1943 = vadd.f32 %v1942, 1.0
        %v1944 = vmul.f32 %v1943, 0.5
        %v1945 = vmul.f32 %v1934, %v1944
        %v1947 = vlaneseq
        %v1948 = vshrl.u32 %v1947, 7
        %v1949 = vsub.s32 0, %v1948
        %v1950 = vrot.slane %v766, %v1949
        %vm1952 = vcmask 523264
        %v1954 = vsel %vm1952, %v1945, 0
        %1956 = vmatprep.subr.mxu0 0.0
        %1957 = vmatpush1.msra.mxu0 0.0
        %1958 = vmatprep.subr.mxu0 0.0
        %1959 = vmatpush1.msra.mxu0 0.0
        %1960 = vmatprep.subr.mxu0 0.0
        %1961 = vmatpush1.msra.mxu0 0.0
        %1962 = vmatprep.subr.mxu0 0.0
        %1963 = vmatpush1.msra.mxu0 0.0
        %1964 = vmatprep.subr.mxu0 0.0
        %1965 = vmatpush1.msra.mxu0 0.0
        %1966 = vmatprep.subr.mxu0 0.0
        %1967 = vmatpush1.msra.mxu0 0.0
        %1968 = vmatprep.subr.mxu0 0.0
        %1969 = vmatpush1.msra.mxu0 0.0
        %1970 = vmatprep.subr.mxu0 0.0
        %1971 = vmatpush1.msra.mxu0 0.0
        %1972 = vmatprep.subr.mxu0 0.0
        %1973 = vmatpush1.msra.mxu0 %v765
        %1974 = vmatprep.subr.mxu0 0.0
        %1975 = vmatpush1.msra.mxu0 %v764
        %1976 = vmatprep.subr.mxu0 0.0
        %1977 = vmatpush1.msra.mxu0 %v763
        %1978 = vmatprep.subr.mxu0 0.0
        %1979 = vmatpush1.msra.mxu0 %v762
        %1980 = vmatprep.subr.mxu0 0.0
        %1981 = vmatpush1.msra.mxu0 %v761
        %1982 = vmatprep.subr.mxu0 0.0
        %1983 = vmatpush1.msra.mxu0 %v760
        %1984 = vmatprep.subr.mxu0 0.0
        %1985 = vmatpush1.msra.mxu0 %v759
        %1986 = vmatprep.subr.mxu0 0.0
        %1987 = vmatpush1.msra.mxu0 %v758
        %1988 = vmatprep.subr.mxu0 0.0
        %1989 = vmatpush2.msra.mxu0 0.0
        %1990 = vmatprep.subr.mxu0 0.0
        %1991 = vmatpush2.msra.mxu0 0.0
        %1992 = vmatprep.subr.mxu0 0.0
        %1993 = vmatpush2.msra.mxu0 0.0
        %1994 = vmatprep.subr.mxu0 0.0
        %1995 = vmatpush2.msra.mxu0 0.0
        %1996 = vmatprep.subr.mxu0 0.0
        %1997 = vmatpush2.msra.mxu0 0.0
        %1998 = vmatprep.subr.mxu0 0.0
        %1999 = vmatpush2.msra.mxu0 0.0
        %2000 = vmatprep.subr.mxu0 0.0
        %2001 = vmatpush2.msra.mxu0 0.0
        %2002 = vmatprep.subr.mxu0 0.0
        %2003 = vmatpush2.msra.mxu0 0.0
        %2004 = vmatprep.subr.mxu0 0.0
        %2005 = vmatpush2.msra.mxu0 0.0
        %2006 = vmatprep.subr.mxu0 0.0
        %2007 = vmatpush2.msra.mxu0 0.0
        %2008 = vmatprep.subr.mxu0 0.0
        %2009 = vmatpush2.msra.mxu0 0.0
        %2010 = vmatprep.subr.mxu0 0.0
        %2011 = vmatpush2.msra.mxu0 0.0
        %2012 = vmatprep.subr.mxu0 0.0
        %2013 = vmatpush2.msra.mxu0 0.0
        %2014 = vmatprep.subr.mxu0 0.0
        %2015 = vmatpush2.msra.mxu0 0.0
        %2016 = vmatprep.subr.mxu0 0.0
        %2017 = vmatpush2.msra.mxu0 0.0
        %2018 = vmatprep.subr.mxu0 0.0
        %2019 = vmatpush2.msra.mxu0 0.0
        %2020 = vmatprep.mubr.f32.mxu0 0.0
        %2021 = vmatmul.mubr.f32.gmra.mxu0 %v1954
        %v2022 = vpop.f32.mrf.mxu0
        %v2023 = vadd.f32 %v1950, %v2022
        %v2024 = vpop.f32.mrf.mxu0
        %2025 = vdwg.mxu0
        %v2026 = vadd.f32 %v1857, %v2023
        %v2027 = vsel %vm775, %v2026, 0.0
        %2028 = vadd.xlane.f32.xlu0 %v2027
        %v2029 = vpop.xlane.xlu0 %2028
        %v2030 = vmul.f32 %v2029, %v1833
        %v2031 = vsub.f32 %v2026, %v2030
        %v2032 = vmul.f32 %v2031, %v2031
        %v2033 = vsel %vm775, %v2032, 0.0
        %2034 = vadd.xlane.f32.xlu0 %v2033
        %v2035 = vpop.xlane.xlu0 %2034
        %v2036 = vmul.f32 %v2035, %v1833
        %v2037 = vadd.f32 %v2036, 1e-12
        %v2038 = vrsqrt.pop %v2037
        %v2039 = vmul.f32 %v2031, %v2038
        %v2041 = vlaneseq
        %v2042 = vshrl.u32 %v2041, 7
        %v2043 = vsub.s32 0, %v2042
        %v2044 = vrot.slane %v767, %v2043
        %v2046 = vmul.f32 %v2039, %v2044
        %v2048 = vlaneseq
        %v2049 = vshrl.u32 %v2048, 7
        %v2050 = vsub.s32 0, %v2049
        %v2051 = vrot.slane %v768, %v2050
        %v2053 = vadd.f32 %v2046, %v2051
        %v2055 = vsel %vm775, %v2053, 0
        %2057 = vmatprep.subr.mxu0 0.0
        %2058 = vmatpush1.msra.mxu0 0.0
        %2059 = vmatprep.subr.mxu0 0.0
        %2060 = vmatpush1.msra.mxu0 0.0
        %2061 = vmatprep.subr.mxu0 0.0
        %2062 = vmatpush1.msra.mxu0 0.0
        %2063 = vmatprep.subr.mxu0 0.0
        %2064 = vmatpush1.msra.mxu0 0.0
        %2065 = vmatprep.subr.mxu0 0.0
        %2066 = vmatpush1.msra.mxu0 0.0
        %2067 = vmatprep.subr.mxu0 0.0
        %2068 = vmatpush1.msra.mxu0 0.0
        %2069 = vmatprep.subr.mxu0 0.0
        %2070 = vmatpush1.msra.mxu0 0.0
        %2071 = vmatprep.subr.mxu0 0.0
        %2072 = vmatpush1.msra.mxu0 0.0
        %2073 = vmatprep.subr.mxu0 0.0
        %2074 = vmatpush1.msra.mxu0 0.0
        %2075 = vmatprep.subr.mxu0 0.0
        %2076 = vmatpush1.msra.mxu0 0.0
        %2077 = vmatprep.subr.mxu0 0.0
        %2078 = vmatpush1.msra.mxu0 0.0
        %2079 = vmatprep.subr.mxu0 0.0
        %2080 = vmatpush1.msra.mxu0 0.0
        %2081 = vmatprep.subr.mxu0 0.0
        %2082 = vmatpush1.msra.mxu0 %v748
        %2083 = vmatprep.subr.mxu0 0.0
        %2084 = vmatpush1.msra.mxu0 %v747
        %2085 = vmatprep.subr.mxu0 0.0
        %2086 = vmatpush1.msra.mxu0 %v746
        %2087 = vmatprep.subr.mxu0 0.0
        %2088 = vmatpush1.msra.mxu0 %v745
        %2089 = vmatprep.subr.mxu0 0.0
        %2090 = vmatpush2.msra.mxu0 0.0
        %2091 = vmatprep.subr.mxu0 0.0
        %2092 = vmatpush2.msra.mxu0 0.0
        %2093 = vmatprep.subr.mxu0 0.0
        %2094 = vmatpush2.msra.mxu0 0.0
        %2095 = vmatprep.subr.mxu0 0.0
        %2096 = vmatpush2.msra.mxu0 0.0
        %2097 = vmatprep.subr.mxu0 0.0
        %2098 = vmatpush2.msra.mxu0 0.0
        %2099 = vmatprep.subr.mxu0 0.0
        %2100 = vmatpush2.msra.mxu0 0.0
        %2101 = vmatprep.subr.mxu0 0.0
        %2102 = vmatpush2.msra.mxu0 0.0
        %2103 = vmatprep.subr.mxu0 0.0
        %2104 = vmatpush2.msra.mxu0 0.0
        %2105 = vmatprep.subr.mxu0 0.0
        %2106 = vmatpush2.msra.mxu0 0.0
        %2107 = vmatprep.subr.mxu0 0.0
        %2108 = vmatpush2.msra.mxu0 0.0
        %2109 = vmatprep.subr.mxu0 0.0
        %2110 = vmatpush2.msra.mxu0 0.0
        %2111 = vmatprep.subr.mxu0 0.0
        %2112 = vmatpush2.msra.mxu0 0.0
        %2113 = vmatprep.subr.mxu0 0.0
        %2114 = vmatpush2.msra.mxu0 0.0
        %2115 = vmatprep.subr.mxu0 0.0
        %2116 = vmatpush2.msra.mxu0 0.0
        %2117 = vmatprep.subr.mxu0 0.0
        %2118 = vmatpush2.msra.mxu0 0.0
        %2119 = vmatprep.subr.mxu0 0.0
        %2120 = vmatpush2.msra.mxu0 0.0
        %2121 = vmatprep.mubr.f32.mxu0 0.0
        %2122 = vmatmul.mubr.f32.gmra.mxu0 %v2055
        %v2123 = vpop.f32.mrf.mxu0
        %v2124 = vadd.f32 %v773, %v2123
        %v2125 = vpop.f32.mrf.mxu0
        %2126 = vdwg.mxu0
        %2128 = vrot.lane.b32.xlu0 %v2124, 96
        %v2129 = vpop.permute.xlu0 %2128
        %v2130 = vsel %vm852, %v2124, 0
        %v2132 = vsel %vm852, %v2129, 0
        %2134 = vmatprep.subr.mxu0 0.0
        %2135 = vmatpush1.xpose.msra.mxu0 0.0
        %2136 = vmatprep.subr.mxu0 0.0
        %2137 = vmatpush1.xpose.msra.mxu0 0.0
        %2138 = vmatprep.subr.mxu0 0.0
        %2139 = vmatpush1.xpose.msra.mxu0 0.0
        %2140 = vmatprep.subr.mxu0 0.0
        %2141 = vmatpush1.xpose.msra.mxu0 0.0
        %2142 = vmatprep.subr.mxu0 0.0
        %2143 = vmatpush1.xpose.msra.mxu0 0.0
        %2144 = vmatprep.subr.mxu0 0.0
        %2145 = vmatpush1.xpose.msra.mxu0 0.0
        %2146 = vmatprep.subr.mxu0 0.0
        %2147 = vmatpush1.xpose.msra.mxu0 0.0
        %2148 = vmatprep.subr.mxu0 0.0
        %2149 = vmatpush1.xpose.msra.mxu0 0.0
        %2150 = vmatprep.subr.mxu0 0.0
        %2151 = vmatpush1.xpose.msra.mxu0 0.0
        %2152 = vmatprep.subr.mxu0 0.0
        %2153 = vmatpush1.xpose.msra.mxu0 0.0
        %2154 = vmatprep.subr.mxu0 0.0
        %2155 = vmatpush1.xpose.msra.mxu0 0.0
        %2156 = vmatprep.subr.mxu0 0.0
        %2157 = vmatpush1.xpose.msra.mxu0 0.0
        %2158 = vmatprep.subr.mxu0 0.0
        %2159 = vmatpush1.xpose.msra.mxu0 0.0
        %2160 = vmatprep.subr.mxu0 0.0
        %2161 = vmatpush1.xpose.msra.mxu0 0.0
        %2162 = vmatprep.subr.mxu0 0.0
        %2163 = vmatpush1.xpose.msra.mxu0 0.0
        %2164 = vmatprep.subr.mxu0 0.0
        %2165 = vmatpush1.xpose.msra.mxu0 %v2132
        %2166 = vmatprep.subr.mxu0 0.0
        %2167 = vmatpush2.xpose.msra.mxu0 0.0
        %2168 = vmatprep.subr.mxu0 0.0
        %2169 = vmatpush2.xpose.msra.mxu0 0.0
        %2170 = vmatprep.subr.mxu0 0.0
        %2171 = vmatpush2.xpose.msra.mxu0 0.0
        %2172 = vmatprep.subr.mxu0 0.0
        %2173 = vmatpush2.xpose.msra.mxu0 0.0
        %2174 = vmatprep.subr.mxu0 0.0
        %2175 = vmatpush2.xpose.msra.mxu0 0.0
        %2176 = vmatprep.subr.mxu0 0.0
        %2177 = vmatpush2.xpose.msra.mxu0 0.0
        %2178 = vmatprep.subr.mxu0 0.0
        %2179 = vmatpush2.xpose.msra.mxu0 0.0
        %2180 = vmatprep.subr.mxu0 0.0
        %2181 = vmatpush2.xpose.msra.mxu0 0.0
        %2182 = vmatprep.subr.mxu0 0.0
        %2183 = vmatpush2.xpose.msra.mxu0 0.0
        %2184 = vmatprep.subr.mxu0 0.0
        %2185 = vmatpush2.xpose.msra.mxu0 0.0
        %2186 = vmatprep.subr.mxu0 0.0
        %2187 = vmatpush2.xpose.msra.mxu0 0.0
        %2188 = vmatprep.subr.mxu0 0.0
        %2189 = vmatpush2.xpose.msra.mxu0 0.0
        %2190 = vmatprep.subr.mxu0 0.0
        %2191 = vmatpush2.xpose.msra.mxu0 0.0
        %2192 = vmatprep.subr.mxu0 0.0
        %2193 = vmatpush2.xpose.msra.mxu0 0.0
        %2194 = vmatprep.subr.mxu0 0.0
        %2195 = vmatpush2.xpose.msra.mxu0 0.0
        %2196 = vmatprep.subr.mxu0 0.0
        %2197 = vmatpush2.xpose.msra.mxu0 0.0
        %2198 = vmatprep.mubr.f32.mxu0 0.0
        %2199 = vmatmul.mubr.f32.gmra.mxu0 %v2130
        %v2200 = vpop.f32.mrf.mxu0
        %v2201 = vadd.f32 0.0, %v2200
        %v2202 = vpop.f32.mrf.mxu0
        %2203 = vdwg.mxu0
        %v2204 = vmul.f32 %v2201, 0.35355338
        %v2205 = vadd.f32 %v2204, %v932
        %v2206 = vsel %vm852, %v2205, -inf
        %2207 = vmax.xlane.f32.xlu0 %v2206
        %v2208 = vpop.xlane.xlu0 %2207
        %v2209 = vsub.f32 %v2205, %v2208
        %v2210 = vmul.f32 %v2209, 1.442695
        %v2211 = vpow.pop %v2210
        %v2212 = vsel %vm852, %v2211, 0.0
        %2213 = vadd.xlane.f32.xlu0 %v2212
        %v2214 = vpop.xlane.xlu0 %2213
        %v2215 = vrcp.pop %v2214
        %v2216 = vmul.f32 %v2211, %v2215
        %2217 = vrot.lane.b32.xlu0 %v2124, 64
        %v2218 = vpop.permute.xlu0 %2217
        %v2221 = vsel %vm852, %v2216, 0
        %2223 = vmatprep.subr.mxu0 0.0
        %2224 = vmatpush1.msra.mxu0 0.0
        %2225 = vmatprep.subr.mxu0 0.0
        %2226 = vmatpush1.msra.mxu0 0.0
        %2227 = vmatprep.subr.mxu0 0.0
        %2228 = vmatpush1.msra.mxu0 0.0
        %2229 = vmatprep.subr.mxu0 0.0
        %2230 = vmatpush1.msra.mxu0 0.0
        %2231 = vmatprep.subr.mxu0 0.0
        %2232 = vmatpush1.msra.mxu0 0.0
        %2233 = vmatprep.subr.mxu0 0.0
        %2234 = vmatpush1.msra.mxu0 0.0
        %2235 = vmatprep.subr.mxu0 0.0
        %2236 = vmatpush1.msra.mxu0 0.0
        %2237 = vmatprep.subr.mxu0 0.0
        %2238 = vmatpush1.msra.mxu0 0.0
        %2239 = vmatprep.subr.mxu0 0.0
        %2240 = vmatpush1.msra.mxu0 0.0
        %2241 = vmatprep.subr.mxu0 0.0
        %2242 = vmatpush1.msra.mxu0 0.0
        %2243 = vmatprep.subr.mxu0 0.0
        %2244 = vmatpush1.msra.mxu0 0.0
        %2245 = vmatprep.subr.mxu0 0.0
        %2246 = vmatpush1.msra.mxu0 0.0
        %2247 = vmatprep.subr.mxu0 0.0
        %2248 = vmatpush1.msra.mxu0 0.0
        %2249 = vmatprep.subr.mxu0 0.0
        %2250 = vmatpush1.msra.mxu0 0.0
        %2251 = vmatprep.subr.mxu0 0.0
        %2252 = vmatpush1.msra.mxu0 0.0
        %2253 = vmatprep.subr.mxu0 0.0
        %2254 = vmatpush1.msra.mxu0 %v2218
        %2255 = vmatprep.subr.mxu0 0.0
        %2256 = vmatpush2.msra.mxu0 0.0
        %2257 = vmatprep.subr.mxu0 0.0
        %2258 = vmatpush2.msra.mxu0 0.0
        %2259 = vmatprep.subr.mxu0 0.0
        %2260 = vmatpush2.msra.mxu0 0.0
        %2261 = vmatprep.subr.mxu0 0.0
        %2262 = vmatpush2.msra.mxu0 0.0
        %2263 = vmatprep.subr.mxu0 0.0
        %2264 = vmatpush2.msra.mxu0 0.0
        %2265 = vmatprep.subr.mxu0 0.0
        %2266 = vmatpush2.msra.mxu0 0.0
        %2267 = vmatprep.subr.mxu0 0.0
        %2268 = vmatpush2.msra.mxu0 0.0
        %2269 = vmatprep.subr.mxu0 0.0
        %2270 = vmatpush2.msra.mxu0 0.0
        %2271 = vmatprep.subr.mxu0 0.0
        %2272 = vmatpush2.msra.mxu0 0.0
        %2273 = vmatprep.subr.mxu0 0.0
        %2274 = vmatpush2.msra.mxu0 0.0
        %2275 = vmatprep.subr.mxu0 0.0
        %2276 = vmatpush2.msra.mxu0 0.0
        %2277 = vmatprep.subr.mxu0 0.0
        %2278 = vmatpush2.msra.mxu0 0.0
        %2279 = vmatprep.subr.mxu0 0.0
        %2280 = vmatpush2.msra.mxu0 0.0
        %2281 = vmatprep.subr.mxu0 0.0
        %2282 = vmatpush2.msra.mxu0 0.0
        %2283 = vmatprep.subr.mxu0 0.0
        %2284 = vmatpush2.msra.mxu0 0.0
        %2285 = vmatprep.subr.mxu0 0.0
        %2286 = vmatpush2.msra.mxu0 0.0
        %2287 = vmatprep.mubr.f32.mxu0 0.0
        %2288 = vmatmul.mubr.f32.gmra.mxu0 %v2221
        %v2289 = vpop.f32.mrf.mxu0
        %v2290 = vadd.f32 0.0, %v2289
        %v2291 = vpop.f32.mrf.mxu0
        %2292 = vdwg.mxu0
        %v2294 = vsel %vm852, %v2290, 0
        %2296 = vmatprep.subr.mxu0 0.0
        %2297 = vmatpush1.msra.mxu0 0.0
        %2298 = vmatprep.subr.mxu0 0.0
        %2299 = vmatpush1.msra.mxu0 0.0
        %2300 = vmatprep.subr.mxu0 0.0
        %2301 = vmatpush1.msra.mxu0 0.0
        %2302 = vmatprep.subr.mxu0 0.0
        %2303 = vmatpush1.msra.mxu0 0.0
        %2304 = vmatprep.subr.mxu0 0.0
        %2305 = vmatpush1.msra.mxu0 0.0
        %2306 = vmatprep.subr.mxu0 0.0
        %2307 = vmatpush1.msra.mxu0 0.0
        %2308 = vmatprep.subr.mxu0 0.0
        %2309 = vmatpush1.msra.mxu0 0.0
        %2310 = vmatprep.subr.mxu0 0.0
        %2311 = vmatpush1.msra.mxu0 0.0
        %2312 = vmatprep.subr.mxu0 0.0
        %2313 = vmatpush1.msra.mxu0 0.0
        %2314 = vmatprep.subr.mxu0 0.0
        %2315 = vmatpush1.msra.mxu0 0.0
        %2316 = vmatprep.subr.mxu0 0.0
        %2317 = vmatpush1.msra.mxu0 0.0
        %2318 = vmatprep.subr.mxu0 0.0
        %2319 = vmatpush1.msra.mxu0 0.0
        %2320 = vmatprep.subr.mxu0 0.0
        %2321 = vmatpush1.msra.mxu0 0.0
        %2322 = vmatprep.subr.mxu0 0.0
        %2323 = vmatpush1.msra.mxu0 0.0
        %2324 = vmatprep.subr.mxu0 0.0
        %2325 = vmatpush1.msra.mxu0 0.0
        %2326 = vmatprep.subr.mxu0 0.0
        %2327 = vmatpush1.msra.mxu0 %v1022
        %2328 = vmatprep.subr.mxu0 0.0
        %2329 = vmatpush2.msra.mxu0 0.0
        %2330 = vmatprep.subr.mxu0 0.0
        %2331 = vmatpush2.msra.mxu0 0.0
        %2332 = vmatprep.subr.mxu0 0.0
        %2333 = vmatpush2.msra.mxu0 0.0
        %2334 = vmatprep.subr.mxu0 0.0
        %2335 = vmatpush2.msra.mxu0 0.0
        %2336 = vmatprep.subr.mxu0 0.0
        %2337 = vmatpush2.msra.mxu0 0.0
        %2338 = vmatprep.subr.mxu0 0.0
        %2339 = vmatpush2.msra.mxu0 0.0
        %2340 = vmatprep.subr.mxu0 0.0
        %2341 = vmatpush2.msra.mxu0 0.0
        %2342 = vmatprep.subr.mxu0 0.0
        %2343 = vmatpush2.msra.mxu0 0.0
        %2344 = vmatprep.subr.mxu0 0.0
        %2345 = vmatpush2.msra.mxu0 0.0
        %2346 = vmatprep.subr.mxu0 0.0
        %2347 = vmatpush2.msra.mxu0 0.0
        %2348 = vmatprep.subr.mxu0 0.0
        %2349 = vmatpush2.msra.mxu0 0.0
        %2350 = vmatprep.subr.mxu0 0.0
        %2351 = vmatpush2.msra.mxu0 0.0
        %2352 = vmatprep.subr.mxu0 0.0
        %2353 = vmatpush2.msra.mxu0 0.0
        %2354 = vmatprep.subr.mxu0 0.0
        %2355 = vmatpush2.msra.mxu0 0.0
        %2356 = vmatprep.subr.mxu0 0.0
        %2357 = vmatpush2.msra.mxu0 0.0
        %2358 = vmatprep.subr.mxu0 0.0
        %2359 = vmatpush2.msra.mxu0 0.0
        %2360 = vmatprep.mubr.f32.mxu0 0.0
        %2361 = vmatmul.mubr.f32.gmra.mxu0 %v2294
        %v2362 = vpop.f32.mrf.mxu0
        %v2363 = vadd.f32 0.0, %v2362
        %v2364 = vpop.f32.mrf.mxu0
        %2365 = vdwg.mxu0
        %v2366 = vadd.f32 %v1100, %v2363
        %2367 = vrot.lane.b32.xlu0 %v2124, 120
        %v2368 = vpop.permute.xlu0 %2367
        %2369 = vrot.lane.b32.xlu0 %v2124, 88
        %v2370 = vpop.permute.xlu0 %2369
        %v2371 = vsel %vm852, %v2368, 0
        %v2373 = vsel %vm852, %v2370, 0
        %2375 = vmatprep.subr.mxu0 0.0
        %2376 = vmatpush1.xpose.msra.mxu0 0.0
        %2377 = vmatprep.subr.mxu0 0.0
        %2378 = vmatpush1.xpose.msra.mxu0 0.0
        %2379 = vmatprep.subr.mxu0 0.0
        %2380 = vmatpush1.xpose.msra.mxu0 0.0
        %2381 = vmatprep.subr.mxu0 0.0
        %2382 = vmatpush1.xpose.msra.mxu0 0.0
        %2383 = vmatprep.subr.mxu0 0.0
        %2384 = vmatpush1.xpose.msra.mxu0 0.0
        %2385 = vmatprep.subr.mxu0 0.0
        %2386 = vmatpush1.xpose.msra.mxu0 0.0
        %2387 = vmatprep.subr.mxu0 0.0
        %2388 = vmatpush1.xpose.msra.mxu0 0.0
        %2389 = vmatprep.subr.mxu0 0.0
        %2390 = vmatpush1.xpose.msra.mxu0 0.0
        %2391 = vmatprep.subr.mxu0 0.0
        %2392 = vmatpush1.xpose.msra.mxu0 0.0
        %2393 = vmatprep.subr.mxu0 0.0
        %2394 = vmatpush1.xpose.msra.mxu0 0.0
        %2395 = vmatprep.subr.mxu0 0.0
        %2396 = vmatpush1.xpose.msra.mxu0 0.0
        %2397 = vmatprep.subr.mxu0 0.0
        %2398 = vmatpush1.xpose.msra.mxu0 0.0
        %2399 = vmatprep.subr.mxu0 0.0
        %2400 = vmatpush1.xpose.msra.mxu0 0.0
        %2401 = vmatprep.subr.mxu0 0.0
        %2402 = vmatpush1.xpose.msra.mxu0 0.0
        %2403 = vmatprep.subr.mxu0 0.0
        %2404 = vmatpush1.xpose.msra.mxu0 0.0
        %2405 = vmatprep.subr.mxu0 0.0
        %2406 = vmatpush1.xpose.msra.mxu0 %v2373
        %2407 = vmatprep.subr.mxu0 0.0
        %2408 = vmatpush2.xpose.msra.mxu0 0.0
        %2409 = vmatprep.subr.mxu0 0.0
        %2410 = vmatpush2.xpose.msra.mxu0 0.0
        %2411 = vmatprep.subr.mxu0 0.0
        %2412 = vmatpush2.xpose.msra.mxu0 0.0
        %2413 = vmatprep.subr.mxu0 0.0
        %2414 = vmatpush2.xpose.msra.mxu0 0.0
        %2415 = vmatprep.subr.mxu0 0.0
        %2416 = vmatpush2.xpose.msra.mxu0 0.0
        %2417 = vmatprep.subr.mxu0 0.0
        %2418 = vmatpush2.xpose.msra.mxu0 0.0
        %2419 = vmatprep.subr.mxu0 0.0
        %2420 = vmatpush2.xpose.msra.mxu0 0.0
        %2421 = vmatprep.subr.mxu0 0.0
        %2422 = vmatpush2.xpose.msra.mxu0 0.0
        %2423 = vmatprep.subr.mxu0 0.0
        %2424 = vmatpush2.xpose.msra.mxu0 0.0
        %2425 = vmatprep.subr.mxu0 0.0
        %2426 = vmatpush2.xpose.msra.mxu0 0.0
        %2427 = vmatprep.subr.mxu0 0.0
        %2428 = vmatpush2.xpose.msra.mxu0 0.0
        %2429 = vmatprep.subr.mxu0 0.0
        %2430 = vmatpush2.xpose.msra.mxu0 0.0
        %2431 = vmatprep.subr.mxu0 0.0
        %2432 = vmatpush2.xpose.msra.mxu0 0.0
        %2433 = vmatprep.subr.mxu0 0.0
        %2434 = vmatpush2.xpose.msra.mxu0 0.0
        %2435 = vmatprep.subr.mxu0 0.0
        %2436 = vmatpush2.xpose.msra.mxu0 0.0
        %2437 = vmatprep.subr.mxu0 0.0
        %2438 = vmatpush2.xpose.msra.mxu0 0.0
        %2439 = vmatprep.mubr.f32.mxu0 0.0
        %2440 = vmatmul.mubr.f32.gmra.mxu0 %v2371
        %v2441 = vpop.f32.mrf.mxu0
        %v2442 = vadd.f32 0.0, %v2441
        %v2443 = vpop.f32.mrf.mxu0
        %2444 = vdwg.mxu0
        %v2445 = vmul.f32 %v2442, 0.35355338
        %v2446 = vadd.f32 %v2445, %v932
        %v2447 = vsel %vm852, %v2446, -inf
        %2448 = vmax.xlane.f32.xlu0 %v2447
        %v2449 = vpop.xlane.xlu0 %2448
        %v2450 = vsub.f32 %v2446, %v2449
        %v2451 = vmul.f32 %v2450, 1.442695
        %v2452 = vpow.pop %v2451
        %v2453 = vsel %vm852, %v2452, 0.0
        %2454 = vadd.xlane.f32.xlu0 %v2453
        %v2455 = vpop.xlane.xlu0 %2454
        %v2456 = vrcp.pop %v2455
        %v2457 = vmul.f32 %v2452, %v2456
        %2458 = vrot.lane.b32.xlu0 %v2124, 56
        %v2459 = vpop.permute.xlu0 %2458
        %v2462 = vsel %vm852, %v2457, 0
        %2464 = vmatprep.subr.mxu0 0.0
        %2465 = vmatpush1.msra.mxu0 0.0
        %2466 = vmatprep.subr.mxu0 0.0
        %2467 = vmatpush1.msra.mxu0 0.0
        %2468 = vmatprep.subr.mxu0 0.0
        %2469 = vmatpush1.msra.mxu0 0.0
        %2470 = vmatprep.subr.mxu0 0.0
        %2471 = vmatpush1.msra.mxu0 0.0
        %2472 = vmatprep.subr.mxu0 0.0
        %2473 = vmatpush1.msra.mxu0 0.0
        %2474 = vmatprep.subr.mxu0 0.0
        %2475 = vmatpush1.msra.mxu0 0.0
        %2476 = vmatprep.subr.mxu0 0.0
        %2477 = vmatpush1.msra.mxu0 0.0
        %2478 = vmatprep.subr.mxu0 0.0
        %2479 = vmatpush1.msra.mxu0 0.0
        %2480 = vmatprep.subr.mxu0 0.0
        %2481 = vmatpush1.msra.mxu0 0.0
        %2482 = vmatprep.subr.mxu0 0.0
        %2483 = vmatpush1.msra.mxu0 0.0
        %2484 = vmatprep.subr.mxu0 0.0
        %2485 = vmatpush1.msra.mxu0 0.0
        %2486 = vmatprep.subr.mxu0 0.0
        %2487 = vmatpush1.msra.mxu0 0.0
        %2488 = vmatprep.subr.mxu0 0.0
        %2489 = vmatpush1.msra.mxu0 0.0
        %2490 = vmatprep.subr.mxu0 0.0
        %2491 = vmatpush1.msra.mxu0 0.0
        %2492 = vmatprep.subr.mxu0 0.0
        %2493 = vmatpush1.msra.mxu0 0.0
        %2494 = vmatprep.subr.mxu0 0.0
        %2495 = vmatpush1.msra.mxu0 %v2459
        %2496 = vmatprep.subr.mxu0 0.0
        %2497 = vmatpush2.msra.mxu0 0.0
        %2498 = vmatprep.subr.mxu0 0.0
        %2499 = vmatpush2.msra.mxu0 0.0
        %2500 = vmatprep.subr.mxu0 0.0
        %2501 = vmatpush2.msra.mxu0 0.0
        %2502 = vmatprep.subr.mxu0 0.0
        %2503 = vmatpush2.msra.mxu0 0.0
        %2504 = vmatprep.subr.mxu0 0.0
        %2505 = vmatpush2.msra.mxu0 0.0
        %2506 = vmatprep.subr.mxu0 0.0
        %2507 = vmatpush2.msra.mxu0 0.0
        %2508 = vmatprep.subr.mxu0 0.0
        %2509 = vmatpush2.msra.mxu0 0.0
        %2510 = vmatprep.subr.mxu0 0.0
        %2511 = vmatpush2.msra.mxu0 0.0
        %2512 = vmatprep.subr.mxu0 0.0
        %2513 = vmatpush2.msra.mxu0 0.0
        %2514 = vmatprep.subr.mxu0 0.0
        %2515 = vmatpush2.msra.mxu0 0.0
        %2516 = vmatprep.subr.mxu0 0.0
        %2517 = vmatpush2.msra.mxu0 0.0
        %2518 = vmatprep.subr.mxu0 0.0
        %2519 = vmatpush2.msra.mxu0 0.0
        %2520 = vmatprep.subr.mxu0 0.0
        %2521 = vmatpush2.msra.mxu0 0.0
        %2522 = vmatprep.subr.mxu0 0.0
        %2523 = vmatpush2.msra.mxu0 0.0
        %2524 = vmatprep.subr.mxu0 0.0
        %2525 = vmatpush2.msra.mxu0 0.0
        %2526 = vmatprep.subr.mxu0 0.0
        %2527 = vmatpush2.msra.mxu0 0.0
        %2528 = vmatprep.mubr.f32.mxu0 0.0
        %2529 = vmatmul.mubr.f32.gmra.mxu0 %v2462
        %v2530 = vpop.f32.mrf.mxu0
        %v2531 = vadd.f32 0.0, %v2530
        %v2532 = vpop.f32.mrf.mxu0
        %2533 = vdwg.mxu0
        %v2535 = vsel %vm852, %v2531, 0
        %2537 = vmatprep.subr.mxu0 0.0
        %2538 = vmatpush1.msra.mxu0 0.0
        %2539 = vmatprep.subr.mxu0 0.0
        %2540 = vmatpush1.msra.mxu0 0.0
        %2541 = vmatprep.subr.mxu0 0.0
        %2542 = vmatpush1.msra.mxu0 0.0
        %2543 = vmatprep.subr.mxu0 0.0
        %2544 = vmatpush1.msra.mxu0 0.0
        %2545 = vmatprep.subr.mxu0 0.0
        %2546 = vmatpush1.msra.mxu0 0.0
        %2547 = vmatprep.subr.mxu0 0.0
        %2548 = vmatpush1.msra.mxu0 0.0
        %2549 = vmatprep.subr.mxu0 0.0
        %2550 = vmatpush1.msra.mxu0 0.0
        %2551 = vmatprep.subr.mxu0 0.0
        %2552 = vmatpush1.msra.mxu0 0.0
        %2553 = vmatprep.subr.mxu0 0.0
        %2554 = vmatpush1.msra.mxu0 0.0
        %2555 = vmatprep.subr.mxu0 0.0
        %2556 = vmatpush1.msra.mxu0 0.0
        %2557 = vmatprep.subr.mxu0 0.0
        %2558 = vmatpush1.msra.mxu0 0.0
        %2559 = vmatprep.subr.mxu0 0.0
        %2560 = vmatpush1.msra.mxu0 0.0
        %2561 = vmatprep.subr.mxu0 0.0
        %2562 = vmatpush1.msra.mxu0 0.0
        %2563 = vmatprep.subr.mxu0 0.0
        %2564 = vmatpush1.msra.mxu0 0.0
        %2565 = vmatprep.subr.mxu0 0.0
        %2566 = vmatpush1.msra.mxu0 0.0
        %2567 = vmatprep.subr.mxu0 0.0
        %2568 = vmatpush1.msra.mxu0 %v1270
        %2569 = vmatprep.subr.mxu0 0.0
        %2570 = vmatpush2.msra.mxu0 0.0
        %2571 = vmatprep.subr.mxu0 0.0
        %2572 = vmatpush2.msra.mxu0 0.0
        %2573 = vmatprep.subr.mxu0 0.0
        %2574 = vmatpush2.msra.mxu0 0.0
        %2575 = vmatprep.subr.mxu0 0.0
        %2576 = vmatpush2.msra.mxu0 0.0
        %2577 = vmatprep.subr.mxu0 0.0
        %2578 = vmatpush2.msra.mxu0 0.0
        %2579 = vmatprep.subr.mxu0 0.0
        %2580 = vmatpush2.msra.mxu0 0.0
        %2581 = vmatprep.subr.mxu0 0.0
        %2582 = vmatpush2.msra.mxu0 0.0
        %2583 = vmatprep.subr.mxu0 0.0
        %2584 = vmatpush2.msra.mxu0 0.0
        %2585 = vmatprep.subr.mxu0 0.0
        %2586 = vmatpush2.msra.mxu0 0.0
        %2587 = vmatprep.subr.mxu0 0.0
        %2588 = vmatpush2.msra.mxu0 0.0
        %2589 = vmatprep.subr.mxu0 0.0
        %2590 = vmatpush2.msra.mxu0 0.0
        %2591 = vmatprep.subr.mxu0 0.0
        %2592 = vmatpush2.msra.mxu0 0.0
        %2593 = vmatprep.subr.mxu0 0.0
        %2594 = vmatpush2.msra.mxu0 0.0
        %2595 = vmatprep.subr.mxu0 0.0
        %2596 = vmatpush2.msra.mxu0 0.0
        %2597 = vmatprep.subr.mxu0 0.0
        %2598 = vmatpush2.msra.mxu0 0.0
        %2599 = vmatprep.subr.mxu0 0.0
        %2600 = vmatpush2.msra.mxu0 0.0
        %2601 = vmatprep.mubr.f32.mxu0 0.0
        %2602 = vmatmul.mubr.f32.gmra.mxu0 %v2535
        %v2603 = vpop.f32.mrf.mxu0
        %v2604 = vadd.f32 0.0, %v2603
        %v2605 = vpop.f32.mrf.mxu0
        %2606 = vdwg.mxu0
        %v2607 = vadd.f32 %v2366, %v2604
        %2608 = vrot.lane.b32.xlu0 %v2124, 112
        %v2609 = vpop.permute.xlu0 %2608
        %2610 = vrot.lane.b32.xlu0 %v2124, 80
        %v2611 = vpop.permute.xlu0 %2610
        %v2612 = vsel %vm852, %v2609, 0
        %v2614 = vsel %vm852, %v2611, 0
        %2616 = vmatprep.subr.mxu0 0.0
        %2617 = vmatpush1.xpose.msra.mxu0 0.0
        %2618 = vmatprep.subr.mxu0 0.0
        %2619 = vmatpush1.xpose.msra.mxu0 0.0
        %2620 = vmatprep.subr.mxu0 0.0
        %2621 = vmatpush1.xpose.msra.mxu0 0.0
        %2622 = vmatprep.subr.mxu0 0.0
        %2623 = vmatpush1.xpose.msra.mxu0 0.0
        %2624 = vmatprep.subr.mxu0 0.0
        %2625 = vmatpush1.xpose.msra.mxu0 0.0
        %2626 = vmatprep.subr.mxu0 0.0
        %2627 = vmatpush1.xpose.msra.mxu0 0.0
        %2628 = vmatprep.subr.mxu0 0.0
        %2629 = vmatpush1.xpose.msra.mxu0 0.0
        %2630 = vmatprep.subr.mxu0 0.0
        %2631 = vmatpush1.xpose.msra.mxu0 0.0
        %2632 = vmatprep.subr.mxu0 0.0
        %2633 = vmatpush1.xpose.msra.mxu0 0.0
        %2634 = vmatprep.subr.mxu0 0.0
        %2635 = vmatpush1.xpose.msra.mxu0 0.0
        %2636 = vmatprep.subr.mxu0 0.0
        %2637 = vmatpush1.xpose.msra.mxu0 0.0
        %2638 = vmatprep.subr.mxu0 0.0
        %2639 = vmatpush1.xpose.msra.mxu0 0.0
        %2640 = vmatprep.subr.mxu0 0.0
        %2641 = vmatpush1.xpose.msra.mxu0 0.0
        %2642 = vmatprep.subr.mxu0 0.0
        %2643 = vmatpush1.xpose.msra.mxu0 0.0
        %2644 = vmatprep.subr.mxu0 0.0
        %2645 = vmatpush1.xpose.msra.mxu0 0.0
        %2646 = vmatprep.subr.mxu0 0.0
        %2647 = vmatpush1.xpose.msra.mxu0 %v2614
        %2648 = vmatprep.subr.mxu0 0.0
        %2649 = vmatpush2.xpose.msra.mxu0 0.0
        %2650 = vmatprep.subr.mxu0 0.0
        %2651 = vmatpush2.xpose.msra.mxu0 0.0
        %2652 = vmatprep.subr.mxu0 0.0
        %2653 = vmatpush2.xpose.msra.mxu0 0.0
        %2654 = vmatprep.subr.mxu0 0.0
        %2655 = vmatpush2.xpose.msra.mxu0 0.0
        %2656 = vmatprep.subr.mxu0 0.0
        %2657 = vmatpush2.xpose.msra.mxu0 0.0
        %2658 = vmatprep.subr.mxu0 0.0
        %2659 = vmatpush2.xpose.msra.mxu0 0.0
        %2660 = vmatprep.subr.mxu0 0.0
        %2661 = vmatpush2.xpose.msra.mxu0 0.0
        %2662 = vmatprep.subr.mxu0 0.0
        %2663 = vmatpush2.xpose.msra.mxu0 0.0
        %2664 = vmatprep.subr.mxu0 0.0
        %2665 = vmatpush2.xpose.msra.mxu0 0.0
        %2666 = vmatprep.subr.mxu0 0.0
        %2667 = vmatpush2.xpose.msra.mxu0 0.0
        %2668 = vmatprep.subr.mxu0 0.0
        %2669 = vmatpush2.xpose.msra.mxu0 0.0
        %2670 = vmatprep.subr.mxu0 0.0
        %2671 = vmatpush2.xpose.msra.mxu0 0.0
        %2672 = vmatprep.subr.mxu0 0.0
        %2673 = vmatpush2.xpose.msra.mxu0 0.0
        %2674 = vmatprep.subr.mxu0 0.0
        %2675 = vmatpush2.xpose.msra.mxu0 0.0
        %2676 = vmatprep.subr.mxu0 0.0
        %2677 = vmatpush2.xpose.msra.mxu0 0.0
        %2678 = vmatprep.subr.mxu0 0.0
        %2679 = vmatpush2.xpose.msra.mxu0 0.0
        %2680 = vmatprep.mubr.f32.mxu0 0.0
        %2681 = vmatmul.mubr.f32.gmra.mxu0 %v2612
        %v2682 = vpop.f32.mrf.mxu0
        %v2683 = vadd.f32 0.0, %v2682
        %v2684 = vpop.f32.mrf.mxu0
        %2685 = vdwg.mxu0
        %v2686 = vmul.f32 %v2683, 0.35355338
        %v2687 = vadd.f32 %v2686, %v932
        %v2688 = vsel %vm852, %v2687, -inf
        %2689 = vmax.xlane.f32.xlu0 %v2688
        %v2690 = vpop.xlane.xlu0 %2689
        %v2691 = vsub.f32 %v2687, %v2690
        %v2692 = vmul.f32 %v2691, 1.442695
        %v2693 = vpow.pop %v2692
        %v2694 = vsel %vm852, %v2693, 0.0
        %2695 = vadd.xlane.f32.xlu0 %v2694
        %v2696 = vpop.xlane.xlu0 %2695
        %v2697 = vrcp.pop %v2696
        %v2698 = vmul.f32 %v2693, %v2697
        %2699 = vrot.lane.b32.xlu0 %v2124, 48
        %v2700 = vpop.permute.xlu0 %2699
        %v2703 = vsel %vm852, %v2698, 0
        %2705 = vmatprep.subr.mxu0 0.0
        %2706 = vmatpush1.msra.mxu0 0.0
        %2707 = vmatprep.subr.mxu0 0.0
        %2708 = vmatpush1.msra.mxu0 0.0
        %2709 = vmatprep.subr.mxu0 0.0
        %2710 = vmatpush1.msra.mxu0 0.0
        %2711 = vmatprep.subr.mxu0 0.0
        %2712 = vmatpush1.msra.mxu0 0.0
        %2713 = vmatprep.subr.mxu0 0.0
        %2714 = vmatpush1.msra.mxu0 0.0
        %2715 = vmatprep.subr.mxu0 0.0
        %2716 = vmatpush1.msra.mxu0 0.0
        %2717 = vmatprep.subr.mxu0 0.0
        %2718 = vmatpush1.msra.mxu0 0.0
        %2719 = vmatprep.subr.mxu0 0.0
        %2720 = vmatpush1.msra.mxu0 0.0
        %2721 = vmatprep.subr.mxu0 0.0
        %2722 = vmatpush1.msra.mxu0 0.0
        %2723 = vmatprep.subr.mxu0 0.0
        %2724 = vmatpush1.msra.mxu0 0.0
        %2725 = vmatprep.subr.mxu0 0.0
        %2726 = vmatpush1.msra.mxu0 0.0
        %2727 = vmatprep.subr.mxu0 0.0
        %2728 = vmatpush1.msra.mxu0 0.0
        %2729 = vmatprep.subr.mxu0 0.0
        %2730 = vmatpush1.msra.mxu0 0.0
        %2731 = vmatprep.subr.mxu0 0.0
        %2732 = vmatpush1.msra.mxu0 0.0
        %2733 = vmatprep.subr.mxu0 0.0
        %2734 = vmatpush1.msra.mxu0 0.0
        %2735 = vmatprep.subr.mxu0 0.0
        %2736 = vmatpush1.msra.mxu0 %v2700
        %2737 = vmatprep.subr.mxu0 0.0
        %2738 = vmatpush2.msra.mxu0 0.0
        %2739 = vmatprep.subr.mxu0 0.0
        %2740 = vmatpush2.msra.mxu0 0.0
        %2741 = vmatprep.subr.mxu0 0.0
        %2742 = vmatpush2.msra.mxu0 0.0
        %2743 = vmatprep.subr.mxu0 0.0
        %2744 = vmatpush2.msra.mxu0 0.0
        %2745 = vmatprep.subr.mxu0 0.0
        %2746 = vmatpush2.msra.mxu0 0.0
        %2747 = vmatprep.subr.mxu0 0.0
        %2748 = vmatpush2.msra.mxu0 0.0
        %2749 = vmatprep.subr.mxu0 0.0
        %2750 = vmatpush2.msra.mxu0 0.0
        %2751 = vmatprep.subr.mxu0 0.0
        %2752 = vmatpush2.msra.mxu0 0.0
        %2753 = vmatprep.subr.mxu0 0.0
        %2754 = vmatpush2.msra.mxu0 0.0
        %2755 = vmatprep.subr.mxu0 0.0
        %2756 = vmatpush2.msra.mxu0 0.0
        %2757 = vmatprep.subr.mxu0 0.0
        %2758 = vmatpush2.msra.mxu0 0.0
        %2759 = vmatprep.subr.mxu0 0.0
        %2760 = vmatpush2.msra.mxu0 0.0
        %2761 = vmatprep.subr.mxu0 0.0
        %2762 = vmatpush2.msra.mxu0 0.0
        %2763 = vmatprep.subr.mxu0 0.0
        %2764 = vmatpush2.msra.mxu0 0.0
        %2765 = vmatprep.subr.mxu0 0.0
        %2766 = vmatpush2.msra.mxu0 0.0
        %2767 = vmatprep.subr.mxu0 0.0
        %2768 = vmatpush2.msra.mxu0 0.0
        %2769 = vmatprep.mubr.f32.mxu0 0.0
        %2770 = vmatmul.mubr.f32.gmra.mxu0 %v2703
        %v2771 = vpop.f32.mrf.mxu0
        %v2772 = vadd.f32 0.0, %v2771
        %v2773 = vpop.f32.mrf.mxu0
        %2774 = vdwg.mxu0
        %v2776 = vsel %vm852, %v2772, 0
        %2778 = vmatprep.subr.mxu0 0.0
        %2779 = vmatpush1.msra.mxu0 0.0
        %2780 = vmatprep.subr.mxu0 0.0
        %2781 = vmatpush1.msra.mxu0 0.0
        %2782 = vmatprep.subr.mxu0 0.0
        %2783 = vmatpush1.msra.mxu0 0.0
        %2784 = vmatprep.subr.mxu0 0.0
        %2785 = vmatpush1.msra.mxu0 0.0
        %2786 = vmatprep.subr.mxu0 0.0
        %2787 = vmatpush1.msra.mxu0 0.0
        %2788 = vmatprep.subr.mxu0 0.0
        %2789 = vmatpush1.msra.mxu0 0.0
        %2790 = vmatprep.subr.mxu0 0.0
        %2791 = vmatpush1.msra.mxu0 0.0
        %2792 = vmatprep.subr.mxu0 0.0
        %2793 = vmatpush1.msra.mxu0 0.0
        %2794 = vmatprep.subr.mxu0 0.0
        %2795 = vmatpush1.msra.mxu0 0.0
        %2796 = vmatprep.subr.mxu0 0.0
        %2797 = vmatpush1.msra.mxu0 0.0
        %2798 = vmatprep.subr.mxu0 0.0
        %2799 = vmatpush1.msra.mxu0 0.0
        %2800 = vmatprep.subr.mxu0 0.0
        %2801 = vmatpush1.msra.mxu0 0.0
        %2802 = vmatprep.subr.mxu0 0.0
        %2803 = vmatpush1.msra.mxu0 0.0
        %2804 = vmatprep.subr.mxu0 0.0
        %2805 = vmatpush1.msra.mxu0 0.0
        %2806 = vmatprep.subr.mxu0 0.0
        %2807 = vmatpush1.msra.mxu0 0.0
        %2808 = vmatprep.subr.mxu0 0.0
        %2809 = vmatpush1.msra.mxu0 %v1512
        %2810 = vmatprep.subr.mxu0 0.0
        %2811 = vmatpush2.msra.mxu0 0.0
        %2812 = vmatprep.subr.mxu0 0.0
        %2813 = vmatpush2.msra.mxu0 0.0
        %2814 = vmatprep.subr.mxu0 0.0
        %2815 = vmatpush2.msra.mxu0 0.0
        %2816 = vmatprep.subr.mxu0 0.0
        %2817 = vmatpush2.msra.mxu0 0.0
        %2818 = vmatprep.subr.mxu0 0.0
        %2819 = vmatpush2.msra.mxu0 0.0
        %2820 = vmatprep.subr.mxu0 0.0
        %2821 = vmatpush2.msra.mxu0 0.0
        %2822 = vmatprep.subr.mxu0 0.0
        %2823 = vmatpush2.msra.mxu0 0.0
        %2824 = vmatprep.subr.mxu0 0.0
        %2825 = vmatpush2.msra.mxu0 0.0
        %2826 = vmatprep.subr.mxu0 0.0
        %2827 = vmatpush2.msra.mxu0 0.0
        %2828 = vmatprep.subr.mxu0 0.0
        %2829 = vmatpush2.msra.mxu0 0.0
        %2830 = vmatprep.subr.mxu0 0.0
        %2831 = vmatpush2.msra.mxu0 0.0
        %2832 = vmatprep.subr.mxu0 0.0
        %2833 = vmatpush2.msra.mxu0 0.0
        %2834 = vmatprep.subr.mxu0 0.0
        %2835 = vmatpush2.msra.mxu0 0.0
        %2836 = vmatprep.subr.mxu0 0.0
        %2837 = vmatpush2.msra.mxu0 0.0
        %2838 = vmatprep.subr.mxu0 0.0
        %2839 = vmatpush2.msra.mxu0 0.0
        %2840 = vmatprep.subr.mxu0 0.0
        %2841 = vmatpush2.msra.mxu0 0.0
        %2842 = vmatprep.mubr.f32.mxu0 0.0
        %2843 = vmatmul.mubr.f32.gmra.mxu0 %v2776
        %v2844 = vpop.f32.mrf.mxu0
        %v2845 = vadd.f32 0.0, %v2844
        %v2846 = vpop.f32.mrf.mxu0
        %2847 = vdwg.mxu0
        %v2848 = vadd.f32 %v2607, %v2845
        %2849 = vrot.lane.b32.xlu0 %v2124, 104
        %v2850 = vpop.permute.xlu0 %2849
        %2851 = vrot.lane.b32.xlu0 %v2124, 72
        %v2852 = vpop.permute.xlu0 %2851
        %v2853 = vsel %vm852, %v2850, 0
        %v2855 = vsel %vm852, %v2852, 0
        %2857 = vmatprep.subr.mxu0 0.0
        %2858 = vmatpush1.xpose.msra.mxu0 0.0
        %2859 = vmatprep.subr.mxu0 0.0
        %2860 = vmatpush1.xpose.msra.mxu0 0.0
        %2861 = vmatprep.subr.mxu0 0.0
        %2862 = vmatpush1.xpose.msra.mxu0 0.0
        %2863 = vmatprep.subr.mxu0 0.0
        %2864 = vmatpush1.xpose.msra.mxu0 0.0
        %2865 = vmatprep.subr.mxu0 0.0
        %2866 = vmatpush1.xpose.msra.mxu0 0.0
        %2867 = vmatprep.subr.mxu0 0.0
        %2868 = vmatpush1.xpose.msra.mxu0 0.0
        %2869 = vmatprep.subr.mxu0 0.0
        %2870 = vmatpush1.xpose.msra.mxu0 0.0
        %2871 = vmatprep.subr.mxu0 0.0
        %2872 = vmatpush1.xpose.msra.mxu0 0.0
        %2873 = vmatprep.subr.mxu0 0.0
        %2874 = vmatpush1.xpose.msra.mxu0 0.0
        %2875 = vmatprep.subr.mxu0 0.0
        %2876 = vmatpush1.xpose.msra.mxu0 0.0
        %2877 = vmatprep.subr.mxu0 0.0
        %2878 = vmatpush1.xpose.msra.mxu0 0.0
        %2879 = vmatprep.subr.mxu0 0.0
        %2880 = vmatpush1.xpose.msra.mxu0 0.0
        %2881 = vmatprep.subr.mxu0 0.0
        %2882 = vmatpush1.xpose.msra.mxu0 0.0
        %2883 = vmatprep.subr.mxu0 0.0
        %2884 = vmatpush1.xpose.msra.mxu0 0.0
        %2885 = vmatprep.subr.mxu0 0.0
        %2886 = vmatpush1.xpose.msra.mxu0 0.0
        %2887 = vmatprep.subr.mxu0 0.0
        %2888 = vmatpush1.xpose.msra.mxu0 %v2855
        %2889 = vmatprep.subr.mxu0 0.0
        %2890 = vmatpush2.xpose.msra.mxu0 0.0
        %2891 = vmatprep.subr.mxu0 0.0
        %2892 = vmatpush2.xpose.msra.mxu0 0.0
        %2893 = vmatprep.subr.mxu0 0.0
        %2894 = vmatpush2.xpose.msra.mxu0 0.0
        %2895 = vmatprep.subr.mxu0 0.0
        %2896 = vmatpush2.xpose.msra.mxu0 0.0
        %2897 = vmatprep.subr.mxu0 0.0
        %2898 = vmatpush2.xpose.msra.mxu0 0.0
        %2899 = vmatprep.subr.mxu0 0.0
        %2900 = vmatpush2.xpose.msra.mxu0 0.0
        %2901 = vmatprep.subr.mxu0 0.0
        %2902 = vmatpush2.xpose.msra.mxu0 0.0
        %2903 = vmatprep.subr.mxu0 0.0
        %2904 = vmatpush2.xpose.msra.mxu0 0.0
        %2905 = vmatprep.subr.mxu0 0.0
        %2906 = vmatpush2.xpose.msra.mxu0 0.0
        %2907 = vmatprep.subr.mxu0 0.0
        %2908 = vmatpush2.xpose.msra.mxu0 0.0
        %2909 = vmatprep.subr.mxu0 0.0
        %2910 = vmatpush2.xpose.msra.mxu0 0.0
        %2911 = vmatprep.subr.mxu0 0.0
        %2912 = vmatpush2.xpose.msra.mxu0 0.0
        %2913 = vmatprep.subr.mxu0 0.0
        %2914 = vmatpush2.xpose.msra.mxu0 0.0
        %2915 = vmatprep.subr.mxu0 0.0
        %2916 = vmatpush2.xpose.msra.mxu0 0.0
        %2917 = vmatprep.subr.mxu0 0.0
        %2918 = vmatpush2.xpose.msra.mxu0 0.0
        %2919 = vmatprep.subr.mxu0 0.0
        %2920 = vmatpush2.xpose.msra.mxu0 0.0
        %2921 = vmatprep.mubr.f32.mxu0 0.0
        %2922 = vmatmul.mubr.f32.gmra.mxu0 %v2853
        %v2923 = vpop.f32.mrf.mxu0
        %v2924 = vadd.f32 0.0, %v2923
        %v2925 = vpop.f32.mrf.mxu0
        %2926 = vdwg.mxu0
        %v2927 = vmul.f32 %v2924, 0.35355338
        %v2928 = vadd.f32 %v2927, %v932
        %v2929 = vsel %vm852, %v2928, -inf
        %2930 = vmax.xlane.f32.xlu0 %v2929
        %v2931 = vpop.xlane.xlu0 %2930
        %v2932 = vsub.f32 %v2928, %v2931
        %v2933 = vmul.f32 %v2932, 1.442695
        %v2934 = vpow.pop %v2933
        %v2935 = vsel %vm852, %v2934, 0.0
        %2936 = vadd.xlane.f32.xlu0 %v2935
        %v2937 = vpop.xlane.xlu0 %2936
        %v2938 = vrcp.pop %v2937
        %v2939 = vmul.f32 %v2934, %v2938
        %2940 = vrot.lane.b32.xlu0 %v2124, 40
        %v2941 = vpop.permute.xlu0 %2940
        %v2944 = vsel %vm852, %v2939, 0
        %2946 = vmatprep.subr.mxu0 0.0
        %2947 = vmatpush1.msra.mxu0 0.0
        %2948 = vmatprep.subr.mxu0 0.0
        %2949 = vmatpush1.msra.mxu0 0.0
        %2950 = vmatprep.subr.mxu0 0.0
        %2951 = vmatpush1.msra.mxu0 0.0
        %2952 = vmatprep.subr.mxu0 0.0
        %2953 = vmatpush1.msra.mxu0 0.0
        %2954 = vmatprep.subr.mxu0 0.0
        %2955 = vmatpush1.msra.mxu0 0.0
        %2956 = vmatprep.subr.mxu0 0.0
        %2957 = vmatpush1.msra.mxu0 0.0
        %2958 = vmatprep.subr.mxu0 0.0
        %2959 = vmatpush1.msra.mxu0 0.0
        %2960 = vmatprep.subr.mxu0 0.0
        %2961 = vmatpush1.msra.mxu0 0.0
        %2962 = vmatprep.subr.mxu0 0.0
        %2963 = vmatpush1.msra.mxu0 0.0
        %2964 = vmatprep.subr.mxu0 0.0
        %2965 = vmatpush1.msra.mxu0 0.0
        %2966 = vmatprep.subr.mxu0 0.0
        %2967 = vmatpush1.msra.mxu0 0.0
        %2968 = vmatprep.subr.mxu0 0.0
        %2969 = vmatpush1.msra.mxu0 0.0
        %2970 = vmatprep.subr.mxu0 0.0
        %2971 = vmatpush1.msra.mxu0 0.0
        %2972 = vmatprep.subr.mxu0 0.0
        %2973 = vmatpush1.msra.mxu0 0.0
        %2974 = vmatprep.subr.mxu0 0.0
        %2975 = vmatpush1.msra.mxu0 0.0
        %2976 = vmatprep.subr.mxu0 0.0
        %2977 = vmatpush1.msra.mxu0 %v2941
        %2978 = vmatprep.subr.mxu0 0.0
        %2979 = vmatpush2.msra.mxu0 0.0
        %2980 = vmatprep.subr.mxu0 0.0
        %2981 = vmatpush2.msra.mxu0 0.0
        %2982 = vmatprep.subr.mxu0 0.0
        %2983 = vmatpush2.msra.mxu0 0.0
        %2984 = vmatprep.subr.mxu0 0.0
        %2985 = vmatpush2.msra.mxu0 0.0
        %2986 = vmatprep.subr.mxu0 0.0
        %2987 = vmatpush2.msra.mxu0 0.0
        %2988 = vmatprep.subr.mxu0 0.0
        %2989 = vmatpush2.msra.mxu0 0.0
        %2990 = vmatprep.subr.mxu0 0.0
        %2991 = vmatpush2.msra.mxu0 0.0
        %2992 = vmatprep.subr.mxu0 0.0
        %2993 = vmatpush2.msra.mxu0 0.0
        %2994 = vmatprep.subr.mxu0 0.0
        %2995 = vmatpush2.msra.mxu0 0.0
        %2996 = vmatprep.subr.mxu0 0.0
        %2997 = vmatpush2.msra.mxu0 0.0
        %2998 = vmatprep.subr.mxu0 0.0
        %2999 = vmatpush2.msra.mxu0 0.0
        %3000 = vmatprep.subr.mxu0 0.0
        %3001 = vmatpush2.msra.mxu0 0.0
        %3002 = vmatprep.subr.mxu0 0.0
        %3003 = vmatpush2.msra.mxu0 0.0
        %3004 = vmatprep.subr.mxu0 0.0
        %3005 = vmatpush2.msra.mxu0 0.0
        %3006 = vmatprep.subr.mxu0 0.0
        %3007 = vmatpush2.msra.mxu0 0.0
        %3008 = vmatprep.subr.mxu0 0.0
        %3009 = vmatpush2.msra.mxu0 0.0
        %3010 = vmatprep.mubr.f32.mxu0 0.0
        %3011 = vmatmul.mubr.f32.gmra.mxu0 %v2944
        %v3012 = vpop.f32.mrf.mxu0
        %v3013 = vadd.f32 0.0, %v3012
        %v3014 = vpop.f32.mrf.mxu0
        %3015 = vdwg.mxu0
        %v3017 = vsel %vm852, %v3013, 0
        %3019 = vmatprep.subr.mxu0 0.0
        %3020 = vmatpush1.msra.mxu0 0.0
        %3021 = vmatprep.subr.mxu0 0.0
        %3022 = vmatpush1.msra.mxu0 0.0
        %3023 = vmatprep.subr.mxu0 0.0
        %3024 = vmatpush1.msra.mxu0 0.0
        %3025 = vmatprep.subr.mxu0 0.0
        %3026 = vmatpush1.msra.mxu0 0.0
        %3027 = vmatprep.subr.mxu0 0.0
        %3028 = vmatpush1.msra.mxu0 0.0
        %3029 = vmatprep.subr.mxu0 0.0
        %3030 = vmatpush1.msra.mxu0 0.0
        %3031 = vmatprep.subr.mxu0 0.0
        %3032 = vmatpush1.msra.mxu0 0.0
        %3033 = vmatprep.subr.mxu0 0.0
        %3034 = vmatpush1.msra.mxu0 0.0
        %3035 = vmatprep.subr.mxu0 0.0
        %3036 = vmatpush1.msra.mxu0 0.0
        %3037 = vmatprep.subr.mxu0 0.0
        %3038 = vmatpush1.msra.mxu0 0.0
        %3039 = vmatprep.subr.mxu0 0.0
        %3040 = vmatpush1.msra.mxu0 0.0
        %3041 = vmatprep.subr.mxu0 0.0
        %3042 = vmatpush1.msra.mxu0 0.0
        %3043 = vmatprep.subr.mxu0 0.0
        %3044 = vmatpush1.msra.mxu0 0.0
        %3045 = vmatprep.subr.mxu0 0.0
        %3046 = vmatpush1.msra.mxu0 0.0
        %3047 = vmatprep.subr.mxu0 0.0
        %3048 = vmatpush1.msra.mxu0 0.0
        %3049 = vmatprep.subr.mxu0 0.0
        %3050 = vmatpush1.msra.mxu0 %v1754
        %3051 = vmatprep.subr.mxu0 0.0
        %3052 = vmatpush2.msra.mxu0 0.0
        %3053 = vmatprep.subr.mxu0 0.0
        %3054 = vmatpush2.msra.mxu0 0.0
        %3055 = vmatprep.subr.mxu0 0.0
        %3056 = vmatpush2.msra.mxu0 0.0
        %3057 = vmatprep.subr.mxu0 0.0
        %3058 = vmatpush2.msra.mxu0 0.0
        %3059 = vmatprep.subr.mxu0 0.0
        %3060 = vmatpush2.msra.mxu0 0.0
        %3061 = vmatprep.subr.mxu0 0.0
        %3062 = vmatpush2.msra.mxu0 0.0
        %3063 = vmatprep.subr.mxu0 0.0
        %3064 = vmatpush2.msra.mxu0 0.0
        %3065 = vmatprep.subr.mxu0 0.0
        %3066 = vmatpush2.msra.mxu0 0.0
        %3067 = vmatprep.subr.mxu0 0.0
        %3068 = vmatpush2.msra.mxu0 0.0
        %3069 = vmatprep.subr.mxu0 0.0
        %3070 = vmatpush2.msra.mxu0 0.0
        %3071 = vmatprep.subr.mxu0 0.0
        %3072 = vmatpush2.msra.mxu0 0.0
        %3073 = vmatprep.subr.mxu0 0.0
        %3074 = vmatpush2.msra.mxu0 0.0
        %3075 = vmatprep.subr.mxu0 0.0
        %3076 = vmatpush2.msra.mxu0 0.0
        %3077 = vmatprep.subr.mxu0 0.0
        %3078 = vmatpush2.msra.mxu0 0.0
        %3079 = vmatprep.subr.mxu0 0.0
        %3080 = vmatpush2.msra.mxu0 0.0
        %3081 = vmatprep.subr.mxu0 0.0
        %3082 = vmatpush2.msra.mxu0 0.0
        %3083 = vmatprep.mubr.f32.mxu0 0.0
        %3084 = vmatmul.mubr.f32.gmra.mxu0 %v3017
        %v3085 = vpop.f32.mrf.mxu0
        %v3086 = vadd.f32 0.0, %v3085
        %v3087 = vpop.f32.mrf.mxu0
        %3088 = vdwg.mxu0
        %v3089 = vadd.f32 %v2848, %v3086
        %v3090 = vadd.f32 %v2053, %v3089
        %v3091 = vsel %vm775, %v3090, 0.0
        %3092 = vadd.xlane.f32.xlu0 %v3091
        %v3093 = vpop.xlane.xlu0 %3092
        %v3094 = vmul.f32 %v3093, %v1833
        %v3095 = vsub.f32 %v3090, %v3094
        %v3096 = vmul.f32 %v3095, %v3095
        %v3097 = vsel %vm775, %v3096, 0.0
        %3098 = vadd.xlane.f32.xlu0 %v3097
        %v3099 = vpop.xlane.xlu0 %3098
        %v3100 = vmul.f32 %v3099, %v1833
        %v3101 = vadd.f32 %v3100, 1e-12
        %v3102 = vrsqrt.pop %v3101
        %v3103 = vmul.f32 %v3095, %v3102
        %v3104 = vmul.f32 %v3103, %v1848
        %v3105 = vadd.f32 %v3104, %v1855
        %v3107 = vsel %vm775, %v3105, 0
        %3109 = vmatprep.subr.mxu0 0.0
        %3110 = vmatpush1.msra.mxu0 0.0
        %3111 = vmatprep.subr.mxu0 0.0
        %3112 = vmatpush1.msra.mxu0 0.0
        %3113 = vmatprep.subr.mxu0 0.0
        %3114 = vmatpush1.msra.mxu0 0.0
        %3115 = vmatprep.subr.mxu0 0.0
        %3116 = vmatpush1.msra.mxu0 0.0
        %3117 = vmatprep.subr.mxu0 0.0
        %3118 = vmatpush1.msra.mxu0 0.0
        %3119 = vmatprep.subr.mxu0 0.0
        %3120 = vmatpush1.msra.mxu0 0.0
        %3121 = vmatprep.subr.mxu0 0.0
        %3122 = vmatpush1.msra.mxu0 0.0
        %3123 = vmatprep.subr.mxu0 0.0
        %3124 = vmatpush1.msra.mxu0 0.0
        %3125 = vmatprep.subr.mxu0 0.0
        %3126 = vmatpush1.msra.mxu0 0.0
        %3127 = vmatprep.subr.mxu0 0.0
        %3128 = vmatpush1.msra.mxu0 0.0
        %3129 = vmatprep.subr.mxu0 0.0
        %3130 = vmatpush1.msra.mxu0 0.0
        %3131 = vmatprep.subr.mxu0 0.0
        %3132 = vmatpush1.msra.mxu0 0.0
        %3133 = vmatprep.subr.mxu0 0.0
        %3134 = vmatpush1.msra.mxu0 %v756
        %3135 = vmatprep.subr.mxu0 0.0
        %3136 = vmatpush1.msra.mxu0 %v755
        %3137 = vmatprep.subr.mxu0 0.0
        %3138 = vmatpush1.msra.mxu0 %v754
        %3139 = vmatprep.subr.mxu0 0.0
        %3140 = vmatpush1.msra.mxu0 %v753
        %3141 = vmatprep.subr.mxu0 0.0
        %3142 = vmatpush2.msra.mxu0 0.0
        %3143 = vmatprep.subr.mxu0 0.0
        %3144 = vmatpush2.msra.mxu0 0.0
        %3145 = vmatprep.subr.mxu0 0.0
        %3146 = vmatpush2.msra.mxu0 0.0
        %3147 = vmatprep.subr.mxu0 0.0
        %3148 = vmatpush2.msra.mxu0 0.0
        %3149 = vmatprep.subr.mxu0 0.0
        %3150 = vmatpush2.msra.mxu0 0.0
        %3151 = vmatprep.subr.mxu0 0.0
        %3152 = vmatpush2.msra.mxu0 0.0
        %3153 = vmatprep.subr.mxu0 0.0
        %3154 = vmatpush2.msra.mxu0 0.0
        %3155 = vmatprep.subr.mxu0 0.0
        %3156 = vmatpush2.msra.mxu0 0.0
        %3157 = vmatprep.subr.mxu0 0.0
        %3158 = vmatpush2.msra.mxu0 0.0
        %3159 = vmatprep.subr.mxu0 0.0
        %3160 = vmatpush2.msra.mxu0 0.0
        %3161 = vmatprep.subr.mxu0 0.0
        %3162 = vmatpush2.msra.mxu0 0.0
        %3163 = vmatprep.subr.mxu0 0.0
        %3164 = vmatpush2.msra.mxu0 0.0
        %3165 = vmatprep.subr.mxu0 0.0
        %3166 = vmatpush2.msra.mxu0 0.0
        %3167 = vmatprep.subr.mxu0 0.0
        %3168 = vmatpush2.msra.mxu0 0.0
        %3169 = vmatprep.subr.mxu0 0.0
        %3170 = vmatpush2.msra.mxu0 0.0
        %3171 = vmatprep.subr.mxu0 0.0
        %3172 = vmatpush2.msra.mxu0 0.0
        %3173 = vmatprep.mubr.f32.mxu0 0.0
        %3174 = vmatmul.mubr.f32.gmra.mxu0 %v3107
        %v3175 = vpop.f32.mrf.mxu0
        %v3176 = vadd.f32 %v1862, %v3175
        %v3177 = vpop.f32.mrf.mxu0
        %3178 = vdwg.mxu0
        %v3179 = vmul.f32 %v3176, %v3176
        %v3180 = vmul.f32 %v3176, %v3179
        %v3181 = vmul.f32 %v3180, 0.044715
        %v3182 = vadd.f32 %v3176, %v3181
        %v3183 = vmul.f32 %v3182, 0.7978846
        %v3184 = vtanh.pop %v3183
        %v3185 = vadd.f32 %v3184, 1.0
        %v3186 = vmul.f32 %v3185, 0.5
        %v3187 = vmul.f32 %v3176, %v3186
        %v3189 = vsel %vm1952, %v3187, 0
        %3191 = vmatprep.subr.mxu0 0.0
        %3192 = vmatpush1.msra.mxu0 0.0
        %3193 = vmatprep.subr.mxu0 0.0
        %3194 = vmatpush1.msra.mxu0 0.0
        %3195 = vmatprep.subr.mxu0 0.0
        %3196 = vmatpush1.msra.mxu0 0.0
        %3197 = vmatprep.subr.mxu0 0.0
        %3198 = vmatpush1.msra.mxu0 0.0
        %3199 = vmatprep.subr.mxu0 0.0
        %3200 = vmatpush1.msra.mxu0 0.0
        %3201 = vmatprep.subr.mxu0 0.0
        %3202 = vmatpush1.msra.mxu0 0.0
        %3203 = vmatprep.subr.mxu0 0.0
        %3204 = vmatpush1.msra.mxu0 0.0
        %3205 = vmatprep.subr.mxu0 0.0
        %3206 = vmatpush1.msra.mxu0 0.0
        %3207 = vmatprep.subr.mxu0 0.0
        %3208 = vmatpush1.msra.mxu0 %v765
        %3209 = vmatprep.subr.mxu0 0.0
        %3210 = vmatpush1.msra.mxu0 %v764
        %3211 = vmatprep.subr.mxu0 0.0
        %3212 = vmatpush1.msra.mxu0 %v763
        %3213 = vmatprep.subr.mxu0 0.0
        %3214 = vmatpush1.msra.mxu0 %v762
        %3215 = vmatprep.subr.mxu0 0.0
        %3216 = vmatpush1.msra.mxu0 %v761
        %3217 = vmatprep.subr.mxu0 0.0
        %3218 = vmatpush1.msra.mxu0 %v760
        %3219 = vmatprep.subr.mxu0 0.0
        %3220 = vmatpush1.msra.mxu0 %v759
        %3221 = vmatprep.subr.mxu0 0.0
        %3222 = vmatpush1.msra.mxu0 %v758
        %3223 = vmatprep.subr.mxu0 0.0
        %3224 = vmatpush2.msra.mxu0 0.0
        %3225 = vmatprep.subr.mxu0 0.0
        %3226 = vmatpush2.msra.mxu0 0.0
        %3227 = vmatprep.subr.mxu0 0.0
        %3228 = vmatpush2.msra.mxu0 0.0
        %3229 = vmatprep.subr.mxu0 0.0
        %3230 = vmatpush2.msra.mxu0 0.0
        %3231 = vmatprep.subr.mxu0 0.0
        %3232 = vmatpush2.msra.mxu0 0.0
        %3233 = vmatprep.subr.mxu0 0.0
        %3234 = vmatpush2.msra.mxu0 0.0
        %3235 = vmatprep.subr.mxu0 0.0
        %3236 = vmatpush2.msra.mxu0 0.0
        %3237 = vmatprep.subr.mxu0 0.0
        %3238 = vmatpush2.msra.mxu0 0.0
        %3239 = vmatprep.subr.mxu0 0.0
        %3240 = vmatpush2.msra.mxu0 0.0
        %3241 = vmatprep.subr.mxu0 0.0
        %3242 = vmatpush2.msra.mxu0 0.0
        %3243 = vmatprep.subr.mxu0 0.0
        %3244 = vmatpush2.msra.mxu0 0.0
        %3245 = vmatprep.subr.mxu0 0.0
        %3246 = vmatpush2.msra.mxu0 0.0
        %3247 = vmatprep.subr.mxu0 0.0
        %3248 = vmatpush2.msra.mxu0 0.0
        %3249 = vmatprep.subr.mxu0 0.0
        %3250 = vmatpush2.msra.mxu0 0.0
        %3251 = vmatprep.subr.mxu0 0.0
        %3252 = vmatpush2.msra.mxu0 0.0
        %3253 = vmatprep.subr.mxu0 0.0
        %3254 = vmatpush2.msra.mxu0 0.0
        %3255 = vmatprep.mubr.f32.mxu0 0.0
        %3256 = vmatmul.mubr.f32.gmra.mxu0 %v3189
        %v3257 = vpop.f32.mrf.mxu0
        %v3258 = vadd.f32 %v1950, %v3257
        %v3259 = vpop.f32.mrf.mxu0
        %3260 = vdwg.mxu0
        %v3261 = vadd.f32 %v3105, %v3258
        %v3262 = vsel %vm775, %v3261, 0.0
        %3263 = vadd.xlane.f32.xlu0 %v3262
        %v3264 = vpop.xlane.xlu0 %3263
        %v3265 = vmul.f32 %v3264, %v1833
        %v3266 = vsub.f32 %v3261, %v3265
        %v3267 = vmul.f32 %v3266, %v3266
        %v3268 = vsel %vm775, %v3267, 0.0
        %3269 = vadd.xlane.f32.xlu0 %v3268
        %v3270 = vpop.xlane.xlu0 %3269
        %v3271 = vmul.f32 %v3270, %v1833
        %v3272 = vadd.f32 %v3271, 1e-12
        %v3273 = vrsqrt.pop %v3272
        %v3274 = vmul.f32 %v3266, %v3273
        %v3275 = vmul.f32 %v3274, %v2044
        %v3276 = vadd.f32 %v3275, %v2051
        %v3277 = vld [vmem:[%s627] sm:$0xff]
        %3279 = vset.pattern.permute.xlu0 0
        %3280 = vperm.xlu0 %3279, %v3277
        %v3281 = vpop.permute.xlu0 %3280
        %v3283 = vmul.f32 %v3276, %v3281
        %v3284 = vsel %vm775, %v3283, 0.0
        %v3285 = vrot.slane %v3284, 4
        %v3286 = vadd.f32 %v3284, %v3285
        %v3287 = vrot.slane %v3286, 2
        %v3288 = vadd.f32 %v3286, %v3287
        %v3289 = vrot.slane %v3288, 1
        %v3290 = vadd.f32 %v3288, %v3289
        %vm3291 = vcmask 7168
        %v3292 = vsel %vm3291, %v3277, 0.0
        %v3293 = vrot.slane %v3292, 4
        %v3294 = vadd.f32 %v3292, %v3293
        %v3295 = vrot.slane %v3294, 2
        %v3296 = vadd.f32 %v3294, %v3295
        %v3297 = vrot.slane %v3296, 1
        %v3298 = vadd.f32 %v3296, %v3297
        %v3299 = vmax.f32 %v3298, 1e-09
        %v3300 = vrcp.pop %v3299
        %3302 = vset.pattern.permute.xlu0 0
        %3303 = vperm.xlu0 %3302, %v3300
        %v3304 = vpop.permute.xlu0 %3303
        %v3306 = vmul.f32 %v3290, %v3304
        %vm3307 = vcmask 253952
        %3308 = vst.msk [vmem:[%s616] sm:$0x1] %vm3307, %v3306
        %s3309 = sand.u32 %s455, 1
        %s3310 = scalar_lea.sflag [#allocation3], %s3309
        %s3311 = sand.u32 %s455, 1
        %s3312 = scalar_lea.vmem [#allocation2], %s3311
        // Predicated region
        $region97: #{net_forward.1} parent=95 // pred_check
          %p3313 = pneg %p465
        $region98: #{net_forward.1} parent=95 // pred_check_branch
          %3315 = sbr.rel (%p3313) target = $region100
        $region99: #{net_forward.1} parent=95 // pred_region
          %s3317 = ssub.s32 16, 16
          %3318 = vsyncadd %s3310, %s3317
          %s3319 = smul.addr %s33, 16
          %s3320 = scalar_lea.hbm %s19, %s3319
          %s3322 = sshll.u32 %s3312, 4
          %s3323 = int_to_ptr.vmem [resolvable:$true] %s3322
          %3325 = dma.vmem_to_hbm [thread:$0]  %s3323, 16, %s3320, %s3310
        $region100: #{net_forward.1} parent=95 // pred_fallthru
          _
      $region96: #{net_forward.1} parent=5 // pred_fallthru
        _
      %p3326 = scmp.le.s32.totalorder 2, %s28
      // Predicated region
      $region101: #{net_forward.1} parent=5 // pred_check
        %p3327 = pneg %p3326
      $region102: #{net_forward.1} parent=5 // pred_check_branch
        %3329 = sbr.rel (%p3327) target = $region104
      $region103: #{net_forward.1} parent=5 // pred_region
        %s3330 = ssub.s32 %s28, 2
        // Predicated region
        $region105: #{net_forward.1} parent=103 // pred_check
          %p3331 = pneg %p471
        $region106: #{net_forward.1} parent=103 // pred_check_branch
          %3333 = sbr.rel (%p3331) target = $region108
        $region107: #{net_forward.1} parent=103 // pred_region
          %s3334 = sand.u32 %s456, 1
          %s3335 = scalar_lea.sflag [#allocation3], %s3334
          %s3336 = sand.u32 %s456, 1
          %s3337 = scalar_lea.vmem [#allocation2], %s3336
          %3338 = dma.done %s3335, 16
        $region108: #{net_forward.1} parent=103 // pred_fallthru
          _
      $region104: #{net_forward.1} parent=5 // pred_fallthru
        _
    $region6: #{net_forward.1} parent=1 // loop_footer
      %s32 = sadd.s32 1, %s28
    $region7: #{net_forward.1} parent=1 // loop_footer_branch
      %27 = sbr.rel target = $region3
    $region8: #{net_forward.1} parent=1 // loop_exit
      _
    %3339 = vsyncpa [#allocation3], 1
    %s3340 = scalar_lea.sflag [#allocation3], 1
    %3341 = vsyncpa %s3340, 1

</llo_original>
